<compile_context>
chip_gen: v7x
topology: tpu7x:2x2x1
jax: 0.10.0
libtpu: 0.0.40
codegen_flags: <defaults>
</compile_context>

<pallas_src>
import functools

import jax
import jax.numpy as jnp
from jax.experimental import pallas as pl
from jax.experimental.pallas import tpu as pltpu

_EPS = 1e-5


# ----------------------------------------------------------------------------
# small helpers
# ----------------------------------------------------------------------------
def _round_up(x, m):
    return (x + m - 1) // m * m


@functools.lru_cache(maxsize=1)
def _vmem_limit_bytes():
    """Generation-aware scoped-VMEM limit (v5e/v6e: 128 MiB phys, v7x: 64 MiB)."""
    try:
        cap = int(pltpu.get_tpu_info().vmem_capacity_bytes)
    except Exception:  # conservative fallback if the query is unavailable
        cap = 64 * 1024 * 1024
    return max(32 * 1024 * 1024, min(cap * 3 // 4, 100 * 1024 * 1024))


def _pick_row_tile(m, cap=512):
    """Largest divisor of m that is a multiple of 8 and <= cap."""
    # TODO(synk): on v7x (2 TCs) prefer >=2 row tiles so the parallel grid axis
    #             can be sharded across both TensorCores.
    if m % 8 != 0:
        return m  # TODO(synk): ragged row tiling for M not divisible by 8
    best = 8
    for t in range(8, min(cap, m) + 1, 8):
        if m % t == 0:
            best = t
    return best


def _pick_k_tile(k, n):
    """Keep the whole (K, N) weight resident whenever it fits the VMEM budget."""
    if k <= 512:
        return k
    if 2 * (k * n * 2) <= _vmem_limit_bytes() // 2:  # double-buffered bf16 weight
        return k
    for t in (512, 256, 128):
        if k % t == 0:
            return t
    return k


def _pad2d(mat, rows, cols):
    r, c = mat.shape
    return jnp.pad(mat, ((0, rows - r), (0, cols - c)))


def w1x1_to_mat(w):
    # PyTorch conv weight (Cout, Cin, 1, 1) -> (Cin, Cout)
    return jnp.transpose(w[:, :, 0, 0], (1, 0))


def w3x3_to_taps(w, cin_p, cout_p):
    # (Cout, Cin, 3, 3) -> (9, Cin_p, Cout_p), tap index = kh*3 + kw
    cout, cin = w.shape[0], w.shape[1]
    taps = jnp.transpose(w, (2, 3, 1, 0)).reshape(9, cin, cout)
    return jnp.pad(taps, ((0, 0), (0, cin_p - cin), (0, cout_p - cout)))


def _pad_gb(g, b, c_p):
    g = g.reshape(-1)
    b = b.reshape(-1)
    g = jnp.pad(g, (0, c_p - g.shape[0]), constant_values=1.0)
    b = jnp.pad(b, (0, c_p - b.shape[0]))
    return g.astype(jnp.float32), b.astype(jnp.float32)


def finalize_bn(stats, count, gamma, beta, scale=1.0, eps=_EPS):
    """stats: (tiles, 2, C) partial [sum, sum_sq] -> (2, C) [scale, bias].

    `scale` (the module's activation scale) is folded into the affine transform.
    """
    s = jnp.sum(stats, axis=0)
    mean = s[0] / count
    var = jnp.maximum(s[1] / count - mean * mean, 0.0)  # biased (training) var
    inv = jax.lax.rsqrt(var + eps)
    sc = gamma * inv * scale
    bi = (beta - mean * gamma * inv) * scale
    return jnp.stack([sc, bi], axis=0).astype(jnp.float32)


# ----------------------------------------------------------------------------
# Pallas kernels
# ----------------------------------------------------------------------------
def _mm_stats_kernel(a_ref, b_ref, o_ref, s_ref, acc_ref):
    """Row/K-tiled matmul (bf16 x bf16 -> f32 acc) + per-row-tile [sum, sum_sq].

    Output tile is emitted in bf16; stats come from the f32 accumulator.
    """
    k = pl.program_id(1)

    @pl.when(k == 0)
    def _():
        acc_ref[...] = jnp.zeros_like(acc_ref)

    acc_ref[...] += jnp.dot(a_ref[...], b_ref[...],
                            preferred_element_type=jnp.float32)

    @pl.when(k == pl.num_programs(1) - 1)
    def _():
        acc = acc_ref[...]
        o_ref[...] = acc.astype(o_ref.dtype)
        s_ref[0, 0:1, :] = jnp.sum(acc, axis=0, keepdims=True)
        s_ref[0, 1:2, :] = jnp.sum(acc * acc, axis=0, keepdims=True)


def matmul_stats(a, b):
    """a: (M, K) bf16, b: (K, N) bf16 -> ((M, N) bf16, (gm, 2, N) f32 stats)."""
    m, k = a.shape
    _, n = b.shape
    tm = _pick_row_tile(m)
    gm = m // tm
    tk = _pick_k_tile(k, n)
    gk = k // tk
    return pl.pallas_call(
        _mm_stats_kernel,
        out_shape=(jax.ShapeDtypeStruct((m, n), jnp.bfloat16),
                   jax.ShapeDtypeStruct((gm, 2, n), jnp.float32)),
        grid=(gm, gk),
        in_specs=[pl.BlockSpec((tm, tk), lambda i, j: (i, j)),
                  pl.BlockSpec((tk, n), lambda i, j: (j, 0))],
        out_specs=(pl.BlockSpec((tm, n), lambda i, j: (i, 0)),
                   pl.BlockSpec((1, 2, n), lambda i, j: (i, 0, 0))),
        scratch_shapes=[pltpu.VMEM((tm, n), jnp.float32)],
        compiler_params=pltpu.CompilerParams(
            dimension_semantics=("parallel", "arbitrary"),
            vmem_limit_bytes=_vmem_limit_bytes()),
    )(a, b)


def _conv3x3_kernel(x_ref, w_ref, o_ref, s_ref, acc_ref, *, stride, ho, wo):
    """Implicit-im2col 3x3 conv for one image.

    9 shifted (Ho*Wo, C) x (C, Cout) matmuls accumulated into an f32 VMEM
    scratch (no multi-MB live value -> no spill pattern).  Output is bf16,
    stats come from the f32 accumulator.
    """
    acc_ref[...] = jnp.zeros_like(acc_ref)
    # TODO(synk): replace the misaligned per-tap slices with aligned row slices
    #             + pltpu.roll column shifts, and row-block within the image
    #             for very large H*W (bounds VMEM / feeds v7x's 2nd TC).
    for kh in range(3):
        for kw in range(3):
            p = (kh % stride) * stride + (kw % stride)
            r0 = kh // stride
            c0 = kw // stride
            patch = x_ref[0, p, r0:r0 + ho, c0:c0 + wo, :]       # (ho, wo, Cin)
            patch = patch.reshape(ho * wo, patch.shape[-1])
            acc_ref[...] += jnp.dot(patch, w_ref[kh * 3 + kw],
                                    preferred_element_type=jnp.float32)
    acc = acc_ref[...]
    o_ref[0] = acc.astype(o_ref.dtype)
    s_ref[0, 0:1, :] = jnp.sum(acc, axis=0, keepdims=True)
    s_ref[0, 1:2, :] = jnp.sum(acc * acc, axis=0, keepdims=True)


def conv3x3_stats(planes, w_taps, *, stride, ho, wo):
    """planes: (N, s*s, Hs, Ws, C) bf16 parity planes; w_taps: (9, C, Cout) bf16."""
    n, s2, hs, ws, c = planes.shape
    cout = w_taps.shape[-1]
    kernel = functools.partial(_conv3x3_kernel, stride=stride, ho=ho, wo=wo)
    return pl.pallas_call(
        kernel,
        out_shape=(jax.ShapeDtypeStruct((n, ho * wo, cout), jnp.bfloat16),
                   jax.ShapeDtypeStruct((n, 2, cout), jnp.float32)),
        grid=(n,),
        in_specs=[pl.BlockSpec((1, s2, hs, ws, c), lambda i: (i, 0, 0, 0, 0)),
                  pl.BlockSpec((9, c, cout), lambda i: (0, 0, 0))],
        out_specs=(pl.BlockSpec((1, ho * wo, cout), lambda i: (i, 0, 0)),
                   pl.BlockSpec((1, 2, cout), lambda i: (i, 0, 0))),
        scratch_shapes=[pltpu.VMEM((ho * wo, cout), jnp.float32)],
        compiler_params=pltpu.CompilerParams(
            dimension_semantics=("parallel",),
            vmem_limit_bytes=_vmem_limit_bytes()),
    )(planes, w_taps)


def _bn_act_kernel(y_ref, p_ref, o_ref):
    # fused BN-apply (y*sc + bi, scale already folded into sc/bi) -> ReLU, bf16 out
    out = y_ref[...] * p_ref[0:1, :] + p_ref[1:2, :]
    o_ref[...] = jnp.maximum(out, 0.0).astype(o_ref.dtype)


def bn_act(y, p):
    m, c = y.shape
    tm = _pick_row_tile(m)
    # TODO(synk): fuse the conv2 pad + stride-parity repack into this kernel's
    #             output BlockSpec to save one full HBM pass on the activation.
    return pl.pallas_call(
        _bn_act_kernel,
        out_shape=jax.ShapeDtypeStruct((m, c), jnp.bfloat16),
        grid=(m // tm,),
        in_specs=[pl.BlockSpec((tm, c), lambda i: (i, 0)),
                  pl.BlockSpec((2, c), lambda i: (0, 0))],
        out_specs=pl.BlockSpec((tm, c), lambda i: (i, 0)),
        compiler_params=pltpu.CompilerParams(
            dimension_semantics=("parallel",),
            vmem_limit_bytes=_vmem_limit_bytes()),
    )(y, p)


def _residual_epilogue_kernel(y_ref, r_ref, p3_ref, ps_ref, o_ref):
    # fused BN(conv3) + BN(shortcut) + add + ReLU in a single pass
    y = y_ref[...] * p3_ref[0:1, :] + p3_ref[1:2, :]
    r = r_ref[...] * ps_ref[0:1, :] + ps_ref[1:2, :]
    o_ref[...] = jnp.maximum(y + r, 0.0)


def residual_epilogue(y3, res, p3, ps):
    m, c = y3.shape
    tm = _pick_row_tile(m)
    return pl.pallas_call(
        _residual_epilogue_kernel,
        out_shape=jax.ShapeDtypeStruct((m, c), jnp.float32),
        grid=(m // tm,),
        in_specs=[pl.BlockSpec((tm, c), lambda i: (i, 0)),
                  pl.BlockSpec((tm, c), lambda i: (i, 0)),
                  pl.BlockSpec((2, c), lambda i: (0, 0)),
                  pl.BlockSpec((2, c), lambda i: (0, 0))],
        out_specs=pl.BlockSpec((tm, c), lambda i: (i, 0)),
        compiler_params=pltpu.CompilerParams(
            dimension_semantics=("parallel",),
            vmem_limit_bytes=_vmem_limit_bytes()),
    )(y3, res, p3, ps)


# ----------------------------------------------------------------------------
# weight preparation (done once, outside the per-call path)
# ----------------------------------------------------------------------------
def prepare_params(params, in_channels, out_channels):
    cmid, c4 = out_channels, 4 * out_channels
    cin_p = _round_up(in_channels, 128)
    c_p = _round_up(cmid, 128)
    c4_p = _round_up(c4, 128)
    prep = {
        "w1": _pad2d(w1x1_to_mat(params["w1"]), cin_p, c_p).astype(jnp.bfloat16),
        "w2": w3x3_to_taps(params["w2"], c_p, c_p).astype(jnp.bfloat16),
        "w3": _pad2d(w1x1_to_mat(params["w3"]), c_p, c4_p).astype(jnp.bfloat16),
        "ws": _pad2d(w1x1_to_mat(params["ws"]), cin_p, c4_p).astype(jnp.bfloat16),
    }
    prep["g1"], prep["b1"] = _pad_gb(params["g1"], params["b1"], c_p)
    prep["g2"], prep["b2"] = _pad_gb(params["g2"], params["b2"], c_p)
    prep["g3"], prep["b3"] = _pad_gb(params["g3"], params["b3"], c4_p)
    prep["gs"], prep["bs"] = _pad_gb(params["gs"], params["bs"], c4_p)
    return prep


# ----------------------------------------------------------------------------
# BottleNeck forward (res=True branch of the PyTorch module)
# ----------------------------------------------------------------------------
def bottleneck_forward(x_nchw, prep, *, out_channels, stride, scale=1.0):
    n, cin, h, w = x_nchw.shape
    c4 = 4 * out_channels
    cin_p = prep["w1"].shape[0]
    c_p = prep["w1"].shape[1]
    c4_p = prep["w3"].shape[1]

    ho = (h - 1) // stride + 1
    wo = (w - 1) // stride + 1

    # NCHW -> NHWC, pad channels to a lane-dense multiple of 128 (zeros).
    # TODO(synk): when blocks are chained, keep activations in padded NHWC bf16
    #             and drop the NCHW round-trips / channel slice entirely.
    x = jnp.transpose(x_nchw, (0, 2, 3, 1)).astype(jnp.float32)
    x = jnp.pad(x, ((0, 0), (0, 0), (0, 0), (0, cin_p - cin)))

    m1 = n * h * w
    x1 = x.reshape(m1, cin_p).astype(jnp.bfloat16)

    # conv1: 1x1 matmul (+stats) -> fused BN*scale + ReLU (bf16 out)
    y1_raw, st1 = matmul_stats(x1, prep["w1"])
    p1 = finalize_bn(st1, m1, prep["g1"], prep["b1"], scale)
    y1a = bn_act(y1_raw, p1)

    # conv2: 3x3 stride, pad=1 via implicit im2col over stride-parity planes
    s = stride
    hp = _round_up(h + 2, s)
    wp = _round_up(w + 2, s)
    y1p = jnp.pad(y1a.reshape(n, h, w, c_p),
                  ((0, 0), (1, hp - h - 1), (1, wp - w - 1), (0, 0)))
    planes = (y1p.reshape(n, hp // s, s, wp // s, s, c_p)
                 .transpose(0, 2, 4, 1, 3, 5)
                 .reshape(n, s * s, hp // s, wp // s, c_p))
    y2_raw, st2 = conv3x3_stats(planes, prep["w2"], stride=s, ho=ho, wo=wo)
    m2 = n * ho * wo
    y2_raw = y2_raw.reshape(m2, c_p)
    p2 = finalize_bn(st2, m2, prep["g2"], prep["b2"], scale)
    y2a = bn_act(y2_raw, p2)

    # conv3: 1x1 -> 4*Cmid (raw + stats, BN applied in the fused epilogue)
    y3_raw, st3 = matmul_stats(y2a, prep["w3"])
    p3 = finalize_bn(st3, m2, prep["g3"], prep["b3"])

    # shortcut
    if stride != 1 or cin != c4:
        # TODO(synk): fold the strided subsample into the matmul's A BlockSpec.
        xs = x[:, ::stride, ::stride, :].reshape(m2, cin_p).astype(jnp.bfloat16)
        r_raw, sts = matmul_stats(xs, prep["ws"])
        pr = finalize_bn(sts, m2, prep["gs"], prep["bs"])
    else:
        r_raw = x.reshape(m2, cin_p)  # identity shortcut (cin_p == c4_p here)
        pr = jnp.stack([jnp.ones((c4_p,), jnp.float32),
                        jnp.zeros((c4_p,), jnp.float32)], axis=0)

    # fused BN(conv3) + BN(shortcut) + add + ReLU (single HBM pass)
    out = residual_epilogue(y3_raw, r_raw, p3, pr)
    out = out.reshape(n, ho, wo, c4_p)[..., :c4]
    return jnp.transpose(out, (0, 3, 1, 2))


# ----------------------------------------------------------------------------
# Pure-JAX reference (mirrors the kernels' bf16-input / f32-accumulate math,
# including the bf16 rounding of raw conv outputs before BN application)
# ----------------------------------------------------------------------------
def _ref_bn(y_raw, g, b, eps=_EPS):
    mean = jnp.mean(y_raw, axis=0, keepdims=True)
    var = jnp.maximum(jnp.mean(y_raw * y_raw, axis=0, keepdims=True) - mean * mean, 0.0)
    inv = jax.lax.rsqrt(var + eps)
    yq = y_raw.astype(jnp.bfloat16).astype(jnp.float32)   # kernel stores raw in bf16
    return (yq - mean) * inv * g.reshape(1, -1) + b.reshape(1, -1)


def _ref_im2col(x_nhwc, stride):
    n, h, w, c = x_nhwc.shape
    xp = jnp.pad(x_nhwc, ((0, 0), (1, 1), (1, 1), (0, 0)))
    ho = (h - 1) // stride + 1
    wo = (w - 1) // stride + 1
    cols = []
    for kh in range(3):
        for kw in range(3):
            cols.append(xp[:, kh:kh + ho * stride:stride,
                           kw:kw + wo * stride:stride, :])
    cols = jnp.concatenate(cols, axis=-1)
    return cols.reshape(n * ho * wo, 9 * c), ho, wo


def _ref_w3x3(w):
    return jnp.transpose(w, (2, 3, 1, 0)).reshape(-1, w.shape[0])


def bottleneck_reference(x_nchw, params, *, stride, scale=1.0):
    n, cin, h, w = x_nchw.shape
    x = jnp.transpose(x_nchw, (0, 2, 3, 1)).astype(jnp.float32)

    def mm(a, b):
        return jnp.dot(a.astype(jnp.bfloat16), b.astype(jnp.bfloat16),
                       preferred_element_type=jnp.float32)

    y1 = mm(x.reshape(n * h * w, cin), w1x1_to_mat(params["w1"]))
    y1 = jnp.maximum(_ref_bn(y1, params["g1"], params["b1"]) * scale, 0.0)
    y1 = y1.astype(jnp.bfloat16).astype(jnp.float32)
    cmid = y1.shape[1]
    cols, ho, wo = _ref_im2col(y1.reshape(n, h, w, cmid), stride)
    y2 = mm(cols, _ref_w3x3(params["w2"]))
    y2 = jnp.maximum(_ref_bn(y2, params["g2"], params["b2"]) * scale, 0.0)
    y2 = y2.astype(jnp.bfloat16).astype(jnp.float32)
    y3 = _ref_bn(mm(y2, w1x1_to_mat(params["w3"])), params["g3"], params["b3"])
    c4 = y3.shape[1]
    if stride != 1 or cin != c4:
        xs = x[:, ::stride, ::stride, :].reshape(n * ho * wo, cin)
        res = _ref_bn(mm(xs, w1x1_to_mat(params["ws"])),
                      params["gs"], params["bs"])
    else:
        res = x.reshape(n * h * w, cin)
    out = jnp.maximum(y3 + res, 0.0).reshape(n, ho, wo, c4)
    return jnp.transpose(out, (0, 3, 1, 2))


# ----------------------------------------------------------------------------
# deterministic parameters + demo
# ----------------------------------------------------------------------------
def make_params(key, in_channels, out_channels):
    exp = 4
    ks = jax.random.split(key, 9)

    def conv_w(k, cout, cin, kh, kw):
        fan_in = cin * kh * kw
        return jax.random.normal(k, (cout, cin, kh, kw), jnp.float32) / jnp.sqrt(fan_in)

    def bn_gb(kg, kb, c):
        g = 1.0 + 0.1 * jax.random.normal(kg, (1, c), jnp.float32)
        b = 0.1 * jax.random.normal(kb, (1, c), jnp.float32)
        return g, b

    p = {}
    p["w1"] = conv_w(ks[0], out_channels, in_channels, 1, 1)
    p["w2"] = conv_w(ks[1], out_channels, out_channels, 3, 3)
    p["w3"] = conv_w(ks[2], out_channels * exp, out_channels, 1, 1)
    p["ws"] = conv_w(ks[3], out_channels * exp, in_channels, 1, 1)
    p["g1"], p["b1"] = bn_gb(ks[4], ks[5], out_channels)
    p["g2"], p["b2"] = bn_gb(ks[6], ks[7], out_channels)
    k8a, k8b, k8c, k8d = jax.random.split(ks[8], 4)
    p["g3"], p["b3"] = bn_gb(k8a, k8b, out_channels * exp)
    p["gs"], p["bs"] = bn_gb(k8c, k8d, out_channels * exp)
    return p


if __name__ == "__main__":
    key = jax.random.PRNGKey(0)
    kx, kp = jax.random.split(key)

    # batch=2, in_channels=16, spatial=16x16, out_channels=8 (-> 32 out), stride=2
    N, Cin, H, W = 2, 16, 16, 16
    out_channels, stride, scale = 8, 2, 0.5

    x = jax.random.normal(kx, (N, Cin, H, W), jnp.float32)
    params = make_params(kp, Cin, out_channels)
    prep = prepare_params(params, Cin, out_channels)

    fwd = jax.jit(functools.partial(bottleneck_forward,
                                    out_channels=out_channels,
                                    stride=stride, scale=scale))
    out = jax.block_until_ready(fwd(x, prep))

    ref = bottleneck_reference(x, params, stride=stride, scale=scale)
    assert out.shape == (N, out_channels * 4, H // stride, W // stride), out.shape
    max_err = float(jnp.max(jnp.abs(out - ref)))
    assert jnp.allclose(out, ref, atol=1e-2, rtol=1e-2), max_err

    print("KERNEL_OK")
</pallas_src>

<mosaic_0001>
module attributes {stable_mosaic.version = 11 : i64} {
  func.func @_mm_stats_kernel(%arg0: i32, %arg1: i32, %arg2: memref<512x128xbf16, #tpu.memory_space<vmem>>, %arg3: memref<128x128xbf16, #tpu.memory_space<vmem>>, %arg4: memref<512x128xbf16, #tpu.memory_space<vmem>>, %arg5: memref<1x2x128xf32, #tpu.memory_space<vmem>>, %arg6: memref<512x128xf32, #tpu.memory_space<vmem>>) attributes {dimension_semantics = [#tpu.dimension_semantics<parallel>, #tpu.dimension_semantics<arbitrary>], iteration_bounds = array<i64: 1, 1>, scalar_prefetch = 0 : i64, scratch_operands = 1 : i64, tpu.core_type = #tpu.core_type<tc>, window_params = [{transform_indices = @transform_0, window_bounds = array<i64: 512, 128>}, {transform_indices = @transform_1, window_bounds = array<i64: 128, 128>}, {transform_indices = @transform_2, window_bounds = array<i64: 512, 128>}, {transform_indices = @transform_3, window_bounds = array<i64: 1, 2, 128>}]} {
    %c0_i32 = arith.constant 0 : i32
    %0 = arith.cmpi eq, %arg1, %c0_i32 : i32
    %1 = arith.extui %0 : i1 to i32
    %c0_i32_0 = arith.constant 0 : i32
    %2 = arith.cmpi ne, %1, %c0_i32_0 : i32
    scf.if %2 {
      %cst_10 = arith.constant 0.000000e+00 : f32
      %12 = vector.broadcast %cst_10 : f32 to vector<512x128xf32>
      %c0_11 = arith.constant 0 : index
      %c0_12 = arith.constant 0 : index
      %13 = vector.load %arg6[%c0_11, %c0_12] : memref<512x128xf32, #tpu.memory_space<vmem>>, vector<512x128xf32>
      tpu.vector_store %arg6[%c0_11, %c0_12], %12 {strides = array<i32>} : memref<512x128xf32, #tpu.memory_space<vmem>>, vector<512x128xf32>,
    } else {
    }
    %c0 = arith.constant 0 : index
    %c0_1 = arith.constant 0 : index
    %3 = vector.load %arg6[%c0, %c0_1] : memref<512x128xf32, #tpu.memory_space<vmem>>, vector<512x128xf32>
    %c0_2 = arith.constant 0 : index
    %c0_3 = arith.constant 0 : index
    %4 = vector.load %arg2[%c0_2, %c0_3] : memref<512x128xbf16, #tpu.memory_space<vmem>>, vector<512x128xbf16>
    %c0_4 = arith.constant 0 : index
    %c0_5 = arith.constant 0 : index
    %5 = vector.load %arg3[%c0_4, %c0_5] : memref<128x128xbf16, #tpu.memory_space<vmem>>, vector<128x128xbf16>
    %cst = arith.constant dense<0.000000e+00> : vector<512x128xf32>
    %6 = tpu.matmul %4, %5, %cst {dimension_numbers = #tpu.dot_dimension_numbers<[1], [0], [0], [1], [0, 0, 1, 1], [], []>} : vector<512x128xbf16>, vector<128x128xbf16>, vector<512x128xf32> -> vector<512x128xf32>
    %7 = arith.addf %3, %6 : vector<512x128xf32>
    %c0_6 = arith.constant 0 : index
    %c0_7 = arith.constant 0 : index
    %8 = vector.load %arg6[%c0_6, %c0_7] : memref<512x128xf32, #tpu.memory_space<vmem>>, vector<512x128xf32>
    tpu.vector_store %arg6[%c0_6, %c0_7], %7 {strides = array<i32>} : memref<512x128xf32, #tpu.memory_space<vmem>>, vector<512x128xf32>,
    %c0_i32_8 = arith.constant 0 : i32
    %9 = arith.cmpi eq, %arg1, %c0_i32_8 : i32
    %10 = arith.extui %9 : i1 to i32
    %c0_i32_9 = arith.constant 0 : i32
    %11 = arith.cmpi ne, %10, %c0_i32_9 : i32
    scf.if %11 {
      %c0_10 = arith.constant 0 : index
      %c0_11 = arith.constant 0 : index
      %12 = vector.load %arg6[%c0_10, %c0_11] : memref<512x128xf32, #tpu.memory_space<vmem>>, vector<512x128xf32>
      %13 = arith.truncf %12 : vector<512x128xf32> to vector<512x128xbf16>
      %c0_12 = arith.constant 0 : index
      %c0_13 = arith.constant 0 : index
      %14 = vector.load %arg4[%c0_12, %c0_13] : memref<512x128xbf16, #tpu.memory_space<vmem>>, vector<512x128xbf16>
      tpu.vector_store %arg4[%c0_12, %c0_13], %13 {strides = array<i32>} : memref<512x128xbf16, #tpu.memory_space<vmem>>, vector<512x128xbf16>,
      %cst_14 = arith.constant dense<0.000000e+00> : vector<128xf32>
      %15 = vector.multi_reduction <add>, %12, %cst_14 [0] : vector<512x128xf32> to vector<128xf32>
      %16 = vector.shape_cast %15 : vector<128xf32> to vector<1x128xf32>
      %c0_15 = arith.constant 0 : index
      %c0_16 = arith.constant 0 : index
      %c0_17 = arith.constant 0 : index
      %17 = vector.load %arg5[%c0_15, %c0_16, %c0_17] : memref<1x2x128xf32, #tpu.memory_space<vmem>>, vector<1x1x128xf32>
      %18 = vector.shape_cast %17 : vector<1x1x128xf32> to vector<1x128xf32>
      %19 = vector.shape_cast %16 : vector<1x128xf32> to vector<1x1x128xf32>
      tpu.vector_store %arg5[%c0_15, %c0_16, %c0_17], %19 {strides = array<i32>} : memref<1x2x128xf32, #tpu.memory_space<vmem>>, vector<1x1x128xf32>,
      %20 = arith.mulf %12, %12 : vector<512x128xf32>
      %cst_18 = arith.constant dense<0.000000e+00> : vector<128xf32>
      %21 = vector.multi_reduction <add>, %20, %cst_18 [0] : vector<512x128xf32> to vector<128xf32>
      %22 = vector.shape_cast %21 : vector<128xf32> to vector<1x128xf32>
      %c0_19 = arith.constant 0 : index
      %c1 = arith.constant 1 : index
      %c0_20 = arith.constant 0 : index
      %23 = vector.load %arg5[%c0_19, %c1, %c0_20] : memref<1x2x128xf32, #tpu.memory_space<vmem>>, vector<1x1x128xf32>
      %24 = vector.shape_cast %23 : vector<1x1x128xf32> to vector<1x128xf32>
      %25 = vector.shape_cast %22 : vector<1x128xf32> to vector<1x1x128xf32>
      tpu.vector_store %arg5[%c0_19, %c1, %c0_20], %25 {strides = array<i32>} : memref<1x2x128xf32, #tpu.memory_space<vmem>>, vector<1x1x128xf32>,
    } else {
    }
    return
  }
  func.func @transform_0(%arg0: i32, %arg1: i32) -> (i32, i32) {
    %c0_i32 = arith.constant 0 : i32
    return %arg0, %arg1 : i32, i32
  }
  func.func @transform_1(%arg0: i32, %arg1: i32) -> (i32, i32) {
    %c0_i32 = arith.constant 0 : i32
    %c0_i32_0 = arith.constant 0 : i32
    return %arg1, %c0_i32 : i32, i32
  }
  func.func @transform_2(%arg0: i32, %arg1: i32) -> (i32, i32) {
    %c0_i32 = arith.constant 0 : i32
    %c0_i32_0 = arith.constant 0 : i32
    return %arg0, %c0_i32 : i32, i32
  }
  func.func @transform_3(%arg0: i32, %arg1: i32) -> (i32, i32, i32) {
    %c0_i32 = arith.constant 0 : i32
    %c0_i32_0 = arith.constant 0 : i32
    %c0_i32_1 = arith.constant 0 : i32
    return %arg0, %c0_i32, %c0_i32_0 : i32, i32, i32
  }
}

module attributes {stable_mosaic.version = 11 : i64} {
  func.func @_bn_act_kernel(%arg0: i32, %arg1: memref<512x128xbf16, #tpu.memory_space<vmem>>, %arg2: memref<2x128xf32, #tpu.memory_space<vmem>>, %arg3: memref<512x128xbf16, #tpu.memory_space<vmem>>) attributes {dimension_semantics = [#tpu.dimension_semantics<parallel>], iteration_bounds = array<i64: 1>, scalar_prefetch = 0 : i64, scratch_operands = 0 : i64, tpu.core_type = #tpu.core_type<tc>, window_params = [{transform_indices = @transform_0, window_bounds = array<i64: 512, 128>}, {pipeline_mode = #tpu.pipeline_mode<synchronous>, transform_indices = @transform_1, window_bounds = array<i64: 2, 128>}, {transform_indices = @transform_2, window_bounds = array<i64: 512, 128>}]} {
    %c0 = arith.constant 0 : index
    %c0_0 = arith.constant 0 : index
    %0 = vector.load %arg1[%c0, %c0_0] : memref<512x128xbf16, #tpu.memory_space<vmem>>, vector<512x128xbf16>
    %c0_1 = arith.constant 0 : index
    %c0_2 = arith.constant 0 : index
    %1 = vector.load %arg2[%c0_1, %c0_2] : memref<2x128xf32, #tpu.memory_space<vmem>>, vector<1x128xf32>
    %2 = arith.extf %0 : vector<512x128xbf16> to vector<512x128xf32>
    %3 = vector.broadcast %1 : vector<1x128xf32> to vector<512x128xf32>
    %4 = arith.mulf %2, %3 : vector<512x128xf32>
    %c1 = arith.constant 1 : index
    %c0_3 = arith.constant 0 : index
    %5 = vector.load %arg2[%c1, %c0_3] : memref<2x128xf32, #tpu.memory_space<vmem>>, vector<1x128xf32>
    %6 = vector.broadcast %5 : vector<1x128xf32> to vector<512x128xf32>
    %7 = arith.addf %4, %6 : vector<512x128xf32>
    %cst = arith.constant 0.000000e+00 : f32
    %8 = vector.broadcast %cst : f32 to vector<512x128xf32>
    %9 = arith.maximumf %7, %8 : vector<512x128xf32>
    %10 = arith.truncf %9 : vector<512x128xf32> to vector<512x128xbf16>
    %c0_4 = arith.constant 0 : index
    %c0_5 = arith.constant 0 : index
    %11 = vector.load %arg3[%c0_4, %c0_5] : memref<512x128xbf16, #tpu.memory_space<vmem>>, vector<512x128xbf16>
    tpu.vector_store %arg3[%c0_4, %c0_5], %10 {strides = array<i32>} : memref<512x128xbf16, #tpu.memory_space<vmem>>, vector<512x128xbf16>,
    return
  }
  func.func @transform_0(%arg0: i32) -> (i32, i32) {
    %c0_i32 = arith.constant 0 : i32
    %c0_i32_0 = arith.constant 0 : i32
    return %arg0, %c0_i32 : i32, i32
  }
  func.func @transform_1(%arg0: i32) -> (i32, i32) {
    %c0_i32 = arith.constant 0 : i32
    %c0_i32_0 = arith.constant 0 : i32
    %c0_i32_1 = arith.constant 0 : i32
    return %c0_i32, %c0_i32_0 : i32, i32
  }
  func.func @transform_2(%arg0: i32) -> (i32, i32) {
    %c0_i32 = arith.constant 0 : i32
    %c0_i32_0 = arith.constant 0 : i32
    return %arg0, %c0_i32 : i32, i32
  }
}

module attributes {stable_mosaic.version = 11 : i64} {
  func.func @_conv3x3_kernel(%arg0: i32, %arg1: memref<1x4x9x9x128xbf16, #tpu.memory_space<vmem>>, %arg2: memref<9x128x128xbf16, #tpu.memory_space<vmem>>, %arg3: memref<1x64x128xbf16, #tpu.memory_space<vmem>>, %arg4: memref<1x2x128xf32, #tpu.memory_space<vmem>>, %arg5: memref<64x128xf32, #tpu.memory_space<vmem>>) attributes {dimension_semantics = [#tpu.dimension_semantics<parallel>], iteration_bounds = array<i64: 2>, scalar_prefetch = 0 : i64, scratch_operands = 1 : i64, tpu.core_type = #tpu.core_type<tc>, window_params = [{transform_indices = @transform_0, window_bounds = array<i64: 1, 4, 9, 9, 128>}, {pipeline_mode = #tpu.pipeline_mode<synchronous>, transform_indices = @transform_1, window_bounds = array<i64: 9, 128, 128>}, {transform_indices = @transform_2, window_bounds = array<i64: 1, 64, 128>}, {transform_indices = @transform_3, window_bounds = array<i64: 1, 2, 128>}]} {
    %cst = arith.constant 0.000000e+00 : f32
    %0 = vector.broadcast %cst : f32 to vector<64x128xf32>
    %c0 = arith.constant 0 : index
    %c0_0 = arith.constant 0 : index
    %1 = vector.load %arg5[%c0, %c0_0] : memref<64x128xf32, #tpu.memory_space<vmem>>, vector<64x128xf32>
    tpu.vector_store %arg5[%c0, %c0_0], %0 {strides = array<i32>} : memref<64x128xf32, #tpu.memory_space<vmem>>, vector<64x128xf32>,
    %c0_1 = arith.constant 0 : index
    %c0_2 = arith.constant 0 : index
    %c0_3 = arith.constant 0 : index
    %c0_4 = arith.constant 0 : index
    %c0_5 = arith.constant 0 : index
    %2 = vector.load %arg1[%c0_1, %c0_2, %c0_3, %c0_4, %c0_5] : memref<1x4x9x9x128xbf16, #tpu.memory_space<vmem>>, vector<1x1x8x8x128xbf16>
    %3 = vector.shape_cast %2 : vector<1x1x8x8x128xbf16> to vector<8x8x128xbf16>
    %4 = vector.shape_cast %3 : vector<8x8x128xbf16> to vector<64x128xbf16>
    %c0_6 = arith.constant 0 : index
    %c0_7 = arith.constant 0 : index
    %5 = vector.load %arg5[%c0_6, %c0_7] : memref<64x128xf32, #tpu.memory_space<vmem>>, vector<64x128xf32>
    %c0_8 = arith.constant 0 : index
    %c0_9 = arith.constant 0 : index
    %c0_10 = arith.constant 0 : index
    %6 = vector.load %arg2[%c0_8, %c0_9, %c0_10] : memref<9x128x128xbf16, #tpu.memory_space<vmem>>, vector<1x128x128xbf16>
    %7 = vector.shape_cast %6 : vector<1x128x128xbf16> to vector<128x128xbf16>
    %cst_11 = arith.constant dense<0.000000e+00> : vector<64x128xf32>
    %8 = tpu.matmul %4, %7, %cst_11 {dimension_numbers = #tpu.dot_dimension_numbers<[1], [0], [0], [1], [0, 0, 1, 1], [], []>} : vector<64x128xbf16>, vector<128x128xbf16>, vector<64x128xf32> -> vector<64x128xf32>
    %9 = arith.addf %5, %8 : vector<64x128xf32>
    %c0_12 = arith.constant 0 : index
    %c0_13 = arith.constant 0 : index
    %10 = vector.load %arg5[%c0_12, %c0_13] : memref<64x128xf32, #tpu.memory_space<vmem>>, vector<64x128xf32>
    tpu.vector_store %arg5[%c0_12, %c0_13], %9 {strides = array<i32>} : memref<64x128xf32, #tpu.memory_space<vmem>>, vector<64x128xf32>,
    %c0_14 = arith.constant 0 : index
    %c1 = arith.constant 1 : index
    %c0_15 = arith.constant 0 : index
    %c0_16 = arith.constant 0 : index
    %c0_17 = arith.constant 0 : index
    %11 = vector.load %arg1[%c0_14, %c1, %c0_15, %c0_16, %c0_17] : memref<1x4x9x9x128xbf16, #tpu.memory_space<vmem>>, vector<1x1x8x8x128xbf16>
    %12 = vector.shape_cast %11 : vector<1x1x8x8x128xbf16> to vector<8x8x128xbf16>
    %13 = vector.shape_cast %12 : vector<8x8x128xbf16> to vector<64x128xbf16>
    %c0_18 = arith.constant 0 : index
    %c0_19 = arith.constant 0 : index
    %14 = vector.load %arg5[%c0_18, %c0_19] : memref<64x128xf32, #tpu.memory_space<vmem>>, vector<64x128xf32>
    %c1_20 = arith.constant 1 : index
    %c0_21 = arith.constant 0 : index
    %c0_22 = arith.constant 0 : index
    %15 = vector.load %arg2[%c1_20, %c0_21, %c0_22] : memref<9x128x128xbf16, #tpu.memory_space<vmem>>, vector<1x128x128xbf16>
    %16 = vector.shape_cast %15 : vector<1x128x128xbf16> to vector<128x128xbf16>
    %cst_23 = arith.constant dense<0.000000e+00> : vector<64x128xf32>
    %17 = tpu.matmul %13, %16, %cst_23 {dimension_numbers = #tpu.dot_dimension_numbers<[1], [0], [0], [1], [0, 0, 1, 1], [], []>} : vector<64x128xbf16>, vector<128x128xbf16>, vector<64x128xf32> -> vector<64x128xf32>
    %18 = arith.addf %14, %17 : vector<64x128xf32>
    %c0_24 = arith.constant 0 : index
    %c0_25 = arith.constant 0 : index
    %19 = vector.load %arg5[%c0_24, %c0_25] : memref<64x128xf32, #tpu.memory_space<vmem>>, vector<64x128xf32>
    tpu.vector_store %arg5[%c0_24, %c0_25], %18 {strides = array<i32>} : memref<64x128xf32, #tpu.memory_space<vmem>>, vector<64x128xf32>,
    %c0_26 = arith.constant 0 : index
    %c0_27 = arith.constant 0 : index
    %c0_28 = arith.constant 0 : index
    %c1_29 = arith.constant 1 : index
    %c0_30 = arith.constant 0 : index
    %20 = vector.load %arg1[%c0_26, %c0_27, %c0_28, %c1_29, %c0_30] : memref<1x4x9x9x128xbf16, #tpu.memory_space<vmem>>, vector<1x1x8x8x128xbf16>
    %21 = vector.shape_cast %20 : vector<1x1x8x8x128xbf16> to vector<8x8x128xbf16>
    %22 = vector.shape_cast %21 : vector<8x8x128xbf16> to vector<64x128xbf16>
    %c0_31 = arith.constant 0 : index
    %c0_32 = arith.constant 0 : index
    %23 = vector.load %arg5[%c0_31, %c0_32] : memref<64x128xf32, #tpu.memory_space<vmem>>, vector<64x128xf32>
    %c2 = arith.constant 2 : index
    %c0_33 = arith.constant 0 : index
    %c0_34 = arith.constant 0 : index
    %24 = vector.load %arg2[%c2, %c0_33, %c0_34] : memref<9x128x128xbf16, #tpu.memory_space<vmem>>, vector<1x128x128xbf16>
    %25 = vector.shape_cast %24 : vector<1x128x128xbf16> to vector<128x128xbf16>
    %cst_35 = arith.constant dense<0.000000e+00> : vector<64x128xf32>
    %26 = tpu.matmul %22, %25, %cst_35 {dimension_numbers = #tpu.dot_dimension_numbers<[1], [0], [0], [1], [0, 0, 1, 1], [], []>} : vector<64x128xbf16>, vector<128x128xbf16>, vector<64x128xf32> -> vector<64x128xf32>
    %27 = arith.addf %23, %26 : vector<64x128xf32>
    %c0_36 = arith.constant 0 : index
    %c0_37 = arith.constant 0 : index
    %28 = vector.load %arg5[%c0_36, %c0_37] : memref<64x128xf32, #tpu.memory_space<vmem>>, vector<64x128xf32>
    tpu.vector_store %arg5[%c0_36, %c0_37], %27 {strides = array<i32>} : memref<64x128xf32, #tpu.memory_space<vmem>>, vector<64x128xf32>,
    %c0_38 = arith.constant 0 : index
    %c2_39 = arith.constant 2 : index
    %c0_40 = arith.constant 0 : index
    %c0_41 = arith.constant 0 : index
    %c0_42 = arith.constant 0 : index
    %29 = vector.load %arg1[%c0_38, %c2_39, %c0_40, %c0_41, %c0_42] : memref<1x4x9x9x128xbf16, #tpu.memory_space<vmem>>, vector<1x1x8x8x128xbf16>
    %30 = vector.shape_cast %29 : vector<1x1x8x8x128xbf16> to vector<8x8x128xbf16>
    %31 = vector.shape_cast %30 : vector<8x8x128xbf16> to vector<64x128xbf16>
    %c0_43 = arith.constant 0 : index
    %c0_44 = arith.constant 0 : index
    %32 = vector.load %arg5[%c0_43, %c0_44] : memref<64x128xf32, #tpu.memory_space<vmem>>, vector<64x128xf32>
    %c3 = arith.constant 3 : index
    %c0_45 = arith.constant 0 : index
    %c0_46 = arith.constant 0 : index
    %33 = vector.load %arg2[%c3, %c0_45, %c0_46] : memref<9x128x128xbf16, #tpu.memory_space<vmem>>, vector<1x128x128xbf16>
    %34 = vector.shape_cast %33 : vector<1x128x128xbf16> to vector<128x128xbf16>
    %cst_47 = arith.constant dense<0.000000e+00> : vector<64x128xf32>
    %35 = tpu.matmul %31, %34, %cst_47 {dimension_numbers = #tpu.dot_dimension_numbers<[1], [0], [0], [1], [0, 0, 1, 1], [], []>} : vector<64x128xbf16>, vector<128x128xbf16>, vector<64x128xf32> -> vector<64x128xf32>
    %36 = arith.addf %32, %35 : vector<64x128xf32>
    %c0_48 = arith.constant 0 : index
    %c0_49 = arith.constant 0 : index
    %37 = vector.load %arg5[%c0_48, %c0_49] : memref<64x128xf32, #tpu.memory_space<vmem>>, vector<64x128xf32>
    tpu.vector_store %arg5[%c0_48, %c0_49], %36 {strides = array<i32>} : memref<64x128xf32, #tpu.memory_space<vmem>>, vector<64x128xf32>,
    %c0_50 = arith.constant 0 : index
    %c3_51 = arith.constant 3 : index
    %c0_52 = arith.constant 0 : index
    %c0_53 = arith.constant 0 : index
    %c0_54 = arith.constant 0 : index
    %38 = vector.load %arg1[%c0_50, %c3_51, %c0_52, %c0_53, %c0_54] : memref<1x4x9x9x128xbf16, #tpu.memory_space<vmem>>, vector<1x1x8x8x128xbf16>
    %39 = vector.shape_cast %38 : vector<1x1x8x8x128xbf16> to vector<8x8x128xbf16>
    %40 = vector.shape_cast %39 : vector<8x8x128xbf16> to vector<64x128xbf16>
    %c0_55 = arith.constant 0 : index
    %c0_56 = arith.constant 0 : index
    %41 = vector.load %arg5[%c0_55, %c0_56] : memref<64x128xf32, #tpu.memory_space<vmem>>, vector<64x128xf32>
    %c4 = arith.constant 4 : index
    %c0_57 = arith.constant 0 : index
    %c0_58 = arith.constant 0 : index
    %42 = vector.load %arg2[%c4, %c0_57, %c0_58] : memref<9x128x128xbf16, #tpu.memory_space<vmem>>, vector<1x128x128xbf16>
    %43 = vector.shape_cast %42 : vector<1x128x128xbf16> to vector<128x128xbf16>
    %cst_59 = arith.constant dense<0.000000e+00> : vector<64x128xf32>
    %44 = tpu.matmul %40, %43, %cst_59 {dimension_numbers = #tpu.dot_dimension_numbers<[1], [0], [0], [1], [0, 0, 1, 1], [], []>} : vector<64x128xbf16>, vector<128x128xbf16>, vector<64x128xf32> -> vector<64x128xf32>
    %45 = arith.addf %41, %44 : vector<64x128xf32>
    %c0_60 = arith.constant 0 : index
    %c0_61 = arith.constant 0 : index
    %46 = vector.load %arg5[%c0_60, %c0_61] : memref<64x128xf32, #tpu.memory_space<vmem>>, vector<64x128xf32>
    tpu.vector_store %arg5[%c0_60, %c0_61], %45 {strides = array<i32>} : memref<64x128xf32, #tpu.memory_space<vmem>>, vector<64x128xf32>,
    %c0_62 = arith.constant 0 : index
    %c2_63 = arith.constant 2 : index
    %c0_64 = arith.constant 0 : index
    %c1_65 = arith.constant 1 : index
    %c0_66 = arith.constant 0 : index
    %47 = vector.load %arg1[%c0_62, %c2_63, %c0_64, %c1_65, %c0_66] : memref<1x4x9x9x128xbf16, #tpu.memory_space<vmem>>, vector<1x1x8x8x128xbf16>
    %48 = vector.shape_cast %47 : vector<1x1x8x8x128xbf16> to vector<8x8x128xbf16>
    %49 = vector.shape_cast %48 : vector<8x8x128xbf16> to vector<64x128xbf16>
    %c0_67 = arith.constant 0 : index
    %c0_68 = arith.constant 0 : index
    %50 = vector.load %arg5[%c0_67, %c0_68] : memref<64x128xf32, #tpu.memory_space<vmem>>, vector<64x128xf32>
    %c5 = arith.constant 5 : index
    %c0_69 = arith.constant 0 : index
    %c0_70 = arith.constant 0 : index
    %51 = vector.load %arg2[%c5, %c0_69, %c0_70] : memref<9x128x128xbf16, #tpu.memory_space<vmem>>, vector<1x128x128xbf16>
    %52 = vector.shape_cast %51 : vector<1x128x128xbf16> to vector<128x128xbf16>
    %cst_71 = arith.constant dense<0.000000e+00> : vector<64x128xf32>
    %53 = tpu.matmul %49, %52, %cst_71 {dimension_numbers = #tpu.dot_dimension_numbers<[1], [0], [0], [1], [0, 0, 1, 1], [], []>} : vector<64x128xbf16>, vector<128x128xbf16>, vector<64x128xf32> -> vector<64x128xf32>
    %54 = arith.addf %50, %53 : vector<64x128xf32>
    %c0_72 = arith.constant 0 : index
    %c0_73 = arith.constant 0 : index
    %55 = vector.load %arg5[%c0_72, %c0_73] : memref<64x128xf32, #tpu.memory_space<vmem>>, vector<64x128xf32>
    tpu.vector_store %arg5[%c0_72, %c0_73], %54 {strides = array<i32>} : memref<64x128xf32, #tpu.memory_space<vmem>>, vector<64x128xf32>,
    %c0_74 = arith.constant 0 : index
    %c0_75 = arith.constant 0 : index
    %c1_76 = arith.constant 1 : index
    %c0_77 = arith.constant 0 : index
    %c0_78 = arith.constant 0 : index
    %56 = vector.load %arg1[%c0_74, %c0_75, %c1_76, %c0_77, %c0_78] : memref<1x4x9x9x128xbf16, #tpu.memory_space<vmem>>, vector<1x1x8x8x128xbf16>
    %57 = vector.shape_cast %56 : vector<1x1x8x8x128xbf16> to vector<8x8x128xbf16>
    %58 = vector.shape_cast %57 : vector<8x8x128xbf16> to vector<64x128xbf16>
    %c0_79 = arith.constant 0 : index
    %c0_80 = arith.constant 0 : index
    %59 = vector.load %arg5[%c0_79, %c0_80] : memref<64x128xf32, #tpu.memory_space<vmem>>, vector<64x128xf32>
    %c6 = arith.constant 6 : index
    %c0_81 = arith.constant 0 : index
    %c0_82 = arith.constant 0 : index
    %60 = vector.load %arg2[%c6, %c0_81, %c0_82] : memref<9x128x128xbf16, #tpu.memory_space<vmem>>, vector<1x128x128xbf16>
    %61 = vector.shape_cast %60 : vector<1x128x128xbf16> to vector<128x128xbf16>
    %cst_83 = arith.constant dense<0.000000e+00> : vector<64x128xf32>
    %62 = tpu.matmul %58, %61, %cst_83 {dimension_numbers = #tpu.dot_dimension_numbers<[1], [0], [0], [1], [0, 0, 1, 1], [], []>} : vector<64x128xbf16>, vector<128x128xbf16>, vector<64x128xf32> -> vector<64x128xf32>
    %63 = arith.addf %59, %62 : vector<64x128xf32>
    %c0_84 = arith.constant 0 : index
    %c0_85 = arith.constant 0 : index
    %64 = vector.load %arg5[%c0_84, %c0_85] : memref<64x128xf32, #tpu.memory_space<vmem>>, vector<64x128xf32>
    tpu.vector_store %arg5[%c0_84, %c0_85], %63 {strides = array<i32>} : memref<64x128xf32, #tpu.memory_space<vmem>>, vector<64x128xf32>,
    %c0_86 = arith.constant 0 : index
    %c1_87 = arith.constant 1 : index
    %c1_88 = arith.constant 1 : index
    %c0_89 = arith.constant 0 : index
    %c0_90 = arith.constant 0 : index
    %65 = vector.load %arg1[%c0_86, %c1_87, %c1_88, %c0_89, %c0_90] : memref<1x4x9x9x128xbf16, #tpu.memory_space<vmem>>, vector<1x1x8x8x128xbf16>
    %66 = vector.shape_cast %65 : vector<1x1x8x8x128xbf16> to vector<8x8x128xbf16>
    %67 = vector.shape_cast %66 : vector<8x8x128xbf16> to vector<64x128xbf16>
    %c0_91 = arith.constant 0 : index
    %c0_92 = arith.constant 0 : index
    %68 = vector.load %arg5[%c0_91, %c0_92] : memref<64x128xf32, #tpu.memory_space<vmem>>, vector<64x128xf32>
    %c7 = arith.constant 7 : index
    %c0_93 = arith.constant 0 : index
    %c0_94 = arith.constant 0 : index
    %69 = vector.load %arg2[%c7, %c0_93, %c0_94] : memref<9x128x128xbf16, #tpu.memory_space<vmem>>, vector<1x128x128xbf16>
    %70 = vector.shape_cast %69 : vector<1x128x128xbf16> to vector<128x128xbf16>
    %cst_95 = arith.constant dense<0.000000e+00> : vector<64x128xf32>
    %71 = tpu.matmul %67, %70, %cst_95 {dimension_numbers = #tpu.dot_dimension_numbers<[1], [0], [0], [1], [0, 0, 1, 1], [], []>} : vector<64x128xbf16>, vector<128x128xbf16>, vector<64x128xf32> -> vector<64x128xf32>
    %72 = arith.addf %68, %71 : vector<64x128xf32>
    %c0_96 = arith.constant 0 : index
    %c0_97 = arith.constant 0 : index
    %73 = vector.load %arg5[%c0_96, %c0_97] : memref<64x128xf32, #tpu.memory_space<vmem>>, vector<64x128xf32>
    tpu.vector_store %arg5[%c0_96, %c0_97], %72 {strides = array<i32>} : memref<64x128xf32, #tpu.memory_space<vmem>>, vector<64x128xf32>,
    %c0_98 = arith.constant 0 : index
    %c0_99 = arith.constant 0 : index
    %c1_100 = arith.constant 1 : index
    %c1_101 = arith.constant 1 : index
    %c0_102 = arith.constant 0 : index
    %74 = vector.load %arg1[%c0_98, %c0_99, %c1_100, %c1_101, %c0_102] : memref<1x4x9x9x128xbf16, #tpu.memory_space<vmem>>, vector<1x1x8x8x128xbf16>
    %75 = vector.shape_cast %74 : vector<1x1x8x8x128xbf16> to vector<8x8x128xbf16>
    %76 = vector.shape_cast %75 : vector<8x8x128xbf16> to vector<64x128xbf16>
    %c0_103 = arith.constant 0 : index
    %c0_104 = arith.constant 0 : index
    %77 = vector.load %arg5[%c0_103, %c0_104] : memref<64x128xf32, #tpu.memory_space<vmem>>, vector<64x128xf32>
    %c8 = arith.constant 8 : index
    %c0_105 = arith.constant 0 : index
    %c0_106 = arith.constant 0 : index
    %78 = vector.load %arg2[%c8, %c0_105, %c0_106] : memref<9x128x128xbf16, #tpu.memory_space<vmem>>, vector<1x128x128xbf16>
    %79 = vector.shape_cast %78 : vector<1x128x128xbf16> to vector<128x128xbf16>
    %cst_107 = arith.constant dense<0.000000e+00> : vector<64x128xf32>
    %80 = tpu.matmul %76, %79, %cst_107 {dimension_numbers = #tpu.dot_dimension_numbers<[1], [0], [0], [1], [0, 0, 1, 1], [], []>} : vector<64x128xbf16>, vector<128x128xbf16>, vector<64x128xf32> -> vector<64x128xf32>
    %81 = arith.addf %77, %80 : vector<64x128xf32>
    %c0_108 = arith.constant 0 : index
    %c0_109 = arith.constant 0 : index
    %82 = vector.load %arg5[%c0_108, %c0_109] : memref<64x128xf32, #tpu.memory_space<vmem>>, vector<64x128xf32>
    tpu.vector_store %arg5[%c0_108, %c0_109], %81 {strides = array<i32>} : memref<64x128xf32, #tpu.memory_space<vmem>>, vector<64x128xf32>,
    %c0_110 = arith.constant 0 : index
    %c0_111 = arith.constant 0 : index
    %83 = vector.load %arg5[%c0_110, %c0_111] : memref<64x128xf32, #tpu.memory_space<vmem>>, vector<64x128xf32>
    %84 = arith.truncf %83 : vector<64x128xf32> to vector<64x128xbf16>
    %c0_112 = arith.constant 0 : index
    %c0_113 = arith.constant 0 : index
    %c0_114 = arith.constant 0 : index
    %85 = vector.load %arg3[%c0_112, %c0_113, %c0_114] : memref<1x64x128xbf16, #tpu.memory_space<vmem>>, vector<1x64x128xbf16>
    %86 = vector.shape_cast %85 : vector<1x64x128xbf16> to vector<64x128xbf16>
    %87 = vector.shape_cast %84 : vector<64x128xbf16> to vector<1x64x128xbf16>
    tpu.vector_store %arg3[%c0_112, %c0_113, %c0_114], %87 {strides = array<i32>} : memref<1x64x128xbf16, #tpu.memory_space<vmem>>, vector<1x64x128xbf16>,
    %cst_115 = arith.constant dense<0.000000e+00> : vector<128xf32>
    %88 = vector.multi_reduction <add>, %83, %cst_115 [0] : vector<64x128xf32> to vector<128xf32>
    %89 = vector.shape_cast %88 : vector<128xf32> to vector<1x128xf32>
    %c0_116 = arith.constant 0 : index
    %c0_117 = arith.constant 0 : index
    %c0_118 = arith.constant 0 : index
    %90 = vector.load %arg4[%c0_116, %c0_117, %c0_118] : memref<1x2x128xf32, #tpu.memory_space<vmem>>, vector<1x1x128xf32>
    %91 = vector.shape_cast %90 : vector<1x1x128xf32> to vector<1x128xf32>
    %92 = vector.shape_cast %89 : vector<1x128xf32> to vector<1x1x128xf32>
    tpu.vector_store %arg4[%c0_116, %c0_117, %c0_118], %92 {strides = array<i32>} : memref<1x2x128xf32, #tpu.memory_space<vmem>>, vector<1x1x128xf32>,
    %93 = arith.mulf %83, %83 : vector<64x128xf32>
    %cst_119 = arith.constant dense<0.000000e+00> : vector<128xf32>
    %94 = vector.multi_reduction <add>, %93, %cst_119 [0] : vector<64x128xf32> to vector<128xf32>
    %95 = vector.shape_cast %94 : vector<128xf32> to vector<1x128xf32>
    %c0_120 = arith.constant 0 : index
    %c1_121 = arith.constant 1 : index
    %c0_122 = arith.constant 0 : index
    %96 = vector.load %arg4[%c0_120, %c1_121, %c0_122] : memref<1x2x128xf32, #tpu.memory_space<vmem>>, vector<1x1x128xf32>
    %97 = vector.shape_cast %96 : vector<1x1x128xf32> to vector<1x128xf32>
    %98 = vector.shape_cast %95 : vector<1x128xf32> to vector<1x1x128xf32>
    tpu.vector_store %arg4[%c0_120, %c1_121, %c0_122], %98 {strides = array<i32>} : memref<1x2x128xf32, #tpu.memory_space<vmem>>, vector<1x1x128xf32>,
    return
  }
  func.func @transform_0(%arg0: i32) -> (i32, i32, i32, i32, i32) {
    %c0_i32 = arith.constant 0 : i32
    %c0_i32_0 = arith.constant 0 : i32
    %c0_i32_1 = arith.constant 0 : i32
    %c0_i32_2 = arith.constant 0 : i32
    %c0_i32_3 = arith.constant 0 : i32
    return %arg0, %c0_i32, %c0_i32_0, %c0_i32_1, %c0_i32_2 : i32, i32, i32, i32, i32
  }
  func.func @transform_1(%arg0: i32) -> (i32, i32, i32) {
    %c0_i32 = arith.constant 0 : i32
    %c0_i32_0 = arith.constant 0 : i32
    %c0_i32_1 = arith.constant 0 : i32
    %c0_i32_2 = arith.constant 0 : i32
    return %c0_i32, %c0_i32_0, %c0_i32_1 : i32, i32, i32
  }
  func.func @transform_2(%arg0: i32) -> (i32, i32, i32) {
    %c0_i32 = arith.constant 0 : i32
    %c0_i32_0 = arith.constant 0 : i32
    %c0_i32_1 = arith.constant 0 : i32
    return %arg0, %c0_i32, %c0_i32_0 : i32, i32, i32
  }
  func.func @transform_3(%arg0: i32) -> (i32, i32, i32) {
    %c0_i32 = arith.constant 0 : i32
    %c0_i32_0 = arith.constant 0 : i32
    %c0_i32_1 = arith.constant 0 : i32
    return %arg0, %c0_i32, %c0_i32_0 : i32, i32, i32
  }
}

module attributes {stable_mosaic.version = 11 : i64} {
  func.func @_bn_act_kernel(%arg0: i32, %arg1: memref<128x128xbf16, #tpu.memory_space<vmem>>, %arg2: memref<2x128xf32, #tpu.memory_space<vmem>>, %arg3: memref<128x128xbf16, #tpu.memory_space<vmem>>) attributes {dimension_semantics = [#tpu.dimension_semantics<parallel>], iteration_bounds = array<i64: 1>, scalar_prefetch = 0 : i64, scratch_operands = 0 : i64, tpu.core_type = #tpu.core_type<tc>, window_params = [{transform_indices = @transform_0, window_bounds = array<i64: 128, 128>}, {pipeline_mode = #tpu.pipeline_mode<synchronous>, transform_indices = @transform_1, window_bounds = array<i64: 2, 128>}, {transform_indices = @transform_2, window_bounds = array<i64: 128, 128>}]} {
    %c0 = arith.constant 0 : index
    %c0_0 = arith.constant 0 : index
    %0 = vector.load %arg1[%c0, %c0_0] : memref<128x128xbf16, #tpu.memory_space<vmem>>, vector<128x128xbf16>
    %c0_1 = arith.constant 0 : index
    %c0_2 = arith.constant 0 : index
    %1 = vector.load %arg2[%c0_1, %c0_2] : memref<2x128xf32, #tpu.memory_space<vmem>>, vector<1x128xf32>
    %2 = arith.extf %0 : vector<128x128xbf16> to vector<128x128xf32>
    %3 = vector.broadcast %1 : vector<1x128xf32> to vector<128x128xf32>
    %4 = arith.mulf %2, %3 : vector<128x128xf32>
    %c1 = arith.constant 1 : index
    %c0_3 = arith.constant 0 : index
    %5 = vector.load %arg2[%c1, %c0_3] : memref<2x128xf32, #tpu.memory_space<vmem>>, vector<1x128xf32>
    %6 = vector.broadcast %5 : vector<1x128xf32> to vector<128x128xf32>
    %7 = arith.addf %4, %6 : vector<128x128xf32>
    %cst = arith.constant 0.000000e+00 : f32
    %8 = vector.broadcast %cst : f32 to vector<128x128xf32>
    %9 = arith.maximumf %7, %8 : vector<128x128xf32>
    %10 = arith.truncf %9 : vector<128x128xf32> to vector<128x128xbf16>
    %c0_4 = arith.constant 0 : index
    %c0_5 = arith.constant 0 : index
    %11 = vector.load %arg3[%c0_4, %c0_5] : memref<128x128xbf16, #tpu.memory_space<vmem>>, vector<128x128xbf16>
    tpu.vector_store %arg3[%c0_4, %c0_5], %10 {strides = array<i32>} : memref<128x128xbf16, #tpu.memory_space<vmem>>, vector<128x128xbf16>,
    return
  }
  func.func @transform_0(%arg0: i32) -> (i32, i32) {
    %c0_i32 = arith.constant 0 : i32
    %c0_i32_0 = arith.constant 0 : i32
    return %arg0, %c0_i32 : i32, i32
  }
  func.func @transform_1(%arg0: i32) -> (i32, i32) {
    %c0_i32 = arith.constant 0 : i32
    %c0_i32_0 = arith.constant 0 : i32
    %c0_i32_1 = arith.constant 0 : i32
    return %c0_i32, %c0_i32_0 : i32, i32
  }
  func.func @transform_2(%arg0: i32) -> (i32, i32) {
    %c0_i32 = arith.constant 0 : i32
    %c0_i32_0 = arith.constant 0 : i32
    return %arg0, %c0_i32 : i32, i32
  }
}

module attributes {stable_mosaic.version = 11 : i64} {
  func.func @_mm_stats_kernel(%arg0: i32, %arg1: i32, %arg2: memref<128x128xbf16, #tpu.memory_space<vmem>>, %arg3: memref<128x128xbf16, #tpu.memory_space<vmem>>, %arg4: memref<128x128xbf16, #tpu.memory_space<vmem>>, %arg5: memref<1x2x128xf32, #tpu.memory_space<vmem>>, %arg6: memref<128x128xf32, #tpu.memory_space<vmem>>) attributes {dimension_semantics = [#tpu.dimension_semantics<parallel>, #tpu.dimension_semantics<arbitrary>], iteration_bounds = array<i64: 1, 1>, scalar_prefetch = 0 : i64, scratch_operands = 1 : i64, tpu.core_type = #tpu.core_type<tc>, window_params = [{transform_indices = @transform_0, window_bounds = array<i64: 128, 128>}, {transform_indices = @transform_1, window_bounds = array<i64: 128, 128>}, {transform_indices = @transform_2, window_bounds = array<i64: 128, 128>}, {transform_indices = @transform_3, window_bounds = array<i64: 1, 2, 128>}]} {
    %c0_i32 = arith.constant 0 : i32
    %0 = arith.cmpi eq, %arg1, %c0_i32 : i32
    %1 = arith.extui %0 : i1 to i32
    %c0_i32_0 = arith.constant 0 : i32
    %2 = arith.cmpi ne, %1, %c0_i32_0 : i32
    scf.if %2 {
      %cst_10 = arith.constant 0.000000e+00 : f32
      %12 = vector.broadcast %cst_10 : f32 to vector<128x128xf32>
      %c0_11 = arith.constant 0 : index
      %c0_12 = arith.constant 0 : index
      %13 = vector.load %arg6[%c0_11, %c0_12] : memref<128x128xf32, #tpu.memory_space<vmem>>, vector<128x128xf32>
      tpu.vector_store %arg6[%c0_11, %c0_12], %12 {strides = array<i32>} : memref<128x128xf32, #tpu.memory_space<vmem>>, vector<128x128xf32>,
    } else {
    }
    %c0 = arith.constant 0 : index
    %c0_1 = arith.constant 0 : index
    %3 = vector.load %arg6[%c0, %c0_1] : memref<128x128xf32, #tpu.memory_space<vmem>>, vector<128x128xf32>
    %c0_2 = arith.constant 0 : index
    %c0_3 = arith.constant 0 : index
    %4 = vector.load %arg2[%c0_2, %c0_3] : memref<128x128xbf16, #tpu.memory_space<vmem>>, vector<128x128xbf16>
    %c0_4 = arith.constant 0 : index
    %c0_5 = arith.constant 0 : index
    %5 = vector.load %arg3[%c0_4, %c0_5] : memref<128x128xbf16, #tpu.memory_space<vmem>>, vector<128x128xbf16>
    %cst = arith.constant dense<0.000000e+00> : vector<128x128xf32>
    %6 = tpu.matmul %4, %5, %cst {dimension_numbers = #tpu.dot_dimension_numbers<[1], [0], [0], [1], [0, 0, 1, 1], [], []>} : vector<128x128xbf16>, vector<128x128xbf16>, vector<128x128xf32> -> vector<128x128xf32>
    %7 = arith.addf %3, %6 : vector<128x128xf32>
    %c0_6 = arith.constant 0 : index
    %c0_7 = arith.constant 0 : index
    %8 = vector.load %arg6[%c0_6, %c0_7] : memref<128x128xf32, #tpu.memory_space<vmem>>, vector<128x128xf32>
    tpu.vector_store %arg6[%c0_6, %c0_7], %7 {strides = array<i32>} : memref<128x128xf32, #tpu.memory_space<vmem>>, vector<128x128xf32>,
    %c0_i32_8 = arith.constant 0 : i32
    %9 = arith.cmpi eq, %arg1, %c0_i32_8 : i32
    %10 = arith.extui %9 : i1 to i32
    %c0_i32_9 = arith.constant 0 : i32
    %11 = arith.cmpi ne, %10, %c0_i32_9 : i32
    scf.if %11 {
      %c0_10 = arith.constant 0 : index
      %c0_11 = arith.constant 0 : index
      %12 = vector.load %arg6[%c0_10, %c0_11] : memref<128x128xf32, #tpu.memory_space<vmem>>, vector<128x128xf32>
      %13 = arith.truncf %12 : vector<128x128xf32> to vector<128x128xbf16>
      %c0_12 = arith.constant 0 : index
      %c0_13 = arith.constant 0 : index
      %14 = vector.load %arg4[%c0_12, %c0_13] : memref<128x128xbf16, #tpu.memory_space<vmem>>, vector<128x128xbf16>
      tpu.vector_store %arg4[%c0_12, %c0_13], %13 {strides = array<i32>} : memref<128x128xbf16, #tpu.memory_space<vmem>>, vector<128x128xbf16>,
      %cst_14 = arith.constant dense<0.000000e+00> : vector<128xf32>
      %15 = vector.multi_reduction <add>, %12, %cst_14 [0] : vector<128x128xf32> to vector<128xf32>
      %16 = vector.shape_cast %15 : vector<128xf32> to vector<1x128xf32>
      %c0_15 = arith.constant 0 : index
      %c0_16 = arith.constant 0 : index
      %c0_17 = arith.constant 0 : index
      %17 = vector.load %arg5[%c0_15, %c0_16, %c0_17] : memref<1x2x128xf32, #tpu.memory_space<vmem>>, vector<1x1x128xf32>
      %18 = vector.shape_cast %17 : vector<1x1x128xf32> to vector<1x128xf32>
      %19 = vector.shape_cast %16 : vector<1x128xf32> to vector<1x1x128xf32>
      tpu.vector_store %arg5[%c0_15, %c0_16, %c0_17], %19 {strides = array<i32>} : memref<1x2x128xf32, #tpu.memory_space<vmem>>, vector<1x1x128xf32>,
      %20 = arith.mulf %12, %12 : vector<128x128xf32>
      %cst_18 = arith.constant dense<0.000000e+00> : vector<128xf32>
      %21 = vector.multi_reduction <add>, %20, %cst_18 [0] : vector<128x128xf32> to vector<128xf32>
      %22 = vector.shape_cast %21 : vector<128xf32> to vector<1x128xf32>
      %c0_19 = arith.constant 0 : index
      %c1 = arith.constant 1 : index
      %c0_20 = arith.constant 0 : index
      %23 = vector.load %arg5[%c0_19, %c1, %c0_20] : memref<1x2x128xf32, #tpu.memory_space<vmem>>, vector<1x1x128xf32>
      %24 = vector.shape_cast %23 : vector<1x1x128xf32> to vector<1x128xf32>
      %25 = vector.shape_cast %22 : vector<1x128xf32> to vector<1x1x128xf32>
      tpu.vector_store %arg5[%c0_19, %c1, %c0_20], %25 {strides = array<i32>} : memref<1x2x128xf32, #tpu.memory_space<vmem>>, vector<1x1x128xf32>,
    } else {
    }
    return
  }
  func.func @transform_0(%arg0: i32, %arg1: i32) -> (i32, i32) {
    %c0_i32 = arith.constant 0 : i32
    return %arg0, %arg1 : i32, i32
  }
  func.func @transform_1(%arg0: i32, %arg1: i32) -> (i32, i32) {
    %c0_i32 = arith.constant 0 : i32
    %c0_i32_0 = arith.constant 0 : i32
    return %arg1, %c0_i32 : i32, i32
  }
  func.func @transform_2(%arg0: i32, %arg1: i32) -> (i32, i32) {
    %c0_i32 = arith.constant 0 : i32
    %c0_i32_0 = arith.constant 0 : i32
    return %arg0, %c0_i32 : i32, i32
  }
  func.func @transform_3(%arg0: i32, %arg1: i32) -> (i32, i32, i32) {
    %c0_i32 = arith.constant 0 : i32
    %c0_i32_0 = arith.constant 0 : i32
    %c0_i32_1 = arith.constant 0 : i32
    return %arg0, %c0_i32, %c0_i32_0 : i32, i32, i32
  }
}

module attributes {stable_mosaic.version = 11 : i64} {
  func.func @_residual_epilogue_kernel(%arg0: i32, %arg1: memref<128x128xbf16, #tpu.memory_space<vmem>>, %arg2: memref<128x128xbf16, #tpu.memory_space<vmem>>, %arg3: memref<2x128xf32, #tpu.memory_space<vmem>>, %arg4: memref<2x128xf32, #tpu.memory_space<vmem>>, %arg5: memref<128x128xf32, #tpu.memory_space<vmem>>) attributes {dimension_semantics = [#tpu.dimension_semantics<parallel>], iteration_bounds = array<i64: 1>, scalar_prefetch = 0 : i64, scratch_operands = 0 : i64, tpu.core_type = #tpu.core_type<tc>, window_params = [{transform_indices = @transform_0, window_bounds = array<i64: 128, 128>}, {transform_indices = @transform_1, window_bounds = array<i64: 128, 128>}, {pipeline_mode = #tpu.pipeline_mode<synchronous>, transform_indices = @transform_2, window_bounds = array<i64: 2, 128>}, {pipeline_mode = #tpu.pipeline_mode<synchronous>, transform_indices = @transform_3, window_bounds = array<i64: 2, 128>}, {transform_indices = @transform_4, window_bounds = array<i64: 128, 128>}]} {
    %c0 = arith.constant 0 : index
    %c0_0 = arith.constant 0 : index
    %0 = vector.load %arg1[%c0, %c0_0] : memref<128x128xbf16, #tpu.memory_space<vmem>>, vector<128x128xbf16>
    %c0_1 = arith.constant 0 : index
    %c0_2 = arith.constant 0 : index
    %1 = vector.load %arg3[%c0_1, %c0_2] : memref<2x128xf32, #tpu.memory_space<vmem>>, vector<1x128xf32>
    %2 = arith.extf %0 : vector<128x128xbf16> to vector<128x128xf32>
    %3 = vector.broadcast %1 : vector<1x128xf32> to vector<128x128xf32>
    %4 = arith.mulf %2, %3 : vector<128x128xf32>
    %c1 = arith.constant 1 : index
    %c0_3 = arith.constant 0 : index
    %5 = vector.load %arg3[%c1, %c0_3] : memref<2x128xf32, #tpu.memory_space<vmem>>, vector<1x128xf32>
    %6 = vector.broadcast %5 : vector<1x128xf32> to vector<128x128xf32>
    %7 = arith.addf %4, %6 : vector<128x128xf32>
    %c0_4 = arith.constant 0 : index
    %c0_5 = arith.constant 0 : index
    %8 = vector.load %arg2[%c0_4, %c0_5] : memref<128x128xbf16, #tpu.memory_space<vmem>>, vector<128x128xbf16>
    %c0_6 = arith.constant 0 : index
    %c0_7 = arith.constant 0 : index
    %9 = vector.load %arg4[%c0_6, %c0_7] : memref<2x128xf32, #tpu.memory_space<vmem>>, vector<1x128xf32>
    %10 = arith.extf %8 : vector<128x128xbf16> to vector<128x128xf32>
    %11 = vector.broadcast %9 : vector<1x128xf32> to vector<128x128xf32>
    %12 = arith.mulf %10, %11 : vector<128x128xf32>
    %c1_8 = arith.constant 1 : index
    %c0_9 = arith.constant 0 : index
    %13 = vector.load %arg4[%c1_8, %c0_9] : memref<2x128xf32, #tpu.memory_space<vmem>>, vector<1x128xf32>
    %14 = vector.broadcast %13 : vector<1x128xf32> to vector<128x128xf32>
    %15 = arith.addf %12, %14 : vector<128x128xf32>
    %16 = arith.addf %7, %15 : vector<128x128xf32>
    %cst = arith.constant 0.000000e+00 : f32
    %17 = vector.broadcast %cst : f32 to vector<128x128xf32>
    %18 = arith.maximumf %16, %17 : vector<128x128xf32>
    %c0_10 = arith.constant 0 : index
    %c0_11 = arith.constant 0 : index
    %19 = vector.load %arg5[%c0_10, %c0_11] : memref<128x128xf32, #tpu.memory_space<vmem>>, vector<128x128xf32>
    tpu.vector_store %arg5[%c0_10, %c0_11], %18 {strides = array<i32>} : memref<128x128xf32, #tpu.memory_space<vmem>>, vector<128x128xf32>,
    return
  }
  func.func @transform_0(%arg0: i32) -> (i32, i32) {
    %c0_i32 = arith.constant 0 : i32
    %c0_i32_0 = arith.constant 0 : i32
    return %arg0, %c0_i32 : i32, i32
  }
  func.func @transform_1(%arg0: i32) -> (i32, i32) {
    %c0_i32 = arith.constant 0 : i32
    %c0_i32_0 = arith.constant 0 : i32
    return %arg0, %c0_i32 : i32, i32
  }
  func.func @transform_2(%arg0: i32) -> (i32, i32) {
    %c0_i32 = arith.constant 0 : i32
    %c0_i32_0 = arith.constant 0 : i32
    %c0_i32_1 = arith.constant 0 : i32
    return %c0_i32, %c0_i32_0 : i32, i32
  }
  func.func @transform_3(%arg0: i32) -> (i32, i32) {
    %c0_i32 = arith.constant 0 : i32
    %c0_i32_0 = arith.constant 0 : i32
    %c0_i32_1 = arith.constant 0 : i32
    return %c0_i32, %c0_i32_0 : i32, i32
  }
  func.func @transform_4(%arg0: i32) -> (i32, i32) {
    %c0_i32 = arith.constant 0 : i32
    %c0_i32_0 = arith.constant 0 : i32
    return %arg0, %c0_i32 : i32, i32
  }
}

</mosaic_0001>

<llo_original>
// kernel: bottleneck_forward.8
$region0: #{bottleneck_forward.8}
  #allocation0 [shape = 'u32[]', space=smem, size = 0x4, offset = 0x4, fixed_abs, tag = 'smem constant byte address 0x4 - core index']
  #allocation1 [shape = 'u32[144,128]{1,0:T(1,128)}', space=vmem, size = 0x12000, scoped, tag = 'internal scratch']
  %s0 = inlined_call_operand.vmem [shape: bf16[512,128], index: 0, kind: input, shape index: {}]
  %s1 = inlined_call_operand.vmem [shape: f32[2,128], index: 1, kind: input, shape index: {}]
  %s2 = inlined_call_operand.vmem [shape: bf16[512,128], index: 2, kind: output, shape index: {}]
  %s3 = sld [smem:[#allocation0]]
  $region18: #{bottleneck_forward.8} parent=0
    _
  %s5 = ssub.s32 1, %s3
  %s6 = scalar_select 0, %s5, %s3
  // Predicated region
  $region2: #{bottleneck_forward.8} parent=0 // pred_check
    _
  $region3: #{bottleneck_forward.8} parent=0 // pred_check_branch
    %8 = sbr.rel (0) target = $region5
  $region4: #{bottleneck_forward.8} parent=0 // pred_region
    _
  $region5: #{bottleneck_forward.8} parent=0 // pred_fallthru
    _
  // Predicated region
  $region6: #{bottleneck_forward.8} parent=0 // pred_check
    _
  $region7: #{bottleneck_forward.8} parent=0 // pred_check_branch
    %10 = sbr.rel (0) target = $region9
  $region8: #{bottleneck_forward.8} parent=0 // pred_region
    _
  $region9: #{bottleneck_forward.8} parent=0 // pred_fallthru
    _
  %v11 = vld [vmem:[%s0] sm:$0xf]
  %v12 = vld [vmem:[%s0 + $0x4] sm:$0xf]
  %v13 = vld [vmem:[%s0 + $0x8] sm:$0xf]
  %v14 = vld [vmem:[%s0 + $0xc] sm:$0xf]
  %v15 = vld [vmem:[%s0 + $0x10] sm:$0xf]
  %v16 = vld [vmem:[%s0 + $0x14] sm:$0xf]
  %v17 = vld [vmem:[%s0 + $0x18] sm:$0xf]
  %v18 = vld [vmem:[%s0 + $0x1c] sm:$0xf]
  %v19 = vld [vmem:[%s0 + $0x20] sm:$0xf]
  %v20 = vld [vmem:[%s0 + $0x24] sm:$0xf]
  %v21 = vld [vmem:[%s0 + $0x28] sm:$0xf]
  %v22 = vld [vmem:[%s0 + $0x2c] sm:$0xf]
  %v23 = vld [vmem:[%s0 + $0x30] sm:$0xf]
  %v24 = vld [vmem:[%s0 + $0x34] sm:$0xf]
  %v25 = vld [vmem:[%s0 + $0x38] sm:$0xf]
  %v26 = vld [vmem:[%s0 + $0x3c] sm:$0xf]
  %v27 = vld [vmem:[%s0 + $0x40] sm:$0xf]
  %v28 = vld [vmem:[%s0 + $0x44] sm:$0xf]
  %v29 = vld [vmem:[%s0 + $0x48] sm:$0xf]
  %v30 = vld [vmem:[%s0 + $0x4c] sm:$0xf]
  %v31 = vld [vmem:[%s0 + $0x50] sm:$0xf]
  %v32 = vld [vmem:[%s0 + $0x54] sm:$0xf]
  %v33 = vld [vmem:[%s0 + $0x58] sm:$0xf]
  %v34 = vld [vmem:[%s0 + $0x5c] sm:$0xf]
  %v35 = vld [vmem:[%s0 + $0x60] sm:$0xf]
  %v36 = vld [vmem:[%s0 + $0x64] sm:$0xf]
  %v37 = vld [vmem:[%s0 + $0x68] sm:$0xf]
  %v38 = vld [vmem:[%s0 + $0x6c] sm:$0xf]
  %v39 = vld [vmem:[%s0 + $0x70] sm:$0xf]
  %v40 = vld [vmem:[%s0 + $0x74] sm:$0xf]
  %v41 = vld [vmem:[%s0 + $0x78] sm:$0xf]
  %v42 = vld [vmem:[%s0 + $0x7c] sm:$0xf]
  %v43 = vld [vmem:[%s0 + $0x80] sm:$0xf]
  %v44 = vld [vmem:[%s0 + $0x84] sm:$0xf]
  %v45 = vld [vmem:[%s0 + $0x88] sm:$0xf]
  %v46 = vld [vmem:[%s0 + $0x8c] sm:$0xf]
  %v47 = vld [vmem:[%s0 + $0x90] sm:$0xf]
  %v48 = vld [vmem:[%s0 + $0x94] sm:$0xf]
  %v49 = vld [vmem:[%s0 + $0x98] sm:$0xf]
  %v50 = vld [vmem:[%s0 + $0x9c] sm:$0xf]
  %v51 = vld [vmem:[%s0 + $0xa0] sm:$0xf]
  %v52 = vld [vmem:[%s0 + $0xa4] sm:$0xf]
  %v53 = vld [vmem:[%s0 + $0xa8] sm:$0xf]
  %v54 = vld [vmem:[%s0 + $0xac] sm:$0xf]
  %v55 = vld [vmem:[%s0 + $0xb0] sm:$0xf]
  %v56 = vld [vmem:[%s0 + $0xb4] sm:$0xf]
  %v57 = vld [vmem:[%s0 + $0xb8] sm:$0xf]
  %v58 = vld [vmem:[%s0 + $0xbc] sm:$0xf]
  %v59 = vld [vmem:[%s0 + $0xc0] sm:$0xf]
  %v60 = vld [vmem:[%s0 + $0xc4] sm:$0xf]
  %v61 = vld [vmem:[%s0 + $0xc8] sm:$0xf]
  %v62 = vld [vmem:[%s0 + $0xcc] sm:$0xf]
  %v63 = vld [vmem:[%s0 + $0xd0] sm:$0xf]
  %v64 = vld [vmem:[%s0 + $0xd4] sm:$0xf]
  %v65 = vld [vmem:[%s0 + $0xd8] sm:$0xf]
  %v66 = vld [vmem:[%s0 + $0xdc] sm:$0xf]
  %v67 = vld [vmem:[%s0 + $0xe0] sm:$0xf]
  %v68 = vld [vmem:[%s0 + $0xe4] sm:$0xf]
  %v69 = vld [vmem:[%s0 + $0xe8] sm:$0xf]
  %v70 = vld [vmem:[%s0 + $0xec] sm:$0xf]
  %v71 = vld [vmem:[%s0 + $0xf0] sm:$0xf]
  %v72 = vld [vmem:[%s0 + $0xf4] sm:$0xf]
  %v73 = vld [vmem:[%s0 + $0xf8] sm:$0xf]
  %v74 = vld [vmem:[%s0 + $0xfc] sm:$0xf]
  %v75 = vld [vmem:[%s1] sm:$0x1]
  %v76 = vunpack.c.l.bf16 %v11
  %v77 = vunpack.c.l.bf16 %v12
  %v78 = vunpack.c.l.bf16 %v13
  %v79 = vunpack.c.l.bf16 %v14
  %v80 = vunpack.c.l.bf16 %v15
  %v81 = vunpack.c.l.bf16 %v16
  %v82 = vunpack.c.l.bf16 %v17
  %v83 = vunpack.c.l.bf16 %v18
  %v84 = vunpack.c.l.bf16 %v19
  %v85 = vunpack.c.l.bf16 %v20
  %v86 = vunpack.c.l.bf16 %v21
  %v87 = vunpack.c.l.bf16 %v22
  %v88 = vunpack.c.l.bf16 %v23
  %v89 = vunpack.c.l.bf16 %v24
  %v90 = vunpack.c.l.bf16 %v25
  %v91 = vunpack.c.l.bf16 %v26
  %v92 = vunpack.c.l.bf16 %v27
  %v93 = vunpack.c.l.bf16 %v28
  %v94 = vunpack.c.l.bf16 %v29
  %v95 = vunpack.c.l.bf16 %v30
  %v96 = vunpack.c.l.bf16 %v31
  %v97 = vunpack.c.l.bf16 %v32
  %v98 = vunpack.c.l.bf16 %v33
  %v99 = vunpack.c.l.bf16 %v34
  %v100 = vunpack.c.l.bf16 %v35
  %v101 = vunpack.c.l.bf16 %v36
  %v102 = vunpack.c.l.bf16 %v37
  %v103 = vunpack.c.l.bf16 %v38
  %v104 = vunpack.c.l.bf16 %v39
  %v105 = vunpack.c.l.bf16 %v40
  %v106 = vunpack.c.l.bf16 %v41
  %v107 = vunpack.c.l.bf16 %v42
  %v108 = vunpack.c.l.bf16 %v43
  %v109 = vunpack.c.l.bf16 %v44
  %v110 = vunpack.c.l.bf16 %v45
  %v111 = vunpack.c.l.bf16 %v46
  %v112 = vunpack.c.l.bf16 %v47
  %v113 = vunpack.c.l.bf16 %v48
  %v114 = vunpack.c.l.bf16 %v49
  %v115 = vunpack.c.l.bf16 %v50
  %v116 = vunpack.c.l.bf16 %v51
  %v117 = vunpack.c.l.bf16 %v52
  %v118 = vunpack.c.l.bf16 %v53
  %v119 = vunpack.c.l.bf16 %v54
  %v120 = vunpack.c.l.bf16 %v55
  %v121 = vunpack.c.l.bf16 %v56
  %v122 = vunpack.c.l.bf16 %v57
  %v123 = vunpack.c.l.bf16 %v58
  %v124 = vunpack.c.l.bf16 %v59
  %v125 = vunpack.c.l.bf16 %v60
  %v126 = vunpack.c.l.bf16 %v61
  %v127 = vunpack.c.l.bf16 %v62
  %v128 = vunpack.c.l.bf16 %v63
  %v129 = vunpack.c.l.bf16 %v64
  %v130 = vunpack.c.l.bf16 %v65
  %v131 = vunpack.c.l.bf16 %v66
  %v132 = vunpack.c.l.bf16 %v67
  %v133 = vunpack.c.l.bf16 %v68
  %v134 = vunpack.c.l.bf16 %v69
  %v135 = vunpack.c.l.bf16 %v70
  %v136 = vunpack.c.l.bf16 %v71
  %v137 = vunpack.c.l.bf16 %v72
  %v138 = vunpack.c.l.bf16 %v73
  %v139 = vunpack.c.l.bf16 %v74
  %v140 = vlaneseq
  %v141 = vshrl.u32 %v140, 7
  %v142 = vsub.s32 0, %v141
  %v143 = vrot.slane %v75, %v142
  %v144 = vmul.f32 %v76, %v143
  %v145 = vmul.f32 %v77, %v143
  %v146 = vmul.f32 %v78, %v143
  %v147 = vmul.f32 %v79, %v143
  %v148 = vmul.f32 %v80, %v143
  %v149 = vmul.f32 %v81, %v143
  %v150 = vmul.f32 %v82, %v143
  %v151 = vmul.f32 %v83, %v143
  %v152 = vmul.f32 %v84, %v143
  %v153 = vmul.f32 %v85, %v143
  %v154 = vmul.f32 %v86, %v143
  %v155 = vmul.f32 %v87, %v143
  %v156 = vmul.f32 %v88, %v143
  %v157 = vmul.f32 %v89, %v143
  %v158 = vmul.f32 %v90, %v143
  %v159 = vmul.f32 %v91, %v143
  %v160 = vmul.f32 %v92, %v143
  %v161 = vmul.f32 %v93, %v143
  %v162 = vmul.f32 %v94, %v143
  %v163 = vmul.f32 %v95, %v143
  %v164 = vmul.f32 %v96, %v143
  %v165 = vmul.f32 %v97, %v143
  %v166 = vmul.f32 %v98, %v143
  %v167 = vmul.f32 %v99, %v143
  %v168 = vmul.f32 %v100, %v143
  %v169 = vmul.f32 %v101, %v143
  %v170 = vmul.f32 %v102, %v143
  %v171 = vmul.f32 %v103, %v143
  %v172 = vmul.f32 %v104, %v143
  %v173 = vmul.f32 %v105, %v143
  %v174 = vmul.f32 %v106, %v143
  %v175 = vmul.f32 %v107, %v143
  %v176 = vmul.f32 %v108, %v143
  %v177 = vmul.f32 %v109, %v143
  %v178 = vmul.f32 %v110, %v143
  %v179 = vmul.f32 %v111, %v143
  %v180 = vmul.f32 %v112, %v143
  %v181 = vmul.f32 %v113, %v143
  %v182 = vmul.f32 %v114, %v143
  %v183 = vmul.f32 %v115, %v143
  %v184 = vmul.f32 %v116, %v143
  %v185 = vmul.f32 %v117, %v143
  %v186 = vmul.f32 %v118, %v143
  %v187 = vmul.f32 %v119, %v143
  %v188 = vmul.f32 %v120, %v143
  %v189 = vmul.f32 %v121, %v143
  %v190 = vmul.f32 %v122, %v143
  %v191 = vmul.f32 %v123, %v143
  %v192 = vmul.f32 %v124, %v143
  %v193 = vmul.f32 %v125, %v143
  %v194 = vmul.f32 %v126, %v143
  %v195 = vmul.f32 %v127, %v143
  %v196 = vmul.f32 %v128, %v143
  %v197 = vmul.f32 %v129, %v143
  %v198 = vmul.f32 %v130, %v143
  %v199 = vmul.f32 %v131, %v143
  %v200 = vmul.f32 %v132, %v143
  %v201 = vmul.f32 %v133, %v143
  %v202 = vmul.f32 %v134, %v143
  %v203 = vmul.f32 %v135, %v143
  %v204 = vmul.f32 %v136, %v143
  %v205 = vmul.f32 %v137, %v143
  %v206 = vmul.f32 %v138, %v143
  %v207 = vmul.f32 %v139, %v143
  %v208 = vld [vmem:[%s1 + $0x1] sm:$0x1]
  %v209 = vlaneseq
  %v210 = vshrl.u32 %v209, 7
  %v211 = vsub.s32 0, %v210
  %v212 = vrot.slane %v208, %v211
  %v213 = vadd.f32 %v144, %v212
  %v214 = vadd.f32 %v145, %v212
  %v215 = vadd.f32 %v146, %v212
  %v216 = vadd.f32 %v147, %v212
  %v217 = vadd.f32 %v148, %v212
  %v218 = vadd.f32 %v149, %v212
  %v219 = vadd.f32 %v150, %v212
  %v220 = vadd.f32 %v151, %v212
  %v221 = vadd.f32 %v152, %v212
  %v222 = vadd.f32 %v153, %v212
  %v223 = vadd.f32 %v154, %v212
  %v224 = vadd.f32 %v155, %v212
  %v225 = vadd.f32 %v156, %v212
  %v226 = vadd.f32 %v157, %v212
  %v227 = vadd.f32 %v158, %v212
  %v228 = vadd.f32 %v159, %v212
  %v229 = vadd.f32 %v160, %v212
  %v230 = vadd.f32 %v161, %v212
  %v231 = vadd.f32 %v162, %v212
  %v232 = vadd.f32 %v163, %v212
  %v233 = vadd.f32 %v164, %v212
  %v234 = vadd.f32 %v165, %v212
  %v235 = vadd.f32 %v166, %v212
  %v236 = vadd.f32 %v167, %v212
  %v237 = vadd.f32 %v168, %v212
  %v238 = vadd.f32 %v169, %v212
  %v239 = vadd.f32 %v170, %v212
  %v240 = vadd.f32 %v171, %v212
  %v241 = vadd.f32 %v172, %v212
  %v242 = vadd.f32 %v173, %v212
  %v243 = vadd.f32 %v174, %v212
  %v244 = vadd.f32 %v175, %v212
  %v245 = vadd.f32 %v176, %v212
  %v246 = vadd.f32 %v177, %v212
  %v247 = vadd.f32 %v178, %v212
  %v248 = vadd.f32 %v179, %v212
  %v249 = vadd.f32 %v180, %v212
  %v250 = vadd.f32 %v181, %v212
  %v251 = vadd.f32 %v182, %v212
  %v252 = vadd.f32 %v183, %v212
  %v253 = vadd.f32 %v184, %v212
  %v254 = vadd.f32 %v185, %v212
  %v255 = vadd.f32 %v186, %v212
  %v256 = vadd.f32 %v187, %v212
  %v257 = vadd.f32 %v188, %v212
  %v258 = vadd.f32 %v189, %v212
  %v259 = vadd.f32 %v190, %v212
  %v260 = vadd.f32 %v191, %v212
  %v261 = vadd.f32 %v192, %v212
  %v262 = vadd.f32 %v193, %v212
  %v263 = vadd.f32 %v194, %v212
  %v264 = vadd.f32 %v195, %v212
  %v265 = vadd.f32 %v196, %v212
  %v266 = vadd.f32 %v197, %v212
  %v267 = vadd.f32 %v198, %v212
  %v268 = vadd.f32 %v199, %v212
  %v269 = vadd.f32 %v200, %v212
  %v270 = vadd.f32 %v201, %v212
  %v271 = vadd.f32 %v202, %v212
  %v272 = vadd.f32 %v203, %v212
  %v273 = vadd.f32 %v204, %v212
  %v274 = vadd.f32 %v205, %v212
  %v275 = vadd.f32 %v206, %v212
  %v276 = vadd.f32 %v207, %v212
  %v277 = vmax.f32 %v213, 0.0
  %v278 = vmax.f32 %v214, 0.0
  %v279 = vmax.f32 %v215, 0.0
  %v280 = vmax.f32 %v216, 0.0
  %v281 = vmax.f32 %v217, 0.0
  %v282 = vmax.f32 %v218, 0.0
  %v283 = vmax.f32 %v219, 0.0
  %v284 = vmax.f32 %v220, 0.0
  %v285 = vmax.f32 %v221, 0.0
  %v286 = vmax.f32 %v222, 0.0
  %v287 = vmax.f32 %v223, 0.0
  %v288 = vmax.f32 %v224, 0.0
  %v289 = vmax.f32 %v225, 0.0
  %v290 = vmax.f32 %v226, 0.0
  %v291 = vmax.f32 %v227, 0.0
  %v292 = vmax.f32 %v228, 0.0
  %v293 = vmax.f32 %v229, 0.0
  %v294 = vmax.f32 %v230, 0.0
  %v295 = vmax.f32 %v231, 0.0
  %v296 = vmax.f32 %v232, 0.0
  %v297 = vmax.f32 %v233, 0.0
  %v298 = vmax.f32 %v234, 0.0
  %v299 = vmax.f32 %v235, 0.0
  %v300 = vmax.f32 %v236, 0.0
  %v301 = vmax.f32 %v237, 0.0
  %v302 = vmax.f32 %v238, 0.0
  %v303 = vmax.f32 %v239, 0.0
  %v304 = vmax.f32 %v240, 0.0
  %v305 = vmax.f32 %v241, 0.0
  %v306 = vmax.f32 %v242, 0.0
  %v307 = vmax.f32 %v243, 0.0
  %v308 = vmax.f32 %v244, 0.0
  %v309 = vmax.f32 %v245, 0.0
  %v310 = vmax.f32 %v246, 0.0
  %v311 = vmax.f32 %v247, 0.0
  %v312 = vmax.f32 %v248, 0.0
  %v313 = vmax.f32 %v249, 0.0
  %v314 = vmax.f32 %v250, 0.0
  %v315 = vmax.f32 %v251, 0.0
  %v316 = vmax.f32 %v252, 0.0
  %v317 = vmax.f32 %v253, 0.0
  %v318 = vmax.f32 %v254, 0.0
  %v319 = vmax.f32 %v255, 0.0
  %v320 = vmax.f32 %v256, 0.0
  %v321 = vmax.f32 %v257, 0.0
  %v322 = vmax.f32 %v258, 0.0
  %v323 = vmax.f32 %v259, 0.0
  %v324 = vmax.f32 %v260, 0.0
  %v325 = vmax.f32 %v261, 0.0
  %v326 = vmax.f32 %v262, 0.0
  %v327 = vmax.f32 %v263, 0.0
  %v328 = vmax.f32 %v264, 0.0
  %v329 = vmax.f32 %v265, 0.0
  %v330 = vmax.f32 %v266, 0.0
  %v331 = vmax.f32 %v267, 0.0
  %v332 = vmax.f32 %v268, 0.0
  %v333 = vmax.f32 %v269, 0.0
  %v334 = vmax.f32 %v270, 0.0
  %v335 = vmax.f32 %v271, 0.0
  %v336 = vmax.f32 %v272, 0.0
  %v337 = vmax.f32 %v273, 0.0
  %v338 = vmax.f32 %v274, 0.0
  %v339 = vmax.f32 %v275, 0.0
  %v340 = vmax.f32 %v276, 0.0
  %v341 = vpack.c.bf16 %v278, %v277
  %v342 = vpack.c.bf16 %v280, %v279
  %v343 = vpack.c.bf16 %v282, %v281
  %v344 = vpack.c.bf16 %v284, %v283
  %v345 = vpack.c.bf16 %v286, %v285
  %v346 = vpack.c.bf16 %v288, %v287
  %v347 = vpack.c.bf16 %v290, %v289
  %v348 = vpack.c.bf16 %v292, %v291
  %v349 = vpack.c.bf16 %v294, %v293
  %v350 = vpack.c.bf16 %v296, %v295
  %v351 = vpack.c.bf16 %v298, %v297
  %v352 = vpack.c.bf16 %v300, %v299
  %v353 = vpack.c.bf16 %v302, %v301
  %v354 = vpack.c.bf16 %v304, %v303
  %v355 = vpack.c.bf16 %v306, %v305
  %v356 = vpack.c.bf16 %v308, %v307
  %v357 = vpack.c.bf16 %v310, %v309
  %v358 = vpack.c.bf16 %v312, %v311
  %v359 = vpack.c.bf16 %v314, %v313
  %v360 = vpack.c.bf16 %v316, %v315
  %v361 = vpack.c.bf16 %v318, %v317
  %v362 = vpack.c.bf16 %v320, %v319
  %v363 = vpack.c.bf16 %v322, %v321
  %v364 = vpack.c.bf16 %v324, %v323
  %v365 = vpack.c.bf16 %v326, %v325
  %v366 = vpack.c.bf16 %v328, %v327
  %v367 = vpack.c.bf16 %v330, %v329
  %v368 = vpack.c.bf16 %v332, %v331
  %v369 = vpack.c.bf16 %v334, %v333
  %v370 = vpack.c.bf16 %v336, %v335
  %v371 = vpack.c.bf16 %v338, %v337
  %v372 = vpack.c.bf16 %v340, %v339
  %v405 = vunpack.c.l.b16 %v341
  %v406 = vunpack.c.h.b16 %v341
  %v407 = vunpack.c.l.b16 %v342
  %v408 = vunpack.c.h.b16 %v342
  %v409 = vunpack.c.l.b16 %v343
  %v410 = vunpack.c.h.b16 %v343
  %v411 = vunpack.c.l.b16 %v344
  %v412 = vunpack.c.h.b16 %v344
  %v413 = vunpack.c.l.b16 %v345
  %v414 = vunpack.c.h.b16 %v345
  %v415 = vunpack.c.l.b16 %v346
  %v416 = vunpack.c.h.b16 %v346
  %v417 = vunpack.c.l.b16 %v347
  %v418 = vunpack.c.h.b16 %v347
  %v419 = vunpack.c.l.b16 %v348
  %v420 = vunpack.c.h.b16 %v348
  %v421 = vunpack.c.l.b16 %v349
  %v422 = vunpack.c.h.b16 %v349
  %v423 = vunpack.c.l.b16 %v350
  %v424 = vunpack.c.h.b16 %v350
  %v425 = vunpack.c.l.b16 %v351
  %v426 = vunpack.c.h.b16 %v351
  %v427 = vunpack.c.l.b16 %v352
  %v428 = vunpack.c.h.b16 %v352
  %v429 = vunpack.c.l.b16 %v353
  %v430 = vunpack.c.h.b16 %v353
  %v431 = vunpack.c.l.b16 %v354
  %v432 = vunpack.c.h.b16 %v354
  %v433 = vunpack.c.l.b16 %v355
  %v434 = vunpack.c.h.b16 %v355
  %v435 = vunpack.c.l.b16 %v356
  %v436 = vunpack.c.h.b16 %v356
  %v437 = vunpack.c.l.b16 %v357
  %v438 = vunpack.c.h.b16 %v357
  %v439 = vunpack.c.l.b16 %v358
  %v440 = vunpack.c.h.b16 %v358
  %v441 = vunpack.c.l.b16 %v359
  %v442 = vunpack.c.h.b16 %v359
  %v443 = vunpack.c.l.b16 %v360
  %v444 = vunpack.c.h.b16 %v360
  %v445 = vunpack.c.l.b16 %v361
  %v446 = vunpack.c.h.b16 %v361
  %v447 = vunpack.c.l.b16 %v362
  %v448 = vunpack.c.h.b16 %v362
  %v449 = vunpack.c.l.b16 %v363
  %v450 = vunpack.c.h.b16 %v363
  %v451 = vunpack.c.l.b16 %v364
  %v452 = vunpack.c.h.b16 %v364
  %v453 = vunpack.c.l.b16 %v365
  %v454 = vunpack.c.h.b16 %v365
  %v455 = vunpack.c.l.b16 %v366
  %v456 = vunpack.c.h.b16 %v366
  %v457 = vunpack.c.l.b16 %v367
  %v458 = vunpack.c.h.b16 %v367
  %v459 = vunpack.c.l.b16 %v368
  %v460 = vunpack.c.h.b16 %v368
  %v461 = vunpack.c.l.b16 %v369
  %v462 = vunpack.c.h.b16 %v369
  %v463 = vunpack.c.l.b16 %v370
  %v464 = vunpack.c.h.b16 %v370
  %v465 = vunpack.c.l.b16 %v371
  %v466 = vunpack.c.h.b16 %v371
  %v467 = vunpack.c.l.b16 %v372
  %v468 = vunpack.c.h.b16 %v372
  %v469 = vpack.c.b16 %v405, %v405
  %v470 = vpack.c.b16 %v406, %v406
  %v471 = vpack.c.b16 %v407, %v407
  %v472 = vpack.c.b16 %v408, %v408
  %v473 = vpack.c.b16 %v409, %v409
  %v474 = vpack.c.b16 %v410, %v410
  %v475 = vpack.c.b16 %v411, %v411
  %v476 = vpack.c.b16 %v412, %v412
  %v477 = vpack.c.b16 %v413, %v413
  %v478 = vpack.c.b16 %v414, %v414
  %v479 = vpack.c.b16 %v415, %v415
  %v480 = vpack.c.b16 %v416, %v416
  %v481 = vpack.c.b16 %v417, %v417
  %v482 = vpack.c.b16 %v418, %v418
  %v483 = vpack.c.b16 %v419, %v419
  %v484 = vpack.c.b16 %v420, %v420
  %v485 = vpack.c.b16 %v421, %v421
  %v486 = vpack.c.b16 %v422, %v422
  %v487 = vpack.c.b16 %v423, %v423
  %v488 = vpack.c.b16 %v424, %v424
  %v489 = vpack.c.b16 %v425, %v425
  %v490 = vpack.c.b16 %v426, %v426
  %v491 = vpack.c.b16 %v427, %v427
  %v492 = vpack.c.b16 %v428, %v428
  %v493 = vpack.c.b16 %v429, %v429
  %v494 = vpack.c.b16 %v430, %v430
  %v495 = vpack.c.b16 %v431, %v431
  %v496 = vpack.c.b16 %v432, %v432
  %v497 = vpack.c.b16 %v433, %v433
  %v498 = vpack.c.b16 %v434, %v434
  %v499 = vpack.c.b16 %v435, %v435
  %v500 = vpack.c.b16 %v436, %v436
  %v501 = vpack.c.b16 %v437, %v437
  %v502 = vpack.c.b16 %v438, %v438
  %v503 = vpack.c.b16 %v439, %v439
  %v504 = vpack.c.b16 %v440, %v440
  %v505 = vpack.c.b16 %v441, %v441
  %v506 = vpack.c.b16 %v442, %v442
  %v507 = vpack.c.b16 %v443, %v443
  %v508 = vpack.c.b16 %v444, %v444
  %v509 = vpack.c.b16 %v445, %v445
  %v510 = vpack.c.b16 %v446, %v446
  %v511 = vpack.c.b16 %v447, %v447
  %v512 = vpack.c.b16 %v448, %v448
  %v513 = vpack.c.b16 %v449, %v449
  %v514 = vpack.c.b16 %v450, %v450
  %v515 = vpack.c.b16 %v451, %v451
  %v516 = vpack.c.b16 %v452, %v452
  %v517 = vpack.c.b16 %v453, %v453
  %v518 = vpack.c.b16 %v454, %v454
  %v519 = vpack.c.b16 %v455, %v455
  %v520 = vpack.c.b16 %v456, %v456
  %v521 = vpack.c.b16 %v457, %v457
  %v522 = vpack.c.b16 %v458, %v458
  %v523 = vpack.c.b16 %v459, %v459
  %v524 = vpack.c.b16 %v460, %v460
  %v525 = vpack.c.b16 %v461, %v461
  %v526 = vpack.c.b16 %v462, %v462
  %v527 = vpack.c.b16 %v463, %v463
  %v528 = vpack.c.b16 %v464, %v464
  %v529 = vpack.c.b16 %v465, %v465
  %v530 = vpack.c.b16 %v466, %v466
  %v531 = vpack.c.b16 %v467, %v467
  %v532 = vpack.c.b16 %v468, %v468
  %597 = vst [vmem:[%s2] sm:$0xf] %v469
  %598 = vst [vmem:[%s2 + $0x4] sm:$0xf] %v470
  %599 = vst [vmem:[%s2 + $0x8] sm:$0xf] %v471
  %600 = vst [vmem:[%s2 + $0xc] sm:$0xf] %v472
  %601 = vst [vmem:[%s2 + $0x10] sm:$0xf] %v473
  %602 = vst [vmem:[%s2 + $0x14] sm:$0xf] %v474
  %603 = vst [vmem:[%s2 + $0x18] sm:$0xf] %v475
  %604 = vst [vmem:[%s2 + $0x1c] sm:$0xf] %v476
  %605 = vst [vmem:[%s2 + $0x20] sm:$0xf] %v477
  %606 = vst [vmem:[%s2 + $0x24] sm:$0xf] %v478
  %607 = vst [vmem:[%s2 + $0x28] sm:$0xf] %v479
  %608 = vst [vmem:[%s2 + $0x2c] sm:$0xf] %v480
  %609 = vst [vmem:[%s2 + $0x30] sm:$0xf] %v481
  %610 = vst [vmem:[%s2 + $0x34] sm:$0xf] %v482
  %611 = vst [vmem:[%s2 + $0x38] sm:$0xf] %v483
  %612 = vst [vmem:[%s2 + $0x3c] sm:$0xf] %v484
  %613 = vst [vmem:[%s2 + $0x40] sm:$0xf] %v485
  %614 = vst [vmem:[%s2 + $0x44] sm:$0xf] %v486
  %615 = vst [vmem:[%s2 + $0x48] sm:$0xf] %v487
  %616 = vst [vmem:[%s2 + $0x4c] sm:$0xf] %v488
  %617 = vst [vmem:[%s2 + $0x50] sm:$0xf] %v489
  %618 = vst [vmem:[%s2 + $0x54] sm:$0xf] %v490
  %619 = vst [vmem:[%s2 + $0x58] sm:$0xf] %v491
  %620 = vst [vmem:[%s2 + $0x5c] sm:$0xf] %v492
  %621 = vst [vmem:[%s2 + $0x60] sm:$0xf] %v493
  %622 = vst [vmem:[%s2 + $0x64] sm:$0xf] %v494
  %623 = vst [vmem:[%s2 + $0x68] sm:$0xf] %v495
  %624 = vst [vmem:[%s2 + $0x6c] sm:$0xf] %v496
  %625 = vst [vmem:[%s2 + $0x70] sm:$0xf] %v497
  %626 = vst [vmem:[%s2 + $0x74] sm:$0xf] %v498
  %627 = vst [vmem:[%s2 + $0x78] sm:$0xf] %v499
  %628 = vst [vmem:[%s2 + $0x7c] sm:$0xf] %v500
  %629 = vst [vmem:[%s2 + $0x80] sm:$0xf] %v501
  %630 = vst [vmem:[%s2 + $0x84] sm:$0xf] %v502
  %631 = vst [vmem:[%s2 + $0x88] sm:$0xf] %v503
  %632 = vst [vmem:[%s2 + $0x8c] sm:$0xf] %v504
  %633 = vst [vmem:[%s2 + $0x90] sm:$0xf] %v505
  %634 = vst [vmem:[%s2 + $0x94] sm:$0xf] %v506
  %635 = vst [vmem:[%s2 + $0x98] sm:$0xf] %v507
  %636 = vst [vmem:[%s2 + $0x9c] sm:$0xf] %v508
  %637 = vst [vmem:[%s2 + $0xa0] sm:$0xf] %v509
  %638 = vst [vmem:[%s2 + $0xa4] sm:$0xf] %v510
  %639 = vst [vmem:[%s2 + $0xa8] sm:$0xf] %v511
  %640 = vst [vmem:[%s2 + $0xac] sm:$0xf] %v512
  %641 = vst [vmem:[%s2 + $0xb0] sm:$0xf] %v513
  %642 = vst [vmem:[%s2 + $0xb4] sm:$0xf] %v514
  %643 = vst [vmem:[%s2 + $0xb8] sm:$0xf] %v515
  %644 = vst [vmem:[%s2 + $0xbc] sm:$0xf] %v516
  %645 = vst [vmem:[%s2 + $0xc0] sm:$0xf] %v517
  %646 = vst [vmem:[%s2 + $0xc4] sm:$0xf] %v518
  %647 = vst [vmem:[%s2 + $0xc8] sm:$0xf] %v519
  %648 = vst [vmem:[%s2 + $0xcc] sm:$0xf] %v520
  %649 = vst [vmem:[%s2 + $0xd0] sm:$0xf] %v521
  %650 = vst [vmem:[%s2 + $0xd4] sm:$0xf] %v522
  %651 = vst [vmem:[%s2 + $0xd8] sm:$0xf] %v523
  %652 = vst [vmem:[%s2 + $0xdc] sm:$0xf] %v524
  %653 = vst [vmem:[%s2 + $0xe0] sm:$0xf] %v525
  %654 = vst [vmem:[%s2 + $0xe4] sm:$0xf] %v526
  %655 = vst [vmem:[%s2 + $0xe8] sm:$0xf] %v527
  %656 = vst [vmem:[%s2 + $0xec] sm:$0xf] %v528
  %657 = vst [vmem:[%s2 + $0xf0] sm:$0xf] %v529
  %658 = vst [vmem:[%s2 + $0xf4] sm:$0xf] %v530
  %659 = vst [vmem:[%s2 + $0xf8] sm:$0xf] %v531
  %660 = vst [vmem:[%s2 + $0xfc] sm:$0xf] %v532
  // Predicated region
  $region10: #{bottleneck_forward.8} parent=0 // pred_check
    _
  $region11: #{bottleneck_forward.8} parent=0 // pred_check_branch
    %662 = sbr.rel (0) target = $region13
  $region12: #{bottleneck_forward.8} parent=0 // pred_region
    _
  $region13: #{bottleneck_forward.8} parent=0 // pred_fallthru
    _
  // Predicated region
  $region14: #{bottleneck_forward.8} parent=0 // pred_check
    _
  $region15: #{bottleneck_forward.8} parent=0 // pred_check_branch
    %664 = sbr.rel (0) target = $region17
  $region16: #{bottleneck_forward.8} parent=0 // pred_region
    _
  $region17: #{bottleneck_forward.8} parent=0 // pred_fallthru
    _

// kernel: bottleneck_forward.7
$region0: #{bottleneck_forward.7}
  #allocation0 [shape = 'u32[]', space=smem, size = 0x4, offset = 0x4, fixed_abs, tag = 'smem constant byte address 0x4 - core index']
  #allocation1 [shape = 'u32[144,128]{1,0:T(1,128)}', space=vmem, size = 0x12000, scoped, tag = 'internal scratch']
  #allocation2 [shape = 'f32[512,128]{1,0:T(8,128)}', space=vmem, size = 0x40000, scoped, tag = 'scratch operand']
  %s0 = inlined_call_operand.vmem [shape: bf16[512,128], index: 0, kind: input, shape index: {}]
  %s1 = inlined_call_operand.vmem [shape: bf16[128,128], index: 1, kind: input, shape index: {}]
  %s2 = inlined_call_operand.vmem [shape: bf16[512,128], index: 2, kind: output, shape index: {0}]
  %s3 = inlined_call_operand.vmem [shape: f32[1,2,128], index: 3, kind: output, shape index: {1}]
  %4 = xla_tuple %s2, %s3
  %s5 = sld [smem:[#allocation0]]
  $region34: #{bottleneck_forward.7} parent=0
    _
  %s7 = ssub.s32 1, %s5
  %s8 = scalar_select 0, %s7, %s5
  // Predicated region
  $region2: #{bottleneck_forward.7} parent=0 // pred_check
    _
  $region3: #{bottleneck_forward.7} parent=0 // pred_check_branch
    %10 = sbr.rel (0) target = $region5
  $region4: #{bottleneck_forward.7} parent=0 // pred_region
    _
  $region5: #{bottleneck_forward.7} parent=0 // pred_fallthru
    _
  // Predicated region
  $region6: #{bottleneck_forward.7} parent=0 // pred_check
    _
  $region7: #{bottleneck_forward.7} parent=0 // pred_check_branch
    %12 = sbr.rel (0) target = $region9
  $region8: #{bottleneck_forward.7} parent=0 // pred_region
    _
  $region9: #{bottleneck_forward.7} parent=0 // pred_fallthru
    _
  %p14 = scmp.eq.s32.totalorder 0, 0
  // Predicated region
  $region10: #{bottleneck_forward.7} parent=0 // pred_check
    %p15 = pneg %p14
  $region11: #{bottleneck_forward.7} parent=0 // pred_check_branch
    %17 = sbr.rel (%p15) target = $region13
  $region12: #{bottleneck_forward.7} parent=0 // pred_region
    %18 = vst [vmem:[#allocation2] sm:$0xff] 0.0
    %19 = vst [vmem:[#allocation2 + $0x8] sm:$0xff] 0.0
    %20 = vst [vmem:[#allocation2 + $0x10] sm:$0xff] 0.0
    %21 = vst [vmem:[#allocation2 + $0x18] sm:$0xff] 0.0
    %22 = vst [vmem:[#allocation2 + $0x20] sm:$0xff] 0.0
    %23 = vst [vmem:[#allocation2 + $0x28] sm:$0xff] 0.0
    %24 = vst [vmem:[#allocation2 + $0x30] sm:$0xff] 0.0
    %25 = vst [vmem:[#allocation2 + $0x38] sm:$0xff] 0.0
    %26 = vst [vmem:[#allocation2 + $0x40] sm:$0xff] 0.0
    %27 = vst [vmem:[#allocation2 + $0x48] sm:$0xff] 0.0
    %28 = vst [vmem:[#allocation2 + $0x50] sm:$0xff] 0.0
    %29 = vst [vmem:[#allocation2 + $0x58] sm:$0xff] 0.0
    %30 = vst [vmem:[#allocation2 + $0x60] sm:$0xff] 0.0
    %31 = vst [vmem:[#allocation2 + $0x68] sm:$0xff] 0.0
    %32 = vst [vmem:[#allocation2 + $0x70] sm:$0xff] 0.0
    %33 = vst [vmem:[#allocation2 + $0x78] sm:$0xff] 0.0
    %34 = vst [vmem:[#allocation2 + $0x80] sm:$0xff] 0.0
    %35 = vst [vmem:[#allocation2 + $0x88] sm:$0xff] 0.0
    %36 = vst [vmem:[#allocation2 + $0x90] sm:$0xff] 0.0
    %37 = vst [vmem:[#allocation2 + $0x98] sm:$0xff] 0.0
    %38 = vst [vmem:[#allocation2 + $0xa0] sm:$0xff] 0.0
    %39 = vst [vmem:[#allocation2 + $0xa8] sm:$0xff] 0.0
    %40 = vst [vmem:[#allocation2 + $0xb0] sm:$0xff] 0.0
    %41 = vst [vmem:[#allocation2 + $0xb8] sm:$0xff] 0.0
    %42 = vst [vmem:[#allocation2 + $0xc0] sm:$0xff] 0.0
    %43 = vst [vmem:[#allocation2 + $0xc8] sm:$0xff] 0.0
    %44 = vst [vmem:[#allocation2 + $0xd0] sm:$0xff] 0.0
    %45 = vst [vmem:[#allocation2 + $0xd8] sm:$0xff] 0.0
    %46 = vst [vmem:[#allocation2 + $0xe0] sm:$0xff] 0.0
    %47 = vst [vmem:[#allocation2 + $0xe8] sm:$0xff] 0.0
    %48 = vst [vmem:[#allocation2 + $0xf0] sm:$0xff] 0.0
    %49 = vst [vmem:[#allocation2 + $0xf8] sm:$0xff] 0.0
    %50 = vst [vmem:[#allocation2 + $0x100] sm:$0xff] 0.0
    %51 = vst [vmem:[#allocation2 + $0x108] sm:$0xff] 0.0
    %52 = vst [vmem:[#allocation2 + $0x110] sm:$0xff] 0.0
    %53 = vst [vmem:[#allocation2 + $0x118] sm:$0xff] 0.0
    %54 = vst [vmem:[#allocation2 + $0x120] sm:$0xff] 0.0
    %55 = vst [vmem:[#allocation2 + $0x128] sm:$0xff] 0.0
    %56 = vst [vmem:[#allocation2 + $0x130] sm:$0xff] 0.0
    %57 = vst [vmem:[#allocation2 + $0x138] sm:$0xff] 0.0
    %58 = vst [vmem:[#allocation2 + $0x140] sm:$0xff] 0.0
    %59 = vst [vmem:[#allocation2 + $0x148] sm:$0xff] 0.0
    %60 = vst [vmem:[#allocation2 + $0x150] sm:$0xff] 0.0
    %61 = vst [vmem:[#allocation2 + $0x158] sm:$0xff] 0.0
    %62 = vst [vmem:[#allocation2 + $0x160] sm:$0xff] 0.0
    %63 = vst [vmem:[#allocation2 + $0x168] sm:$0xff] 0.0
    %64 = vst [vmem:[#allocation2 + $0x170] sm:$0xff] 0.0
    %65 = vst [vmem:[#allocation2 + $0x178] sm:$0xff] 0.0
    %66 = vst [vmem:[#allocation2 + $0x180] sm:$0xff] 0.0
    %67 = vst [vmem:[#allocation2 + $0x188] sm:$0xff] 0.0
    %68 = vst [vmem:[#allocation2 + $0x190] sm:$0xff] 0.0
    %69 = vst [vmem:[#allocation2 + $0x198] sm:$0xff] 0.0
    %70 = vst [vmem:[#allocation2 + $0x1a0] sm:$0xff] 0.0
    %71 = vst [vmem:[#allocation2 + $0x1a8] sm:$0xff] 0.0
    %72 = vst [vmem:[#allocation2 + $0x1b0] sm:$0xff] 0.0
    %73 = vst [vmem:[#allocation2 + $0x1b8] sm:$0xff] 0.0
    %74 = vst [vmem:[#allocation2 + $0x1c0] sm:$0xff] 0.0
    %75 = vst [vmem:[#allocation2 + $0x1c8] sm:$0xff] 0.0
    %76 = vst [vmem:[#allocation2 + $0x1d0] sm:$0xff] 0.0
    %77 = vst [vmem:[#allocation2 + $0x1d8] sm:$0xff] 0.0
    %78 = vst [vmem:[#allocation2 + $0x1e0] sm:$0xff] 0.0
    %79 = vst [vmem:[#allocation2 + $0x1e8] sm:$0xff] 0.0
    %80 = vst [vmem:[#allocation2 + $0x1f0] sm:$0xff] 0.0
    %81 = vst [vmem:[#allocation2 + $0x1f8] sm:$0xff] 0.0
  $region13: #{bottleneck_forward.7} parent=0 // pred_fallthru
    _
  %v82 = vld [vmem:[#allocation2] sm:$0xff]
  %v83 = vld [vmem:[#allocation2 + $0x8] sm:$0xff]
  %v84 = vld [vmem:[#allocation2 + $0x10] sm:$0xff]
  %v85 = vld [vmem:[#allocation2 + $0x18] sm:$0xff]
  %v86 = vld [vmem:[#allocation2 + $0x20] sm:$0xff]
  %v87 = vld [vmem:[#allocation2 + $0x28] sm:$0xff]
  %v88 = vld [vmem:[#allocation2 + $0x30] sm:$0xff]
  %v89 = vld [vmem:[#allocation2 + $0x38] sm:$0xff]
  %v90 = vld [vmem:[#allocation2 + $0x40] sm:$0xff]
  %v91 = vld [vmem:[#allocation2 + $0x48] sm:$0xff]
  %v92 = vld [vmem:[#allocation2 + $0x50] sm:$0xff]
  %v93 = vld [vmem:[#allocation2 + $0x58] sm:$0xff]
  %v94 = vld [vmem:[#allocation2 + $0x60] sm:$0xff]
  %v95 = vld [vmem:[#allocation2 + $0x68] sm:$0xff]
  %v96 = vld [vmem:[#allocation2 + $0x70] sm:$0xff]
  %v97 = vld [vmem:[#allocation2 + $0x78] sm:$0xff]
  %v98 = vld [vmem:[#allocation2 + $0x80] sm:$0xff]
  %v99 = vld [vmem:[#allocation2 + $0x88] sm:$0xff]
  %v100 = vld [vmem:[#allocation2 + $0x90] sm:$0xff]
  %v101 = vld [vmem:[#allocation2 + $0x98] sm:$0xff]
  %v102 = vld [vmem:[#allocation2 + $0xa0] sm:$0xff]
  %v103 = vld [vmem:[#allocation2 + $0xa8] sm:$0xff]
  %v104 = vld [vmem:[#allocation2 + $0xb0] sm:$0xff]
  %v105 = vld [vmem:[#allocation2 + $0xb8] sm:$0xff]
  %v106 = vld [vmem:[#allocation2 + $0xc0] sm:$0xff]
  %v107 = vld [vmem:[#allocation2 + $0xc8] sm:$0xff]
  %v108 = vld [vmem:[#allocation2 + $0xd0] sm:$0xff]
  %v109 = vld [vmem:[#allocation2 + $0xd8] sm:$0xff]
  %v110 = vld [vmem:[#allocation2 + $0xe0] sm:$0xff]
  %v111 = vld [vmem:[#allocation2 + $0xe8] sm:$0xff]
  %v112 = vld [vmem:[#allocation2 + $0xf0] sm:$0xff]
  %v113 = vld [vmem:[#allocation2 + $0xf8] sm:$0xff]
  %v114 = vld [vmem:[#allocation2 + $0x100] sm:$0xff]
  %v115 = vld [vmem:[#allocation2 + $0x108] sm:$0xff]
  %v116 = vld [vmem:[#allocation2 + $0x110] sm:$0xff]
  %v117 = vld [vmem:[#allocation2 + $0x118] sm:$0xff]
  %v118 = vld [vmem:[#allocation2 + $0x120] sm:$0xff]
  %v119 = vld [vmem:[#allocation2 + $0x128] sm:$0xff]
  %v120 = vld [vmem:[#allocation2 + $0x130] sm:$0xff]
  %v121 = vld [vmem:[#allocation2 + $0x138] sm:$0xff]
  %v122 = vld [vmem:[#allocation2 + $0x140] sm:$0xff]
  %v123 = vld [vmem:[#allocation2 + $0x148] sm:$0xff]
  %v124 = vld [vmem:[#allocation2 + $0x150] sm:$0xff]
  %v125 = vld [vmem:[#allocation2 + $0x158] sm:$0xff]
  %v126 = vld [vmem:[#allocation2 + $0x160] sm:$0xff]
  %v127 = vld [vmem:[#allocation2 + $0x168] sm:$0xff]
  %v128 = vld [vmem:[#allocation2 + $0x170] sm:$0xff]
  %v129 = vld [vmem:[#allocation2 + $0x178] sm:$0xff]
  %v130 = vld [vmem:[#allocation2 + $0x180] sm:$0xff]
  %v131 = vld [vmem:[#allocation2 + $0x188] sm:$0xff]
  %v132 = vld [vmem:[#allocation2 + $0x190] sm:$0xff]
  %v133 = vld [vmem:[#allocation2 + $0x198] sm:$0xff]
  %v134 = vld [vmem:[#allocation2 + $0x1a0] sm:$0xff]
  %v135 = vld [vmem:[#allocation2 + $0x1a8] sm:$0xff]
  %v136 = vld [vmem:[#allocation2 + $0x1b0] sm:$0xff]
  %v137 = vld [vmem:[#allocation2 + $0x1b8] sm:$0xff]
  %v138 = vld [vmem:[#allocation2 + $0x1c0] sm:$0xff]
  %v139 = vld [vmem:[#allocation2 + $0x1c8] sm:$0xff]
  %v140 = vld [vmem:[#allocation2 + $0x1d0] sm:$0xff]
  %v141 = vld [vmem:[#allocation2 + $0x1d8] sm:$0xff]
  %v142 = vld [vmem:[#allocation2 + $0x1e0] sm:$0xff]
  %v143 = vld [vmem:[#allocation2 + $0x1e8] sm:$0xff]
  %v144 = vld [vmem:[#allocation2 + $0x1f0] sm:$0xff]
  %v145 = vld [vmem:[#allocation2 + $0x1f8] sm:$0xff]
  %v146 = vld [vmem:[%s0] sm:$0xf]
  %v147 = vld [vmem:[%s0 + $0x4] sm:$0xf]
  %v148 = vld [vmem:[%s0 + $0x8] sm:$0xf]
  %v149 = vld [vmem:[%s0 + $0xc] sm:$0xf]
  %v150 = vld [vmem:[%s0 + $0x10] sm:$0xf]
  %v151 = vld [vmem:[%s0 + $0x14] sm:$0xf]
  %v152 = vld [vmem:[%s0 + $0x18] sm:$0xf]
  %v153 = vld [vmem:[%s0 + $0x1c] sm:$0xf]
  %v154 = vld [vmem:[%s0 + $0x20] sm:$0xf]
  %v155 = vld [vmem:[%s0 + $0x24] sm:$0xf]
  %v156 = vld [vmem:[%s0 + $0x28] sm:$0xf]
  %v157 = vld [vmem:[%s0 + $0x2c] sm:$0xf]
  %v158 = vld [vmem:[%s0 + $0x30] sm:$0xf]
  %v159 = vld [vmem:[%s0 + $0x34] sm:$0xf]
  %v160 = vld [vmem:[%s0 + $0x38] sm:$0xf]
  %v161 = vld [vmem:[%s0 + $0x3c] sm:$0xf]
  %v162 = vld [vmem:[%s0 + $0x40] sm:$0xf]
  %v163 = vld [vmem:[%s0 + $0x44] sm:$0xf]
  %v164 = vld [vmem:[%s0 + $0x48] sm:$0xf]
  %v165 = vld [vmem:[%s0 + $0x4c] sm:$0xf]
  %v166 = vld [vmem:[%s0 + $0x50] sm:$0xf]
  %v167 = vld [vmem:[%s0 + $0x54] sm:$0xf]
  %v168 = vld [vmem:[%s0 + $0x58] sm:$0xf]
  %v169 = vld [vmem:[%s0 + $0x5c] sm:$0xf]
  %v170 = vld [vmem:[%s0 + $0x60] sm:$0xf]
  %v171 = vld [vmem:[%s0 + $0x64] sm:$0xf]
  %v172 = vld [vmem:[%s0 + $0x68] sm:$0xf]
  %v173 = vld [vmem:[%s0 + $0x6c] sm:$0xf]
  %v174 = vld [vmem:[%s0 + $0x70] sm:$0xf]
  %v175 = vld [vmem:[%s0 + $0x74] sm:$0xf]
  %v176 = vld [vmem:[%s0 + $0x78] sm:$0xf]
  %v177 = vld [vmem:[%s0 + $0x7c] sm:$0xf]
  %v178 = vld [vmem:[%s0 + $0x80] sm:$0xf]
  %v179 = vld [vmem:[%s0 + $0x84] sm:$0xf]
  %v180 = vld [vmem:[%s0 + $0x88] sm:$0xf]
  %v181 = vld [vmem:[%s0 + $0x8c] sm:$0xf]
  %v182 = vld [vmem:[%s0 + $0x90] sm:$0xf]
  %v183 = vld [vmem:[%s0 + $0x94] sm:$0xf]
  %v184 = vld [vmem:[%s0 + $0x98] sm:$0xf]
  %v185 = vld [vmem:[%s0 + $0x9c] sm:$0xf]
  %v186 = vld [vmem:[%s0 + $0xa0] sm:$0xf]
  %v187 = vld [vmem:[%s0 + $0xa4] sm:$0xf]
  %v188 = vld [vmem:[%s0 + $0xa8] sm:$0xf]
  %v189 = vld [vmem:[%s0 + $0xac] sm:$0xf]
  %v190 = vld [vmem:[%s0 + $0xb0] sm:$0xf]
  %v191 = vld [vmem:[%s0 + $0xb4] sm:$0xf]
  %v192 = vld [vmem:[%s0 + $0xb8] sm:$0xf]
  %v193 = vld [vmem:[%s0 + $0xbc] sm:$0xf]
  %v194 = vld [vmem:[%s0 + $0xc0] sm:$0xf]
  %v195 = vld [vmem:[%s0 + $0xc4] sm:$0xf]
  %v196 = vld [vmem:[%s0 + $0xc8] sm:$0xf]
  %v197 = vld [vmem:[%s0 + $0xcc] sm:$0xf]
  %v198 = vld [vmem:[%s0 + $0xd0] sm:$0xf]
  %v199 = vld [vmem:[%s0 + $0xd4] sm:$0xf]
  %v200 = vld [vmem:[%s0 + $0xd8] sm:$0xf]
  %v201 = vld [vmem:[%s0 + $0xdc] sm:$0xf]
  %v202 = vld [vmem:[%s0 + $0xe0] sm:$0xf]
  %v203 = vld [vmem:[%s0 + $0xe4] sm:$0xf]
  %v204 = vld [vmem:[%s0 + $0xe8] sm:$0xf]
  %v205 = vld [vmem:[%s0 + $0xec] sm:$0xf]
  %v206 = vld [vmem:[%s0 + $0xf0] sm:$0xf]
  %v207 = vld [vmem:[%s0 + $0xf4] sm:$0xf]
  %v208 = vld [vmem:[%s0 + $0xf8] sm:$0xf]
  %v209 = vld [vmem:[%s0 + $0xfc] sm:$0xf]
  %v210 = vld [vmem:[%s1] sm:$0xf]
  %v211 = vld [vmem:[%s1 + $0x4] sm:$0xf]
  %v212 = vld [vmem:[%s1 + $0x8] sm:$0xf]
  %v213 = vld [vmem:[%s1 + $0xc] sm:$0xf]
  %v214 = vld [vmem:[%s1 + $0x10] sm:$0xf]
  %v215 = vld [vmem:[%s1 + $0x14] sm:$0xf]
  %v216 = vld [vmem:[%s1 + $0x18] sm:$0xf]
  %v217 = vld [vmem:[%s1 + $0x1c] sm:$0xf]
  %v218 = vld [vmem:[%s1 + $0x20] sm:$0xf]
  %v219 = vld [vmem:[%s1 + $0x24] sm:$0xf]
  %v220 = vld [vmem:[%s1 + $0x28] sm:$0xf]
  %v221 = vld [vmem:[%s1 + $0x2c] sm:$0xf]
  %v222 = vld [vmem:[%s1 + $0x30] sm:$0xf]
  %v223 = vld [vmem:[%s1 + $0x34] sm:$0xf]
  %v224 = vld [vmem:[%s1 + $0x38] sm:$0xf]
  %v225 = vld [vmem:[%s1 + $0x3c] sm:$0xf]
  %v290 = vunpack.c.l.b16 %v146
  %v291 = vunpack.c.l.b16 %v147
  %v292 = vunpack.c.l.b16 %v148
  %v293 = vunpack.c.l.b16 %v149
  %v294 = vunpack.c.l.b16 %v150
  %v295 = vunpack.c.l.b16 %v151
  %v296 = vunpack.c.l.b16 %v152
  %v297 = vunpack.c.l.b16 %v153
  %v298 = vunpack.c.l.b16 %v154
  %v299 = vunpack.c.l.b16 %v155
  %v300 = vunpack.c.l.b16 %v156
  %v301 = vunpack.c.l.b16 %v157
  %v302 = vunpack.c.l.b16 %v158
  %v303 = vunpack.c.l.b16 %v159
  %v304 = vunpack.c.l.b16 %v160
  %v305 = vunpack.c.l.b16 %v161
  %v306 = vunpack.c.l.b16 %v162
  %v307 = vunpack.c.l.b16 %v163
  %v308 = vunpack.c.l.b16 %v164
  %v309 = vunpack.c.l.b16 %v165
  %v310 = vunpack.c.l.b16 %v166
  %v311 = vunpack.c.l.b16 %v167
  %v312 = vunpack.c.l.b16 %v168
  %v313 = vunpack.c.l.b16 %v169
  %v314 = vunpack.c.l.b16 %v170
  %v315 = vunpack.c.l.b16 %v171
  %v316 = vunpack.c.l.b16 %v172
  %v317 = vunpack.c.l.b16 %v173
  %v318 = vunpack.c.l.b16 %v174
  %v319 = vunpack.c.l.b16 %v175
  %v320 = vunpack.c.l.b16 %v176
  %v321 = vunpack.c.l.b16 %v177
  %v322 = vunpack.c.l.b16 %v178
  %v323 = vunpack.c.l.b16 %v179
  %v324 = vunpack.c.l.b16 %v180
  %v325 = vunpack.c.l.b16 %v181
  %v326 = vunpack.c.l.b16 %v182
  %v327 = vunpack.c.l.b16 %v183
  %v328 = vunpack.c.l.b16 %v184
  %v329 = vunpack.c.l.b16 %v185
  %v330 = vunpack.c.l.b16 %v186
  %v331 = vunpack.c.l.b16 %v187
  %v332 = vunpack.c.l.b16 %v188
  %v333 = vunpack.c.l.b16 %v189
  %v334 = vunpack.c.l.b16 %v190
  %v335 = vunpack.c.l.b16 %v191
  %v336 = vunpack.c.l.b16 %v192
  %v337 = vunpack.c.l.b16 %v193
  %v338 = vunpack.c.l.b16 %v194
  %v339 = vunpack.c.l.b16 %v195
  %v340 = vunpack.c.l.b16 %v196
  %v341 = vunpack.c.l.b16 %v197
  %v342 = vunpack.c.l.b16 %v198
  %v343 = vunpack.c.l.b16 %v199
  %v344 = vunpack.c.l.b16 %v200
  %v345 = vunpack.c.l.b16 %v201
  %v346 = vunpack.c.l.b16 %v202
  %v347 = vunpack.c.l.b16 %v203
  %v348 = vunpack.c.l.b16 %v204
  %v349 = vunpack.c.l.b16 %v205
  %v350 = vunpack.c.l.b16 %v206
  %v351 = vunpack.c.l.b16 %v207
  %v352 = vunpack.c.l.b16 %v208
  %v353 = vunpack.c.l.b16 %v209
  %v354 = vpack.c.b16 %v291, %v290
  %v355 = vpack.c.b16 %v293, %v292
  %v356 = vpack.c.b16 %v295, %v294
  %v357 = vpack.c.b16 %v297, %v296
  %v358 = vpack.c.b16 %v299, %v298
  %v359 = vpack.c.b16 %v301, %v300
  %v360 = vpack.c.b16 %v303, %v302
  %v361 = vpack.c.b16 %v305, %v304
  %v362 = vpack.c.b16 %v307, %v306
  %v363 = vpack.c.b16 %v309, %v308
  %v364 = vpack.c.b16 %v311, %v310
  %v365 = vpack.c.b16 %v313, %v312
  %v366 = vpack.c.b16 %v315, %v314
  %v367 = vpack.c.b16 %v317, %v316
  %v368 = vpack.c.b16 %v319, %v318
  %v369 = vpack.c.b16 %v321, %v320
  %v370 = vpack.c.b16 %v323, %v322
  %v371 = vpack.c.b16 %v325, %v324
  %v372 = vpack.c.b16 %v327, %v326
  %v373 = vpack.c.b16 %v329, %v328
  %v374 = vpack.c.b16 %v331, %v330
  %v375 = vpack.c.b16 %v333, %v332
  %v376 = vpack.c.b16 %v335, %v334
  %v377 = vpack.c.b16 %v337, %v336
  %v378 = vpack.c.b16 %v339, %v338
  %v379 = vpack.c.b16 %v341, %v340
  %v380 = vpack.c.b16 %v343, %v342
  %v381 = vpack.c.b16 %v345, %v344
  %v382 = vpack.c.b16 %v347, %v346
  %v383 = vpack.c.b16 %v349, %v348
  %v384 = vpack.c.b16 %v351, %v350
  %v385 = vpack.c.b16 %v353, %v352
  %v434 = vunpack.c.l.b16 %v210
  %v435 = vunpack.c.l.b16 %v211
  %v436 = vunpack.c.l.b16 %v212
  %v437 = vunpack.c.l.b16 %v213
  %v438 = vunpack.c.l.b16 %v214
  %v439 = vunpack.c.l.b16 %v215
  %v440 = vunpack.c.l.b16 %v216
  %v441 = vunpack.c.l.b16 %v217
  %v442 = vunpack.c.l.b16 %v218
  %v443 = vunpack.c.l.b16 %v219
  %v444 = vunpack.c.l.b16 %v220
  %v445 = vunpack.c.l.b16 %v221
  %v446 = vunpack.c.l.b16 %v222
  %v447 = vunpack.c.l.b16 %v223
  %v448 = vunpack.c.l.b16 %v224
  %v449 = vunpack.c.l.b16 %v225
  %v450 = vpack.c.b16 %v435, %v434
  %v451 = vpack.c.b16 %v437, %v436
  %v452 = vpack.c.b16 %v439, %v438
  %v453 = vpack.c.b16 %v441, %v440
  %v454 = vpack.c.b16 %v443, %v442
  %v455 = vpack.c.b16 %v445, %v444
  %v456 = vpack.c.b16 %v447, %v446
  %v457 = vpack.c.b16 %v449, %v448
  %466 = vmatprep.subr.bf16.mxu0 0
  %467 = vmatpush1.bf16.msra.mxu0 %v450
  %468 = vmatprep.subr.bf16.mxu0 0
  %469 = vmatpush1.bf16.msra.mxu0 %v451
  %470 = vmatprep.subr.bf16.mxu0 0
  %471 = vmatpush1.bf16.msra.mxu0 %v452
  %472 = vmatprep.subr.bf16.mxu0 0
  %473 = vmatpush1.bf16.msra.mxu0 %v453
  %474 = vmatprep.subr.bf16.mxu0 0
  %475 = vmatpush1.bf16.msra.mxu0 %v454
  %476 = vmatprep.subr.bf16.mxu0 0
  %477 = vmatpush1.bf16.msra.mxu0 %v455
  %478 = vmatprep.subr.bf16.mxu0 0
  %479 = vmatpush1.bf16.msra.mxu0 %v456
  %480 = vmatprep.subr.bf16.mxu0 0
  %481 = vmatpush1.bf16.msra.mxu0 %v457
  %482 = vmatprep.subr.bf16.mxu0 0
  %483 = vmatpush1.bf16.msra.mxu0 0
  %484 = vmatprep.subr.bf16.mxu0 0
  %485 = vmatpush1.bf16.msra.mxu0 0
  %486 = vmatprep.subr.bf16.mxu0 0
  %487 = vmatpush1.bf16.msra.mxu0 0
  %488 = vmatprep.subr.bf16.mxu0 0
  %489 = vmatpush1.bf16.msra.mxu0 0
  %490 = vmatprep.subr.bf16.mxu0 0
  %491 = vmatpush1.bf16.msra.mxu0 0
  %492 = vmatprep.subr.bf16.mxu0 0
  %493 = vmatpush1.bf16.msra.mxu0 0
  %494 = vmatprep.subr.bf16.mxu0 0
  %495 = vmatpush1.bf16.msra.mxu0 0
  %496 = vmatprep.subr.bf16.mxu0 0
  %497 = vmatpush1.bf16.msra.mxu0 0
  %498 = vmatprep.mubr.bf16.mxu0 0
  %499 = vmatmul.mubr.bf16.gmra.mrb[0].mxu0 %v354
  %v500 = vpop.f32.mrb[0].mxu0
  %v501 = vadd.f32 0.0, %v500
  %v502 = vpop.f32.mrb[0].mxu0
  %v503 = vpop.f32.mrb[0].mxu0
  %v504 = vadd.f32 0.0, %v503
  %v505 = vpop.f32.mrb[0].mxu0
  %506 = vmatprep.mubr.bf16.mxu0 0
  %507 = vmatmul.mubr.bf16.gmra.mrb[0].mxu0 %v355
  %v508 = vpop.f32.mrb[0].mxu0
  %v509 = vadd.f32 0.0, %v508
  %v510 = vpop.f32.mrb[0].mxu0
  %v511 = vpop.f32.mrb[0].mxu0
  %v512 = vadd.f32 0.0, %v511
  %v513 = vpop.f32.mrb[0].mxu0
  %514 = vmatprep.mubr.bf16.mxu0 0
  %515 = vmatmul.mubr.bf16.gmra.mrb[0].mxu0 %v356
  %v516 = vpop.f32.mrb[0].mxu0
  %v517 = vadd.f32 0.0, %v516
  %v518 = vpop.f32.mrb[0].mxu0
  %v519 = vpop.f32.mrb[0].mxu0
  %v520 = vadd.f32 0.0, %v519
  %v521 = vpop.f32.mrb[0].mxu0
  %522 = vmatprep.mubr.bf16.mxu0 0
  %523 = vmatmul.mubr.bf16.gmra.mrb[0].mxu0 %v357
  %v524 = vpop.f32.mrb[0].mxu0
  %v525 = vadd.f32 0.0, %v524
  %v526 = vpop.f32.mrb[0].mxu0
  %v527 = vpop.f32.mrb[0].mxu0
  %v528 = vadd.f32 0.0, %v527
  %v529 = vpop.f32.mrb[0].mxu0
  %530 = vmatprep.mubr.bf16.mxu0 0
  %531 = vmatmul.mubr.bf16.gmra.mrb[0].mxu0 %v358
  %v532 = vpop.f32.mrb[0].mxu0
  %v533 = vadd.f32 0.0, %v532
  %v534 = vpop.f32.mrb[0].mxu0
  %v535 = vpop.f32.mrb[0].mxu0
  %v536 = vadd.f32 0.0, %v535
  %v537 = vpop.f32.mrb[0].mxu0
  %538 = vmatprep.mubr.bf16.mxu0 0
  %539 = vmatmul.mubr.bf16.gmra.mrb[0].mxu0 %v359
  %v540 = vpop.f32.mrb[0].mxu0
  %v541 = vadd.f32 0.0, %v540
  %v542 = vpop.f32.mrb[0].mxu0
  %v543 = vpop.f32.mrb[0].mxu0
  %v544 = vadd.f32 0.0, %v543
  %v545 = vpop.f32.mrb[0].mxu0
  %546 = vmatprep.mubr.bf16.mxu0 0
  %547 = vmatmul.mubr.bf16.gmra.mrb[0].mxu0 %v360
  %v548 = vpop.f32.mrb[0].mxu0
  %v549 = vadd.f32 0.0, %v548
  %v550 = vpop.f32.mrb[0].mxu0
  %v551 = vpop.f32.mrb[0].mxu0
  %v552 = vadd.f32 0.0, %v551
  %v553 = vpop.f32.mrb[0].mxu0
  %554 = vmatprep.mubr.bf16.mxu0 0
  %555 = vmatmul.mubr.bf16.gmra.mrb[0].mxu0 %v361
  %v556 = vpop.f32.mrb[0].mxu0
  %v557 = vadd.f32 0.0, %v556
  %v558 = vpop.f32.mrb[0].mxu0
  %v559 = vpop.f32.mrb[0].mxu0
  %v560 = vadd.f32 0.0, %v559
  %v561 = vpop.f32.mrb[0].mxu0
  %562 = vmatprep.mubr.bf16.mxu0 0
  %563 = vmatmul.mubr.bf16.gmra.mrb[0].mxu0 %v362
  %v564 = vpop.f32.mrb[0].mxu0
  %v565 = vadd.f32 0.0, %v564
  %v566 = vpop.f32.mrb[0].mxu0
  %v567 = vpop.f32.mrb[0].mxu0
  %v568 = vadd.f32 0.0, %v567
  %v569 = vpop.f32.mrb[0].mxu0
  %570 = vmatprep.mubr.bf16.mxu0 0
  %571 = vmatmul.mubr.bf16.gmra.mrb[0].mxu0 %v363
  %v572 = vpop.f32.mrb[0].mxu0
  %v573 = vadd.f32 0.0, %v572
  %v574 = vpop.f32.mrb[0].mxu0
  %v575 = vpop.f32.mrb[0].mxu0
  %v576 = vadd.f32 0.0, %v575
  %v577 = vpop.f32.mrb[0].mxu0
  %578 = vmatprep.mubr.bf16.mxu0 0
  %579 = vmatmul.mubr.bf16.gmra.mrb[0].mxu0 %v364
  %v580 = vpop.f32.mrb[0].mxu0
  %v581 = vadd.f32 0.0, %v580
  %v582 = vpop.f32.mrb[0].mxu0
  %v583 = vpop.f32.mrb[0].mxu0
  %v584 = vadd.f32 0.0, %v583
  %v585 = vpop.f32.mrb[0].mxu0
  %586 = vmatprep.mubr.bf16.mxu0 0
  %587 = vmatmul.mubr.bf16.gmra.mrb[0].mxu0 %v365
  %v588 = vpop.f32.mrb[0].mxu0
  %v589 = vadd.f32 0.0, %v588
  %v590 = vpop.f32.mrb[0].mxu0
  %v591 = vpop.f32.mrb[0].mxu0
  %v592 = vadd.f32 0.0, %v591
  %v593 = vpop.f32.mrb[0].mxu0
  %594 = vmatprep.mubr.bf16.mxu0 0
  %595 = vmatmul.mubr.bf16.gmra.mrb[0].mxu0 %v366
  %v596 = vpop.f32.mrb[0].mxu0
  %v597 = vadd.f32 0.0, %v596
  %v598 = vpop.f32.mrb[0].mxu0
  %v599 = vpop.f32.mrb[0].mxu0
  %v600 = vadd.f32 0.0, %v599
  %v601 = vpop.f32.mrb[0].mxu0
  %602 = vmatprep.mubr.bf16.mxu0 0
  %603 = vmatmul.mubr.bf16.gmra.mrb[0].mxu0 %v367
  %v604 = vpop.f32.mrb[0].mxu0
  %v605 = vadd.f32 0.0, %v604
  %v606 = vpop.f32.mrb[0].mxu0
  %v607 = vpop.f32.mrb[0].mxu0
  %v608 = vadd.f32 0.0, %v607
  %v609 = vpop.f32.mrb[0].mxu0
  %610 = vmatprep.mubr.bf16.mxu0 0
  %611 = vmatmul.mubr.bf16.gmra.mrb[0].mxu0 %v368
  %v612 = vpop.f32.mrb[0].mxu0
  %v613 = vadd.f32 0.0, %v612
  %v614 = vpop.f32.mrb[0].mxu0
  %v615 = vpop.f32.mrb[0].mxu0
  %v616 = vadd.f32 0.0, %v615
  %v617 = vpop.f32.mrb[0].mxu0
  %618 = vmatprep.mubr.bf16.mxu0 0
  %619 = vmatmul.mubr.bf16.gmra.mrb[0].mxu0 %v369
  %v620 = vpop.f32.mrb[0].mxu0
  %v621 = vadd.f32 0.0, %v620
  %v622 = vpop.f32.mrb[0].mxu0
  %v623 = vpop.f32.mrb[0].mxu0
  %v624 = vadd.f32 0.0, %v623
  %v625 = vpop.f32.mrb[0].mxu0
  %626 = vmatprep.mubr.bf16.mxu0 0
  %627 = vmatmul.mubr.bf16.gmra.mrb[0].mxu0 %v370
  %v628 = vpop.f32.mrb[0].mxu0
  %v629 = vadd.f32 0.0, %v628
  %v630 = vpop.f32.mrb[0].mxu0
  %v631 = vpop.f32.mrb[0].mxu0
  %v632 = vadd.f32 0.0, %v631
  %v633 = vpop.f32.mrb[0].mxu0
  %634 = vmatprep.mubr.bf16.mxu0 0
  %635 = vmatmul.mubr.bf16.gmra.mrb[0].mxu0 %v371
  %v636 = vpop.f32.mrb[0].mxu0
  %v637 = vadd.f32 0.0, %v636
  %v638 = vpop.f32.mrb[0].mxu0
  %v639 = vpop.f32.mrb[0].mxu0
  %v640 = vadd.f32 0.0, %v639
  %v641 = vpop.f32.mrb[0].mxu0
  %642 = vmatprep.mubr.bf16.mxu0 0
  %643 = vmatmul.mubr.bf16.gmra.mrb[0].mxu0 %v372
  %v644 = vpop.f32.mrb[0].mxu0
  %v645 = vadd.f32 0.0, %v644
  %v646 = vpop.f32.mrb[0].mxu0
  %v647 = vpop.f32.mrb[0].mxu0
  %v648 = vadd.f32 0.0, %v647
  %v649 = vpop.f32.mrb[0].mxu0
  %650 = vmatprep.mubr.bf16.mxu0 0
  %651 = vmatmul.mubr.bf16.gmra.mrb[0].mxu0 %v373
  %v652 = vpop.f32.mrb[0].mxu0
  %v653 = vadd.f32 0.0, %v652
  %v654 = vpop.f32.mrb[0].mxu0
  %v655 = vpop.f32.mrb[0].mxu0
  %v656 = vadd.f32 0.0, %v655
  %v657 = vpop.f32.mrb[0].mxu0
  %658 = vmatprep.mubr.bf16.mxu0 0
  %659 = vmatmul.mubr.bf16.gmra.mrb[0].mxu0 %v374
  %v660 = vpop.f32.mrb[0].mxu0
  %v661 = vadd.f32 0.0, %v660
  %v662 = vpop.f32.mrb[0].mxu0
  %v663 = vpop.f32.mrb[0].mxu0
  %v664 = vadd.f32 0.0, %v663
  %v665 = vpop.f32.mrb[0].mxu0
  %666 = vmatprep.mubr.bf16.mxu0 0
  %667 = vmatmul.mubr.bf16.gmra.mrb[0].mxu0 %v375
  %v668 = vpop.f32.mrb[0].mxu0
  %v669 = vadd.f32 0.0, %v668
  %v670 = vpop.f32.mrb[0].mxu0
  %v671 = vpop.f32.mrb[0].mxu0
  %v672 = vadd.f32 0.0, %v671
  %v673 = vpop.f32.mrb[0].mxu0
  %674 = vmatprep.mubr.bf16.mxu0 0
  %675 = vmatmul.mubr.bf16.gmra.mrb[0].mxu0 %v376
  %v676 = vpop.f32.mrb[0].mxu0
  %v677 = vadd.f32 0.0, %v676
  %v678 = vpop.f32.mrb[0].mxu0
  %v679 = vpop.f32.mrb[0].mxu0
  %v680 = vadd.f32 0.0, %v679
  %v681 = vpop.f32.mrb[0].mxu0
  %682 = vmatprep.mubr.bf16.mxu0 0
  %683 = vmatmul.mubr.bf16.gmra.mrb[0].mxu0 %v377
  %v684 = vpop.f32.mrb[0].mxu0
  %v685 = vadd.f32 0.0, %v684
  %v686 = vpop.f32.mrb[0].mxu0
  %v687 = vpop.f32.mrb[0].mxu0
  %v688 = vadd.f32 0.0, %v687
  %v689 = vpop.f32.mrb[0].mxu0
  %690 = vmatprep.mubr.bf16.mxu0 0
  %691 = vmatmul.mubr.bf16.gmra.mrb[0].mxu0 %v378
  %v692 = vpop.f32.mrb[0].mxu0
  %v693 = vadd.f32 0.0, %v692
  %v694 = vpop.f32.mrb[0].mxu0
  %v695 = vpop.f32.mrb[0].mxu0
  %v696 = vadd.f32 0.0, %v695
  %v697 = vpop.f32.mrb[0].mxu0
  %698 = vmatprep.mubr.bf16.mxu0 0
  %699 = vmatmul.mubr.bf16.gmra.mrb[0].mxu0 %v379
  %v700 = vpop.f32.mrb[0].mxu0
  %v701 = vadd.f32 0.0, %v700
  %v702 = vpop.f32.mrb[0].mxu0
  %v703 = vpop.f32.mrb[0].mxu0
  %v704 = vadd.f32 0.0, %v703
  %v705 = vpop.f32.mrb[0].mxu0
  %706 = vmatprep.mubr.bf16.mxu0 0
  %707 = vmatmul.mubr.bf16.gmra.mrb[0].mxu0 %v380
  %v708 = vpop.f32.mrb[0].mxu0
  %v709 = vadd.f32 0.0, %v708
  %v710 = vpop.f32.mrb[0].mxu0
  %v711 = vpop.f32.mrb[0].mxu0
  %v712 = vadd.f32 0.0, %v711
  %v713 = vpop.f32.mrb[0].mxu0
  %714 = vmatprep.mubr.bf16.mxu0 0
  %715 = vmatmul.mubr.bf16.gmra.mrb[0].mxu0 %v381
  %v716 = vpop.f32.mrb[0].mxu0
  %v717 = vadd.f32 0.0, %v716
  %v718 = vpop.f32.mrb[0].mxu0
  %v719 = vpop.f32.mrb[0].mxu0
  %v720 = vadd.f32 0.0, %v719
  %v721 = vpop.f32.mrb[0].mxu0
  %722 = vmatprep.mubr.bf16.mxu0 0
  %723 = vmatmul.mubr.bf16.gmra.mrb[0].mxu0 %v382
  %v724 = vpop.f32.mrb[0].mxu0
  %v725 = vadd.f32 0.0, %v724
  %v726 = vpop.f32.mrb[0].mxu0
  %v727 = vpop.f32.mrb[0].mxu0
  %v728 = vadd.f32 0.0, %v727
  %v729 = vpop.f32.mrb[0].mxu0
  %730 = vmatprep.mubr.bf16.mxu0 0
  %731 = vmatmul.mubr.bf16.gmra.mrb[0].mxu0 %v383
  %v732 = vpop.f32.mrb[0].mxu0
  %v733 = vadd.f32 0.0, %v732
  %v734 = vpop.f32.mrb[0].mxu0
  %v735 = vpop.f32.mrb[0].mxu0
  %v736 = vadd.f32 0.0, %v735
  %v737 = vpop.f32.mrb[0].mxu0
  %738 = vmatprep.mubr.bf16.mxu0 0
  %739 = vmatmul.mubr.bf16.gmra.mrb[0].mxu0 %v384
  %v740 = vpop.f32.mrb[0].mxu0
  %v741 = vadd.f32 0.0, %v740
  %v742 = vpop.f32.mrb[0].mxu0
  %v743 = vpop.f32.mrb[0].mxu0
  %v744 = vadd.f32 0.0, %v743
  %v745 = vpop.f32.mrb[0].mxu0
  %746 = vmatprep.mubr.bf16.mxu0 0
  %747 = vmatmul.mubr.bf16.gmra.mrb[0].mxu0 %v385
  %v748 = vpop.f32.mrb[0].mxu0
  %v749 = vadd.f32 0.0, %v748
  %v750 = vpop.f32.mrb[0].mxu0
  %v751 = vpop.f32.mrb[0].mxu0
  %v752 = vadd.f32 0.0, %v751
  %v753 = vpop.f32.mrb[0].mxu0
  %754 = vdwg.mxu0
  %v755 = vadd.f32 %v82, %v501
  %v756 = vadd.f32 %v83, %v504
  %v757 = vadd.f32 %v84, %v509
  %v758 = vadd.f32 %v85, %v512
  %v759 = vadd.f32 %v86, %v517
  %v760 = vadd.f32 %v87, %v520
  %v761 = vadd.f32 %v88, %v525
  %v762 = vadd.f32 %v89, %v528
  %v763 = vadd.f32 %v90, %v533
  %v764 = vadd.f32 %v91, %v536
  %v765 = vadd.f32 %v92, %v541
  %v766 = vadd.f32 %v93, %v544
  %v767 = vadd.f32 %v94, %v549
  %v768 = vadd.f32 %v95, %v552
  %v769 = vadd.f32 %v96, %v557
  %v770 = vadd.f32 %v97, %v560
  %v771 = vadd.f32 %v98, %v565
  %v772 = vadd.f32 %v99, %v568
  %v773 = vadd.f32 %v100, %v573
  %v774 = vadd.f32 %v101, %v576
  %v775 = vadd.f32 %v102, %v581
  %v776 = vadd.f32 %v103, %v584
  %v777 = vadd.f32 %v104, %v589
  %v778 = vadd.f32 %v105, %v592
  %v779 = vadd.f32 %v106, %v597
  %v780 = vadd.f32 %v107, %v600
  %v781 = vadd.f32 %v108, %v605
  %v782 = vadd.f32 %v109, %v608
  %v783 = vadd.f32 %v110, %v613
  %v784 = vadd.f32 %v111, %v616
  %v785 = vadd.f32 %v112, %v621
  %v786 = vadd.f32 %v113, %v624
  %v787 = vadd.f32 %v114, %v629
  %v788 = vadd.f32 %v115, %v632
  %v789 = vadd.f32 %v116, %v637
  %v790 = vadd.f32 %v117, %v640
  %v791 = vadd.f32 %v118, %v645
  %v792 = vadd.f32 %v119, %v648
  %v793 = vadd.f32 %v120, %v653
  %v794 = vadd.f32 %v121, %v656
  %v795 = vadd.f32 %v122, %v661
  %v796 = vadd.f32 %v123, %v664
  %v797 = vadd.f32 %v124, %v669
  %v798 = vadd.f32 %v125, %v672
  %v799 = vadd.f32 %v126, %v677
  %v800 = vadd.f32 %v127, %v680
  %v801 = vadd.f32 %v128, %v685
  %v802 = vadd.f32 %v129, %v688
  %v803 = vadd.f32 %v130, %v693
  %v804 = vadd.f32 %v131, %v696
  %v805 = vadd.f32 %v132, %v701
  %v806 = vadd.f32 %v133, %v704
  %v807 = vadd.f32 %v134, %v709
  %v808 = vadd.f32 %v135, %v712
  %v809 = vadd.f32 %v136, %v717
  %v810 = vadd.f32 %v137, %v720
  %v811 = vadd.f32 %v138, %v725
  %v812 = vadd.f32 %v139, %v728
  %v813 = vadd.f32 %v140, %v733
  %v814 = vadd.f32 %v141, %v736
  %v815 = vadd.f32 %v142, %v741
  %v816 = vadd.f32 %v143, %v744
  %v817 = vadd.f32 %v144, %v749
  %v818 = vadd.f32 %v145, %v752
  %819 = vst [vmem:[#allocation2] sm:$0xff] %v755
  %820 = vst [vmem:[#allocation2 + $0x8] sm:$0xff] %v756
  %821 = vst [vmem:[#allocation2 + $0x10] sm:$0xff] %v757
  %822 = vst [vmem:[#allocation2 + $0x18] sm:$0xff] %v758
  %823 = vst [vmem:[#allocation2 + $0x20] sm:$0xff] %v759
  %824 = vst [vmem:[#allocation2 + $0x28] sm:$0xff] %v760
  %825 = vst [vmem:[#allocation2 + $0x30] sm:$0xff] %v761
  %826 = vst [vmem:[#allocation2 + $0x38] sm:$0xff] %v762
  %827 = vst [vmem:[#allocation2 + $0x40] sm:$0xff] %v763
  %828 = vst [vmem:[#allocation2 + $0x48] sm:$0xff] %v764
  %829 = vst [vmem:[#allocation2 + $0x50] sm:$0xff] %v765
  %830 = vst [vmem:[#allocation2 + $0x58] sm:$0xff] %v766
  %831 = vst [vmem:[#allocation2 + $0x60] sm:$0xff] %v767
  %832 = vst [vmem:[#allocation2 + $0x68] sm:$0xff] %v768
  %833 = vst [vmem:[#allocation2 + $0x70] sm:$0xff] %v769
  %834 = vst [vmem:[#allocation2 + $0x78] sm:$0xff] %v770
  %835 = vst [vmem:[#allocation2 + $0x80] sm:$0xff] %v771
  %836 = vst [vmem:[#allocation2 + $0x88] sm:$0xff] %v772
  %837 = vst [vmem:[#allocation2 + $0x90] sm:$0xff] %v773
  %838 = vst [vmem:[#allocation2 + $0x98] sm:$0xff] %v774
  %839 = vst [vmem:[#allocation2 + $0xa0] sm:$0xff] %v775
  %840 = vst [vmem:[#allocation2 + $0xa8] sm:$0xff] %v776
  %841 = vst [vmem:[#allocation2 + $0xb0] sm:$0xff] %v777
  %842 = vst [vmem:[#allocation2 + $0xb8] sm:$0xff] %v778
  %843 = vst [vmem:[#allocation2 + $0xc0] sm:$0xff] %v779
  %844 = vst [vmem:[#allocation2 + $0xc8] sm:$0xff] %v780
  %845 = vst [vmem:[#allocation2 + $0xd0] sm:$0xff] %v781
  %846 = vst [vmem:[#allocation2 + $0xd8] sm:$0xff] %v782
  %847 = vst [vmem:[#allocation2 + $0xe0] sm:$0xff] %v783
  %848 = vst [vmem:[#allocation2 + $0xe8] sm:$0xff] %v784
  %849 = vst [vmem:[#allocation2 + $0xf0] sm:$0xff] %v785
  %850 = vst [vmem:[#allocation2 + $0xf8] sm:$0xff] %v786
  %851 = vst [vmem:[#allocation2 + $0x100] sm:$0xff] %v787
  %852 = vst [vmem:[#allocation2 + $0x108] sm:$0xff] %v788
  %853 = vst [vmem:[#allocation2 + $0x110] sm:$0xff] %v789
  %854 = vst [vmem:[#allocation2 + $0x118] sm:$0xff] %v790
  %855 = vst [vmem:[#allocation2 + $0x120] sm:$0xff] %v791
  %856 = vst [vmem:[#allocation2 + $0x128] sm:$0xff] %v792
  %857 = vst [vmem:[#allocation2 + $0x130] sm:$0xff] %v793
  %858 = vst [vmem:[#allocation2 + $0x138] sm:$0xff] %v794
  %859 = vst [vmem:[#allocation2 + $0x140] sm:$0xff] %v795
  %860 = vst [vmem:[#allocation2 + $0x148] sm:$0xff] %v796
  %861 = vst [vmem:[#allocation2 + $0x150] sm:$0xff] %v797
  %862 = vst [vmem:[#allocation2 + $0x158] sm:$0xff] %v798
  %863 = vst [vmem:[#allocation2 + $0x160] sm:$0xff] %v799
  %864 = vst [vmem:[#allocation2 + $0x168] sm:$0xff] %v800
  %865 = vst [vmem:[#allocation2 + $0x170] sm:$0xff] %v801
  %866 = vst [vmem:[#allocation2 + $0x178] sm:$0xff] %v802
  %867 = vst [vmem:[#allocation2 + $0x180] sm:$0xff] %v803
  %868 = vst [vmem:[#allocation2 + $0x188] sm:$0xff] %v804
  %869 = vst [vmem:[#allocation2 + $0x190] sm:$0xff] %v805
  %870 = vst [vmem:[#allocation2 + $0x198] sm:$0xff] %v806
  %871 = vst [vmem:[#allocation2 + $0x1a0] sm:$0xff] %v807
  %872 = vst [vmem:[#allocation2 + $0x1a8] sm:$0xff] %v808
  %873 = vst [vmem:[#allocation2 + $0x1b0] sm:$0xff] %v809
  %874 = vst [vmem:[#allocation2 + $0x1b8] sm:$0xff] %v810
  %875 = vst [vmem:[#allocation2 + $0x1c0] sm:$0xff] %v811
  %876 = vst [vmem:[#allocation2 + $0x1c8] sm:$0xff] %v812
  %877 = vst [vmem:[#allocation2 + $0x1d0] sm:$0xff] %v813
  %878 = vst [vmem:[#allocation2 + $0x1d8] sm:$0xff] %v814
  %879 = vst [vmem:[#allocation2 + $0x1e0] sm:$0xff] %v815
  %880 = vst [vmem:[#allocation2 + $0x1e8] sm:$0xff] %v816
  %881 = vst [vmem:[#allocation2 + $0x1f0] sm:$0xff] %v817
  %882 = vst [vmem:[#allocation2 + $0x1f8] sm:$0xff] %v818
  // Predicated region
  $region14: #{bottleneck_forward.7} parent=0 // pred_check
    %p883 = pneg %p14
  $region15: #{bottleneck_forward.7} parent=0 // pred_check_branch
    %885 = sbr.rel (%p883) target = $region17
  $region16: #{bottleneck_forward.7} parent=0 // pred_region
    %v886 = vld [vmem:[#allocation2] sm:$0xff]
    %v887 = vld [vmem:[#allocation2 + $0x8] sm:$0xff]
    %v888 = vld [vmem:[#allocation2 + $0x10] sm:$0xff]
    %v889 = vld [vmem:[#allocation2 + $0x18] sm:$0xff]
    %v890 = vld [vmem:[#allocation2 + $0x20] sm:$0xff]
    %v891 = vld [vmem:[#allocation2 + $0x28] sm:$0xff]
    %v892 = vld [vmem:[#allocation2 + $0x30] sm:$0xff]
    %v893 = vld [vmem:[#allocation2 + $0x38] sm:$0xff]
    %v894 = vld [vmem:[#allocation2 + $0x40] sm:$0xff]
    %v895 = vld [vmem:[#allocation2 + $0x48] sm:$0xff]
    %v896 = vld [vmem:[#allocation2 + $0x50] sm:$0xff]
    %v897 = vld [vmem:[#allocation2 + $0x58] sm:$0xff]
    %v898 = vld [vmem:[#allocation2 + $0x60] sm:$0xff]
    %v899 = vld [vmem:[#allocation2 + $0x68] sm:$0xff]
    %v900 = vld [vmem:[#allocation2 + $0x70] sm:$0xff]
    %v901 = vld [vmem:[#allocation2 + $0x78] sm:$0xff]
    %v902 = vld [vmem:[#allocation2 + $0x80] sm:$0xff]
    %v903 = vld [vmem:[#allocation2 + $0x88] sm:$0xff]
    %v904 = vld [vmem:[#allocation2 + $0x90] sm:$0xff]
    %v905 = vld [vmem:[#allocation2 + $0x98] sm:$0xff]
    %v906 = vld [vmem:[#allocation2 + $0xa0] sm:$0xff]
    %v907 = vld [vmem:[#allocation2 + $0xa8] sm:$0xff]
    %v908 = vld [vmem:[#allocation2 + $0xb0] sm:$0xff]
    %v909 = vld [vmem:[#allocation2 + $0xb8] sm:$0xff]
    %v910 = vld [vmem:[#allocation2 + $0xc0] sm:$0xff]
    %v911 = vld [vmem:[#allocation2 + $0xc8] sm:$0xff]
    %v912 = vld [vmem:[#allocation2 + $0xd0] sm:$0xff]
    %v913 = vld [vmem:[#allocation2 + $0xd8] sm:$0xff]
    %v914 = vld [vmem:[#allocation2 + $0xe0] sm:$0xff]
    %v915 = vld [vmem:[#allocation2 + $0xe8] sm:$0xff]
    %v916 = vld [vmem:[#allocation2 + $0xf0] sm:$0xff]
    %v917 = vld [vmem:[#allocation2 + $0xf8] sm:$0xff]
    %v918 = vld [vmem:[#allocation2 + $0x100] sm:$0xff]
    %v919 = vld [vmem:[#allocation2 + $0x108] sm:$0xff]
    %v920 = vld [vmem:[#allocation2 + $0x110] sm:$0xff]
    %v921 = vld [vmem:[#allocation2 + $0x118] sm:$0xff]
    %v922 = vld [vmem:[#allocation2 + $0x120] sm:$0xff]
    %v923 = vld [vmem:[#allocation2 + $0x128] sm:$0xff]
    %v924 = vld [vmem:[#allocation2 + $0x130] sm:$0xff]
    %v925 = vld [vmem:[#allocation2 + $0x138] sm:$0xff]
    %v926 = vld [vmem:[#allocation2 + $0x140] sm:$0xff]
    %v927 = vld [vmem:[#allocation2 + $0x148] sm:$0xff]
    %v928 = vld [vmem:[#allocation2 + $0x150] sm:$0xff]
    %v929 = vld [vmem:[#allocation2 + $0x158] sm:$0xff]
    %v930 = vld [vmem:[#allocation2 + $0x160] sm:$0xff]
    %v931 = vld [vmem:[#allocation2 + $0x168] sm:$0xff]
    %v932 = vld [vmem:[#allocation2 + $0x170] sm:$0xff]
    %v933 = vld [vmem:[#allocation2 + $0x178] sm:$0xff]
    %v934 = vld [vmem:[#allocation2 + $0x180] sm:$0xff]
    %v935 = vld [vmem:[#allocation2 + $0x188] sm:$0xff]
    %v936 = vld [vmem:[#allocation2 + $0x190] sm:$0xff]
    %v937 = vld [vmem:[#allocation2 + $0x198] sm:$0xff]
    %v938 = vld [vmem:[#allocation2 + $0x1a0] sm:$0xff]
    %v939 = vld [vmem:[#allocation2 + $0x1a8] sm:$0xff]
    %v940 = vld [vmem:[#allocation2 + $0x1b0] sm:$0xff]
    %v941 = vld [vmem:[#allocation2 + $0x1b8] sm:$0xff]
    %v942 = vld [vmem:[#allocation2 + $0x1c0] sm:$0xff]
    %v943 = vld [vmem:[#allocation2 + $0x1c8] sm:$0xff]
    %v944 = vld [vmem:[#allocation2 + $0x1d0] sm:$0xff]
    %v945 = vld [vmem:[#allocation2 + $0x1d8] sm:$0xff]
    %v946 = vld [vmem:[#allocation2 + $0x1e0] sm:$0xff]
    %v947 = vld [vmem:[#allocation2 + $0x1e8] sm:$0xff]
    %v948 = vld [vmem:[#allocation2 + $0x1f0] sm:$0xff]
    %v949 = vld [vmem:[#allocation2 + $0x1f8] sm:$0xff]
    %v950 = vpack.c.bf16 %v887, %v886
    %v951 = vpack.c.bf16 %v889, %v888
    %v952 = vpack.c.bf16 %v891, %v890
    %v953 = vpack.c.bf16 %v893, %v892
    %v954 = vpack.c.bf16 %v895, %v894
    %v955 = vpack.c.bf16 %v897, %v896
    %v956 = vpack.c.bf16 %v899, %v898
    %v957 = vpack.c.bf16 %v901, %v900
    %v958 = vpack.c.bf16 %v903, %v902
    %v959 = vpack.c.bf16 %v905, %v904
    %v960 = vpack.c.bf16 %v907, %v906
    %v961 = vpack.c.bf16 %v909, %v908
    %v962 = vpack.c.bf16 %v911, %v910
    %v963 = vpack.c.bf16 %v913, %v912
    %v964 = vpack.c.bf16 %v915, %v914
    %v965 = vpack.c.bf16 %v917, %v916
    %v966 = vpack.c.bf16 %v919, %v918
    %v967 = vpack.c.bf16 %v921, %v920
    %v968 = vpack.c.bf16 %v923, %v922
    %v969 = vpack.c.bf16 %v925, %v924
    %v970 = vpack.c.bf16 %v927, %v926
    %v971 = vpack.c.bf16 %v929, %v928
    %v972 = vpack.c.bf16 %v931, %v930
    %v973 = vpack.c.bf16 %v933, %v932
    %v974 = vpack.c.bf16 %v935, %v934
    %v975 = vpack.c.bf16 %v937, %v936
    %v976 = vpack.c.bf16 %v939, %v938
    %v977 = vpack.c.bf16 %v941, %v940
    %v978 = vpack.c.bf16 %v943, %v942
    %v979 = vpack.c.bf16 %v945, %v944
    %v980 = vpack.c.bf16 %v947, %v946
    %v981 = vpack.c.bf16 %v949, %v948
    %v1014 = vunpack.c.l.b16 %v950
    %v1015 = vunpack.c.h.b16 %v950
    %v1016 = vunpack.c.l.b16 %v951
    %v1017 = vunpack.c.h.b16 %v951
    %v1018 = vunpack.c.l.b16 %v952
    %v1019 = vunpack.c.h.b16 %v952
    %v1020 = vunpack.c.l.b16 %v953
    %v1021 = vunpack.c.h.b16 %v953
    %v1022 = vunpack.c.l.b16 %v954
    %v1023 = vunpack.c.h.b16 %v954
    %v1024 = vunpack.c.l.b16 %v955
    %v1025 = vunpack.c.h.b16 %v955
    %v1026 = vunpack.c.l.b16 %v956
    %v1027 = vunpack.c.h.b16 %v956
    %v1028 = vunpack.c.l.b16 %v957
    %v1029 = vunpack.c.h.b16 %v957
    %v1030 = vunpack.c.l.b16 %v958
    %v1031 = vunpack.c.h.b16 %v958
    %v1032 = vunpack.c.l.b16 %v959
    %v1033 = vunpack.c.h.b16 %v959
    %v1034 = vunpack.c.l.b16 %v960
    %v1035 = vunpack.c.h.b16 %v960
    %v1036 = vunpack.c.l.b16 %v961
    %v1037 = vunpack.c.h.b16 %v961
    %v1038 = vunpack.c.l.b16 %v962
    %v1039 = vunpack.c.h.b16 %v962
    %v1040 = vunpack.c.l.b16 %v963
    %v1041 = vunpack.c.h.b16 %v963
    %v1042 = vunpack.c.l.b16 %v964
    %v1043 = vunpack.c.h.b16 %v964
    %v1044 = vunpack.c.l.b16 %v965
    %v1045 = vunpack.c.h.b16 %v965
    %v1046 = vunpack.c.l.b16 %v966
    %v1047 = vunpack.c.h.b16 %v966
    %v1048 = vunpack.c.l.b16 %v967
    %v1049 = vunpack.c.h.b16 %v967
    %v1050 = vunpack.c.l.b16 %v968
    %v1051 = vunpack.c.h.b16 %v968
    %v1052 = vunpack.c.l.b16 %v969
    %v1053 = vunpack.c.h.b16 %v969
    %v1054 = vunpack.c.l.b16 %v970
    %v1055 = vunpack.c.h.b16 %v970
    %v1056 = vunpack.c.l.b16 %v971
    %v1057 = vunpack.c.h.b16 %v971
    %v1058 = vunpack.c.l.b16 %v972
    %v1059 = vunpack.c.h.b16 %v972
    %v1060 = vunpack.c.l.b16 %v973
    %v1061 = vunpack.c.h.b16 %v973
    %v1062 = vunpack.c.l.b16 %v974
    %v1063 = vunpack.c.h.b16 %v974
    %v1064 = vunpack.c.l.b16 %v975
    %v1065 = vunpack.c.h.b16 %v975
    %v1066 = vunpack.c.l.b16 %v976
    %v1067 = vunpack.c.h.b16 %v976
    %v1068 = vunpack.c.l.b16 %v977
    %v1069 = vunpack.c.h.b16 %v977
    %v1070 = vunpack.c.l.b16 %v978
    %v1071 = vunpack.c.h.b16 %v978
    %v1072 = vunpack.c.l.b16 %v979
    %v1073 = vunpack.c.h.b16 %v979
    %v1074 = vunpack.c.l.b16 %v980
    %v1075 = vunpack.c.h.b16 %v980
    %v1076 = vunpack.c.l.b16 %v981
    %v1077 = vunpack.c.h.b16 %v981
    %v1078 = vpack.c.b16 %v1014, %v1014
    %v1079 = vpack.c.b16 %v1015, %v1015
    %v1080 = vpack.c.b16 %v1016, %v1016
    %v1081 = vpack.c.b16 %v1017, %v1017
    %v1082 = vpack.c.b16 %v1018, %v1018
    %v1083 = vpack.c.b16 %v1019, %v1019
    %v1084 = vpack.c.b16 %v1020, %v1020
    %v1085 = vpack.c.b16 %v1021, %v1021
    %v1086 = vpack.c.b16 %v1022, %v1022
    %v1087 = vpack.c.b16 %v1023, %v1023
    %v1088 = vpack.c.b16 %v1024, %v1024
    %v1089 = vpack.c.b16 %v1025, %v1025
    %v1090 = vpack.c.b16 %v1026, %v1026
    %v1091 = vpack.c.b16 %v1027, %v1027
    %v1092 = vpack.c.b16 %v1028, %v1028
    %v1093 = vpack.c.b16 %v1029, %v1029
    %v1094 = vpack.c.b16 %v1030, %v1030
    %v1095 = vpack.c.b16 %v1031, %v1031
    %v1096 = vpack.c.b16 %v1032, %v1032
    %v1097 = vpack.c.b16 %v1033, %v1033
    %v1098 = vpack.c.b16 %v1034, %v1034
    %v1099 = vpack.c.b16 %v1035, %v1035
    %v1100 = vpack.c.b16 %v1036, %v1036
    %v1101 = vpack.c.b16 %v1037, %v1037
    %v1102 = vpack.c.b16 %v1038, %v1038
    %v1103 = vpack.c.b16 %v1039, %v1039
    %v1104 = vpack.c.b16 %v1040, %v1040
    %v1105 = vpack.c.b16 %v1041, %v1041
    %v1106 = vpack.c.b16 %v1042, %v1042
    %v1107 = vpack.c.b16 %v1043, %v1043
    %v1108 = vpack.c.b16 %v1044, %v1044
    %v1109 = vpack.c.b16 %v1045, %v1045
    %v1110 = vpack.c.b16 %v1046, %v1046
    %v1111 = vpack.c.b16 %v1047, %v1047
    %v1112 = vpack.c.b16 %v1048, %v1048
    %v1113 = vpack.c.b16 %v1049, %v1049
    %v1114 = vpack.c.b16 %v1050, %v1050
    %v1115 = vpack.c.b16 %v1051, %v1051
    %v1116 = vpack.c.b16 %v1052, %v1052
    %v1117 = vpack.c.b16 %v1053, %v1053
    %v1118 = vpack.c.b16 %v1054, %v1054
    %v1119 = vpack.c.b16 %v1055, %v1055
    %v1120 = vpack.c.b16 %v1056, %v1056
    %v1121 = vpack.c.b16 %v1057, %v1057
    %v1122 = vpack.c.b16 %v1058, %v1058
    %v1123 = vpack.c.b16 %v1059, %v1059
    %v1124 = vpack.c.b16 %v1060, %v1060
    %v1125 = vpack.c.b16 %v1061, %v1061
    %v1126 = vpack.c.b16 %v1062, %v1062
    %v1127 = vpack.c.b16 %v1063, %v1063
    %v1128 = vpack.c.b16 %v1064, %v1064
    %v1129 = vpack.c.b16 %v1065, %v1065
    %v1130 = vpack.c.b16 %v1066, %v1066
    %v1131 = vpack.c.b16 %v1067, %v1067
    %v1132 = vpack.c.b16 %v1068, %v1068
    %v1133 = vpack.c.b16 %v1069, %v1069
    %v1134 = vpack.c.b16 %v1070, %v1070
    %v1135 = vpack.c.b16 %v1071, %v1071
    %v1136 = vpack.c.b16 %v1072, %v1072
    %v1137 = vpack.c.b16 %v1073, %v1073
    %v1138 = vpack.c.b16 %v1074, %v1074
    %v1139 = vpack.c.b16 %v1075, %v1075
    %v1140 = vpack.c.b16 %v1076, %v1076
    %v1141 = vpack.c.b16 %v1077, %v1077
    %1206 = vst [vmem:[%s2] sm:$0xf] %v1078
    %1207 = vst [vmem:[%s2 + $0x4] sm:$0xf] %v1079
    %1208 = vst [vmem:[%s2 + $0x8] sm:$0xf] %v1080
    %1209 = vst [vmem:[%s2 + $0xc] sm:$0xf] %v1081
    %1210 = vst [vmem:[%s2 + $0x10] sm:$0xf] %v1082
    %1211 = vst [vmem:[%s2 + $0x14] sm:$0xf] %v1083
    %1212 = vst [vmem:[%s2 + $0x18] sm:$0xf] %v1084
    %1213 = vst [vmem:[%s2 + $0x1c] sm:$0xf] %v1085
    %1214 = vst [vmem:[%s2 + $0x20] sm:$0xf] %v1086
    %1215 = vst [vmem:[%s2 + $0x24] sm:$0xf] %v1087
    %1216 = vst [vmem:[%s2 + $0x28] sm:$0xf] %v1088
    %1217 = vst [vmem:[%s2 + $0x2c] sm:$0xf] %v1089
    %1218 = vst [vmem:[%s2 + $0x30] sm:$0xf] %v1090
    %1219 = vst [vmem:[%s2 + $0x34] sm:$0xf] %v1091
    %1220 = vst [vmem:[%s2 + $0x38] sm:$0xf] %v1092
    %1221 = vst [vmem:[%s2 + $0x3c] sm:$0xf] %v1093
    %1222 = vst [vmem:[%s2 + $0x40] sm:$0xf] %v1094
    %1223 = vst [vmem:[%s2 + $0x44] sm:$0xf] %v1095
    %1224 = vst [vmem:[%s2 + $0x48] sm:$0xf] %v1096
    %1225 = vst [vmem:[%s2 + $0x4c] sm:$0xf] %v1097
    %1226 = vst [vmem:[%s2 + $0x50] sm:$0xf] %v1098
    %1227 = vst [vmem:[%s2 + $0x54] sm:$0xf] %v1099
    %1228 = vst [vmem:[%s2 + $0x58] sm:$0xf] %v1100
    %1229 = vst [vmem:[%s2 + $0x5c] sm:$0xf] %v1101
    %1230 = vst [vmem:[%s2 + $0x60] sm:$0xf] %v1102
    %1231 = vst [vmem:[%s2 + $0x64] sm:$0xf] %v1103
    %1232 = vst [vmem:[%s2 + $0x68] sm:$0xf] %v1104
    %1233 = vst [vmem:[%s2 + $0x6c] sm:$0xf] %v1105
    %1234 = vst [vmem:[%s2 + $0x70] sm:$0xf] %v1106
    %1235 = vst [vmem:[%s2 + $0x74] sm:$0xf] %v1107
    %1236 = vst [vmem:[%s2 + $0x78] sm:$0xf] %v1108
    %1237 = vst [vmem:[%s2 + $0x7c] sm:$0xf] %v1109
    %1238 = vst [vmem:[%s2 + $0x80] sm:$0xf] %v1110
    %1239 = vst [vmem:[%s2 + $0x84] sm:$0xf] %v1111
    %1240 = vst [vmem:[%s2 + $0x88] sm:$0xf] %v1112
    %1241 = vst [vmem:[%s2 + $0x8c] sm:$0xf] %v1113
    %1242 = vst [vmem:[%s2 + $0x90] sm:$0xf] %v1114
    %1243 = vst [vmem:[%s2 + $0x94] sm:$0xf] %v1115
    %1244 = vst [vmem:[%s2 + $0x98] sm:$0xf] %v1116
    %1245 = vst [vmem:[%s2 + $0x9c] sm:$0xf] %v1117
    %1246 = vst [vmem:[%s2 + $0xa0] sm:$0xf] %v1118
    %1247 = vst [vmem:[%s2 + $0xa4] sm:$0xf] %v1119
    %1248 = vst [vmem:[%s2 + $0xa8] sm:$0xf] %v1120
    %1249 = vst [vmem:[%s2 + $0xac] sm:$0xf] %v1121
    %1250 = vst [vmem:[%s2 + $0xb0] sm:$0xf] %v1122
    %1251 = vst [vmem:[%s2 + $0xb4] sm:$0xf] %v1123
    %1252 = vst [vmem:[%s2 + $0xb8] sm:$0xf] %v1124
    %1253 = vst [vmem:[%s2 + $0xbc] sm:$0xf] %v1125
    %1254 = vst [vmem:[%s2 + $0xc0] sm:$0xf] %v1126
    %1255 = vst [vmem:[%s2 + $0xc4] sm:$0xf] %v1127
    %1256 = vst [vmem:[%s2 + $0xc8] sm:$0xf] %v1128
    %1257 = vst [vmem:[%s2 + $0xcc] sm:$0xf] %v1129
    %1258 = vst [vmem:[%s2 + $0xd0] sm:$0xf] %v1130
    %1259 = vst [vmem:[%s2 + $0xd4] sm:$0xf] %v1131
    %1260 = vst [vmem:[%s2 + $0xd8] sm:$0xf] %v1132
    %1261 = vst [vmem:[%s2 + $0xdc] sm:$0xf] %v1133
    %1262 = vst [vmem:[%s2 + $0xe0] sm:$0xf] %v1134
    %1263 = vst [vmem:[%s2 + $0xe4] sm:$0xf] %v1135
    %1264 = vst [vmem:[%s2 + $0xe8] sm:$0xf] %v1136
    %1265 = vst [vmem:[%s2 + $0xec] sm:$0xf] %v1137
    %1266 = vst [vmem:[%s2 + $0xf0] sm:$0xf] %v1138
    %1267 = vst [vmem:[%s2 + $0xf4] sm:$0xf] %v1139
    %1268 = vst [vmem:[%s2 + $0xf8] sm:$0xf] %v1140
    %1269 = vst [vmem:[%s2 + $0xfc] sm:$0xf] %v1141
    %v1270 = vadd.f32 %v886, %v887
    %v1271 = vadd.f32 %v1270, %v888
    %v1272 = vadd.f32 %v1271, %v889
    %v1273 = vadd.f32 %v1272, %v890
    %v1274 = vadd.f32 %v1273, %v891
    %v1275 = vadd.f32 %v1274, %v892
    %v1276 = vadd.f32 %v1275, %v893
    %v1277 = vadd.f32 %v1276, %v894
    %v1278 = vadd.f32 %v1277, %v895
    %v1279 = vadd.f32 %v1278, %v896
    %v1280 = vadd.f32 %v1279, %v897
    %v1281 = vadd.f32 %v1280, %v898
    %v1282 = vadd.f32 %v1281, %v899
    %v1283 = vadd.f32 %v1282, %v900
    %v1284 = vadd.f32 %v1283, %v901
    %v1285 = vadd.f32 %v1284, %v902
    %v1286 = vadd.f32 %v1285, %v903
    %v1287 = vadd.f32 %v1286, %v904
    %v1288 = vadd.f32 %v1287, %v905
    %v1289 = vadd.f32 %v1288, %v906
    %v1290 = vadd.f32 %v1289, %v907
    %v1291 = vadd.f32 %v1290, %v908
    %v1292 = vadd.f32 %v1291, %v909
    %v1293 = vadd.f32 %v1292, %v910
    %v1294 = vadd.f32 %v1293, %v911
    %v1295 = vadd.f32 %v1294, %v912
    %v1296 = vadd.f32 %v1295, %v913
    %v1297 = vadd.f32 %v1296, %v914
    %v1298 = vadd.f32 %v1297, %v915
    %v1299 = vadd.f32 %v1298, %v916
    %v1300 = vadd.f32 %v1299, %v917
    %v1301 = vadd.f32 %v1300, %v918
    %v1302 = vadd.f32 %v1301, %v919
    %v1303 = vadd.f32 %v1302, %v920
    %v1304 = vadd.f32 %v1303, %v921
    %v1305 = vadd.f32 %v1304, %v922
    %v1306 = vadd.f32 %v1305, %v923
    %v1307 = vadd.f32 %v1306, %v924
    %v1308 = vadd.f32 %v1307, %v925
    %v1309 = vadd.f32 %v1308, %v926
    %v1310 = vadd.f32 %v1309, %v927
    %v1311 = vadd.f32 %v1310, %v928
    %v1312 = vadd.f32 %v1311, %v929
    %v1313 = vadd.f32 %v1312, %v930
    %v1314 = vadd.f32 %v1313, %v931
    %v1315 = vadd.f32 %v1314, %v932
    %v1316 = vadd.f32 %v1315, %v933
    %v1317 = vadd.f32 %v1316, %v934
    %v1318 = vadd.f32 %v1317, %v935
    %v1319 = vadd.f32 %v1318, %v936
    %v1320 = vadd.f32 %v1319, %v937
    %v1321 = vadd.f32 %v1320, %v938
    %v1322 = vadd.f32 %v1321, %v939
    %v1323 = vadd.f32 %v1322, %v940
    %v1324 = vadd.f32 %v1323, %v941
    %v1325 = vadd.f32 %v1324, %v942
    %v1326 = vadd.f32 %v1325, %v943
    %v1327 = vadd.f32 %v1326, %v944
    %v1328 = vadd.f32 %v1327, %v945
    %v1329 = vadd.f32 %v1328, %v946
    %v1330 = vadd.f32 %v1329, %v947
    %v1331 = vadd.f32 %v1330, %v948
    %v1332 = vadd.f32 %v1331, %v949
    %v1333 = vrot.slane %v1332, 4
    %v1334 = vadd.f32 %v1332, %v1333
    %v1335 = vrot.slane %v1334, 2
    %v1336 = vadd.f32 %v1334, %v1335
    %v1337 = vrot.slane %v1336, 1
    %v1338 = vadd.f32 %v1336, %v1337
    %1339 = vst [vmem:[%s3] sm:$0x1] %v1338
    %v1340 = vmul.f32 %v886, %v886
    %v1341 = vmul.f32 %v887, %v887
    %v1342 = vmul.f32 %v888, %v888
    %v1343 = vmul.f32 %v889, %v889
    %v1344 = vmul.f32 %v890, %v890
    %v1345 = vmul.f32 %v891, %v891
    %v1346 = vmul.f32 %v892, %v892
    %v1347 = vmul.f32 %v893, %v893
    %v1348 = vmul.f32 %v894, %v894
    %v1349 = vmul.f32 %v895, %v895
    %v1350 = vmul.f32 %v896, %v896
    %v1351 = vmul.f32 %v897, %v897
    %v1352 = vmul.f32 %v898, %v898
    %v1353 = vmul.f32 %v899, %v899
    %v1354 = vmul.f32 %v900, %v900
    %v1355 = vmul.f32 %v901, %v901
    %v1356 = vmul.f32 %v902, %v902
    %v1357 = vmul.f32 %v903, %v903
    %v1358 = vmul.f32 %v904, %v904
    %v1359 = vmul.f32 %v905, %v905
    %v1360 = vmul.f32 %v906, %v906
    %v1361 = vmul.f32 %v907, %v907
    %v1362 = vmul.f32 %v908, %v908
    %v1363 = vmul.f32 %v909, %v909
    %v1364 = vmul.f32 %v910, %v910
    %v1365 = vmul.f32 %v911, %v911
    %v1366 = vmul.f32 %v912, %v912
    %v1367 = vmul.f32 %v913, %v913
    %v1368 = vmul.f32 %v914, %v914
    %v1369 = vmul.f32 %v915, %v915
    %v1370 = vmul.f32 %v916, %v916
    %v1371 = vmul.f32 %v917, %v917
    %v1372 = vmul.f32 %v918, %v918
    %v1373 = vmul.f32 %v919, %v919
    %v1374 = vmul.f32 %v920, %v920
    %v1375 = vmul.f32 %v921, %v921
    %v1376 = vmul.f32 %v922, %v922
    %v1377 = vmul.f32 %v923, %v923
    %v1378 = vmul.f32 %v924, %v924
    %v1379 = vmul.f32 %v925, %v925
    %v1380 = vmul.f32 %v926, %v926
    %v1381 = vmul.f32 %v927, %v927
    %v1382 = vmul.f32 %v928, %v928
    %v1383 = vmul.f32 %v929, %v929
    %v1384 = vmul.f32 %v930, %v930
    %v1385 = vmul.f32 %v931, %v931
    %v1386 = vmul.f32 %v932, %v932
    %v1387 = vmul.f32 %v933, %v933
    %v1388 = vmul.f32 %v934, %v934
    %v1389 = vmul.f32 %v935, %v935
    %v1390 = vmul.f32 %v936, %v936
    %v1391 = vmul.f32 %v937, %v937
    %v1392 = vmul.f32 %v938, %v938
    %v1393 = vmul.f32 %v939, %v939
    %v1394 = vmul.f32 %v940, %v940
    %v1395 = vmul.f32 %v941, %v941
    %v1396 = vmul.f32 %v942, %v942
    %v1397 = vmul.f32 %v943, %v943
    %v1398 = vmul.f32 %v944, %v944
    %v1399 = vmul.f32 %v945, %v945
    %v1400 = vmul.f32 %v946, %v946
    %v1401 = vmul.f32 %v947, %v947
    %v1402 = vmul.f32 %v948, %v948
    %v1403 = vmul.f32 %v949, %v949
    %v1404 = vadd.f32 %v1340, %v1341
    %v1405 = vadd.f32 %v1404, %v1342
    %v1406 = vadd.f32 %v1405, %v1343
    %v1407 = vadd.f32 %v1406, %v1344
    %v1408 = vadd.f32 %v1407, %v1345
    %v1409 = vadd.f32 %v1408, %v1346
    %v1410 = vadd.f32 %v1409, %v1347
    %v1411 = vadd.f32 %v1410, %v1348
    %v1412 = vadd.f32 %v1411, %v1349
    %v1413 = vadd.f32 %v1412, %v1350
    %v1414 = vadd.f32 %v1413, %v1351
    %v1415 = vadd.f32 %v1414, %v1352
    %v1416 = vadd.f32 %v1415, %v1353
    %v1417 = vadd.f32 %v1416, %v1354
    %v1418 = vadd.f32 %v1417, %v1355
    %v1419 = vadd.f32 %v1418, %v1356
    %v1420 = vadd.f32 %v1419, %v1357
    %v1421 = vadd.f32 %v1420, %v1358
    %v1422 = vadd.f32 %v1421, %v1359
    %v1423 = vadd.f32 %v1422, %v1360
    %v1424 = vadd.f32 %v1423, %v1361
    %v1425 = vadd.f32 %v1424, %v1362
    %v1426 = vadd.f32 %v1425, %v1363
    %v1427 = vadd.f32 %v1426, %v1364
    %v1428 = vadd.f32 %v1427, %v1365
    %v1429 = vadd.f32 %v1428, %v1366
    %v1430 = vadd.f32 %v1429, %v1367
    %v1431 = vadd.f32 %v1430, %v1368
    %v1432 = vadd.f32 %v1431, %v1369
    %v1433 = vadd.f32 %v1432, %v1370
    %v1434 = vadd.f32 %v1433, %v1371
    %v1435 = vadd.f32 %v1434, %v1372
    %v1436 = vadd.f32 %v1435, %v1373
    %v1437 = vadd.f32 %v1436, %v1374
    %v1438 = vadd.f32 %v1437, %v1375
    %v1439 = vadd.f32 %v1438, %v1376
    %v1440 = vadd.f32 %v1439, %v1377
    %v1441 = vadd.f32 %v1440, %v1378
    %v1442 = vadd.f32 %v1441, %v1379
    %v1443 = vadd.f32 %v1442, %v1380
    %v1444 = vadd.f32 %v1443, %v1381
    %v1445 = vadd.f32 %v1444, %v1382
    %v1446 = vadd.f32 %v1445, %v1383
    %v1447 = vadd.f32 %v1446, %v1384
    %v1448 = vadd.f32 %v1447, %v1385
    %v1449 = vadd.f32 %v1448, %v1386
    %v1450 = vadd.f32 %v1449, %v1387
    %v1451 = vadd.f32 %v1450, %v1388
    %v1452 = vadd.f32 %v1451, %v1389
    %v1453 = vadd.f32 %v1452, %v1390
    %v1454 = vadd.f32 %v1453, %v1391
    %v1455 = vadd.f32 %v1454, %v1392
    %v1456 = vadd.f32 %v1455, %v1393
    %v1457 = vadd.f32 %v1456, %v1394
    %v1458 = vadd.f32 %v1457, %v1395
    %v1459 = vadd.f32 %v1458, %v1396
    %v1460 = vadd.f32 %v1459, %v1397
    %v1461 = vadd.f32 %v1460, %v1398
    %v1462 = vadd.f32 %v1461, %v1399
    %v1463 = vadd.f32 %v1462, %v1400
    %v1464 = vadd.f32 %v1463, %v1401
    %v1465 = vadd.f32 %v1464, %v1402
    %v1466 = vadd.f32 %v1465, %v1403
    %v1467 = vrot.slane %v1466, 4
    %v1468 = vadd.f32 %v1466, %v1467
    %v1469 = vrot.slane %v1468, 2
    %v1470 = vadd.f32 %v1468, %v1469
    %v1471 = vrot.slane %v1470, 1
    %v1472 = vadd.f32 %v1470, %v1471
    %1473 = vst [vmem:[%s3 + $0x1] sm:$0x1] %v1472
  $region17: #{bottleneck_forward.7} parent=0 // pred_fallthru
    _
  // Predicated region
  $region18: #{bottleneck_forward.7} parent=0 // pred_check
    _
  $region19: #{bottleneck_forward.7} parent=0 // pred_check_branch
    %1475 = sbr.rel (0) target = $region21
  $region20: #{bottleneck_forward.7} parent=0 // pred_region
    _
  $region21: #{bottleneck_forward.7} parent=0 // pred_fallthru
    _
  // Predicated region
  $region22: #{bottleneck_forward.7} parent=0 // pred_check
    _
  $region23: #{bottleneck_forward.7} parent=0 // pred_check_branch
    %1477 = sbr.rel (0) target = $region25
  $region24: #{bottleneck_forward.7} parent=0 // pred_region
    _
  $region25: #{bottleneck_forward.7} parent=0 // pred_fallthru
    _
  // Predicated region
  $region26: #{bottleneck_forward.7} parent=0 // pred_check
    _
  $region27: #{bottleneck_forward.7} parent=0 // pred_check_branch
    %1479 = sbr.rel (0) target = $region29
  $region28: #{bottleneck_forward.7} parent=0 // pred_region
    _
  $region29: #{bottleneck_forward.7} parent=0 // pred_fallthru
    _
  // Predicated region
  $region30: #{bottleneck_forward.7} parent=0 // pred_check
    _
  $region31: #{bottleneck_forward.7} parent=0 // pred_check_branch
    %1481 = sbr.rel (0) target = $region33
  $region32: #{bottleneck_forward.7} parent=0 // pred_region
    _
  $region33: #{bottleneck_forward.7} parent=0 // pred_fallthru
    _

// kernel: bottleneck_forward.10
$region0: #{bottleneck_forward.10}
  #allocation0 [shape = 'u32[]', space=smem, size = 0x4, offset = 0x4, fixed_abs, tag = 'smem constant byte address 0x4 - core index']
  #allocation1 [shape = 'u32[144,128]{1,0:T(1,128)}', space=vmem, size = 0x12000, scoped, tag = 'internal scratch']
  %s0 = inlined_call_operand.vmem [shape: bf16[128,128], index: 0, kind: input, shape index: {}]
  %s1 = inlined_call_operand.vmem [shape: f32[2,128], index: 1, kind: input, shape index: {}]
  %s2 = inlined_call_operand.vmem [shape: bf16[128,128], index: 2, kind: output, shape index: {}]
  %s3 = sld [smem:[#allocation0]]
  $region18: #{bottleneck_forward.10} parent=0
    _
  %s5 = ssub.s32 1, %s3
  %s6 = scalar_select 0, %s5, %s3
  // Predicated region
  $region2: #{bottleneck_forward.10} parent=0 // pred_check
    _
  $region3: #{bottleneck_forward.10} parent=0 // pred_check_branch
    %8 = sbr.rel (0) target = $region5
  $region4: #{bottleneck_forward.10} parent=0 // pred_region
    _
  $region5: #{bottleneck_forward.10} parent=0 // pred_fallthru
    _
  // Predicated region
  $region6: #{bottleneck_forward.10} parent=0 // pred_check
    _
  $region7: #{bottleneck_forward.10} parent=0 // pred_check_branch
    %10 = sbr.rel (0) target = $region9
  $region8: #{bottleneck_forward.10} parent=0 // pred_region
    _
  $region9: #{bottleneck_forward.10} parent=0 // pred_fallthru
    _
  %v11 = vld [vmem:[%s0] sm:$0xf]
  %v12 = vld [vmem:[%s0 + $0x4] sm:$0xf]
  %v13 = vld [vmem:[%s0 + $0x8] sm:$0xf]
  %v14 = vld [vmem:[%s0 + $0xc] sm:$0xf]
  %v15 = vld [vmem:[%s0 + $0x10] sm:$0xf]
  %v16 = vld [vmem:[%s0 + $0x14] sm:$0xf]
  %v17 = vld [vmem:[%s0 + $0x18] sm:$0xf]
  %v18 = vld [vmem:[%s0 + $0x1c] sm:$0xf]
  %v19 = vld [vmem:[%s0 + $0x20] sm:$0xf]
  %v20 = vld [vmem:[%s0 + $0x24] sm:$0xf]
  %v21 = vld [vmem:[%s0 + $0x28] sm:$0xf]
  %v22 = vld [vmem:[%s0 + $0x2c] sm:$0xf]
  %v23 = vld [vmem:[%s0 + $0x30] sm:$0xf]
  %v24 = vld [vmem:[%s0 + $0x34] sm:$0xf]
  %v25 = vld [vmem:[%s0 + $0x38] sm:$0xf]
  %v26 = vld [vmem:[%s0 + $0x3c] sm:$0xf]
  %v27 = vld [vmem:[%s1] sm:$0x1]
  %v28 = vunpack.c.l.bf16 %v11
  %v29 = vunpack.c.l.bf16 %v12
  %v30 = vunpack.c.l.bf16 %v13
  %v31 = vunpack.c.l.bf16 %v14
  %v32 = vunpack.c.l.bf16 %v15
  %v33 = vunpack.c.l.bf16 %v16
  %v34 = vunpack.c.l.bf16 %v17
  %v35 = vunpack.c.l.bf16 %v18
  %v36 = vunpack.c.l.bf16 %v19
  %v37 = vunpack.c.l.bf16 %v20
  %v38 = vunpack.c.l.bf16 %v21
  %v39 = vunpack.c.l.bf16 %v22
  %v40 = vunpack.c.l.bf16 %v23
  %v41 = vunpack.c.l.bf16 %v24
  %v42 = vunpack.c.l.bf16 %v25
  %v43 = vunpack.c.l.bf16 %v26
  %v44 = vlaneseq
  %v45 = vshrl.u32 %v44, 7
  %v46 = vsub.s32 0, %v45
  %v47 = vrot.slane %v27, %v46
  %v48 = vmul.f32 %v28, %v47
  %v49 = vmul.f32 %v29, %v47
  %v50 = vmul.f32 %v30, %v47
  %v51 = vmul.f32 %v31, %v47
  %v52 = vmul.f32 %v32, %v47
  %v53 = vmul.f32 %v33, %v47
  %v54 = vmul.f32 %v34, %v47
  %v55 = vmul.f32 %v35, %v47
  %v56 = vmul.f32 %v36, %v47
  %v57 = vmul.f32 %v37, %v47
  %v58 = vmul.f32 %v38, %v47
  %v59 = vmul.f32 %v39, %v47
  %v60 = vmul.f32 %v40, %v47
  %v61 = vmul.f32 %v41, %v47
  %v62 = vmul.f32 %v42, %v47
  %v63 = vmul.f32 %v43, %v47
  %v64 = vld [vmem:[%s1 + $0x1] sm:$0x1]
  %v65 = vlaneseq
  %v66 = vshrl.u32 %v65, 7
  %v67 = vsub.s32 0, %v66
  %v68 = vrot.slane %v64, %v67
  %v69 = vadd.f32 %v48, %v68
  %v70 = vadd.f32 %v49, %v68
  %v71 = vadd.f32 %v50, %v68
  %v72 = vadd.f32 %v51, %v68
  %v73 = vadd.f32 %v52, %v68
  %v74 = vadd.f32 %v53, %v68
  %v75 = vadd.f32 %v54, %v68
  %v76 = vadd.f32 %v55, %v68
  %v77 = vadd.f32 %v56, %v68
  %v78 = vadd.f32 %v57, %v68
  %v79 = vadd.f32 %v58, %v68
  %v80 = vadd.f32 %v59, %v68
  %v81 = vadd.f32 %v60, %v68
  %v82 = vadd.f32 %v61, %v68
  %v83 = vadd.f32 %v62, %v68
  %v84 = vadd.f32 %v63, %v68
  %v85 = vmax.f32 %v69, 0.0
  %v86 = vmax.f32 %v70, 0.0
  %v87 = vmax.f32 %v71, 0.0
  %v88 = vmax.f32 %v72, 0.0
  %v89 = vmax.f32 %v73, 0.0
  %v90 = vmax.f32 %v74, 0.0
  %v91 = vmax.f32 %v75, 0.0
  %v92 = vmax.f32 %v76, 0.0
  %v93 = vmax.f32 %v77, 0.0
  %v94 = vmax.f32 %v78, 0.0
  %v95 = vmax.f32 %v79, 0.0
  %v96 = vmax.f32 %v80, 0.0
  %v97 = vmax.f32 %v81, 0.0
  %v98 = vmax.f32 %v82, 0.0
  %v99 = vmax.f32 %v83, 0.0
  %v100 = vmax.f32 %v84, 0.0
  %v101 = vpack.c.bf16 %v86, %v85
  %v102 = vpack.c.bf16 %v88, %v87
  %v103 = vpack.c.bf16 %v90, %v89
  %v104 = vpack.c.bf16 %v92, %v91
  %v105 = vpack.c.bf16 %v94, %v93
  %v106 = vpack.c.bf16 %v96, %v95
  %v107 = vpack.c.bf16 %v98, %v97
  %v108 = vpack.c.bf16 %v100, %v99
  %v117 = vunpack.c.l.b16 %v101
  %v118 = vunpack.c.h.b16 %v101
  %v119 = vunpack.c.l.b16 %v102
  %v120 = vunpack.c.h.b16 %v102
  %v121 = vunpack.c.l.b16 %v103
  %v122 = vunpack.c.h.b16 %v103
  %v123 = vunpack.c.l.b16 %v104
  %v124 = vunpack.c.h.b16 %v104
  %v125 = vunpack.c.l.b16 %v105
  %v126 = vunpack.c.h.b16 %v105
  %v127 = vunpack.c.l.b16 %v106
  %v128 = vunpack.c.h.b16 %v106
  %v129 = vunpack.c.l.b16 %v107
  %v130 = vunpack.c.h.b16 %v107
  %v131 = vunpack.c.l.b16 %v108
  %v132 = vunpack.c.h.b16 %v108
  %v133 = vpack.c.b16 %v117, %v117
  %v134 = vpack.c.b16 %v118, %v118
  %v135 = vpack.c.b16 %v119, %v119
  %v136 = vpack.c.b16 %v120, %v120
  %v137 = vpack.c.b16 %v121, %v121
  %v138 = vpack.c.b16 %v122, %v122
  %v139 = vpack.c.b16 %v123, %v123
  %v140 = vpack.c.b16 %v124, %v124
  %v141 = vpack.c.b16 %v125, %v125
  %v142 = vpack.c.b16 %v126, %v126
  %v143 = vpack.c.b16 %v127, %v127
  %v144 = vpack.c.b16 %v128, %v128
  %v145 = vpack.c.b16 %v129, %v129
  %v146 = vpack.c.b16 %v130, %v130
  %v147 = vpack.c.b16 %v131, %v131
  %v148 = vpack.c.b16 %v132, %v132
  %165 = vst [vmem:[%s2] sm:$0xf] %v133
  %166 = vst [vmem:[%s2 + $0x4] sm:$0xf] %v134
  %167 = vst [vmem:[%s2 + $0x8] sm:$0xf] %v135
  %168 = vst [vmem:[%s2 + $0xc] sm:$0xf] %v136
  %169 = vst [vmem:[%s2 + $0x10] sm:$0xf] %v137
  %170 = vst [vmem:[%s2 + $0x14] sm:$0xf] %v138
  %171 = vst [vmem:[%s2 + $0x18] sm:$0xf] %v139
  %172 = vst [vmem:[%s2 + $0x1c] sm:$0xf] %v140
  %173 = vst [vmem:[%s2 + $0x20] sm:$0xf] %v141
  %174 = vst [vmem:[%s2 + $0x24] sm:$0xf] %v142
  %175 = vst [vmem:[%s2 + $0x28] sm:$0xf] %v143
  %176 = vst [vmem:[%s2 + $0x2c] sm:$0xf] %v144
  %177 = vst [vmem:[%s2 + $0x30] sm:$0xf] %v145
  %178 = vst [vmem:[%s2 + $0x34] sm:$0xf] %v146
  %179 = vst [vmem:[%s2 + $0x38] sm:$0xf] %v147
  %180 = vst [vmem:[%s2 + $0x3c] sm:$0xf] %v148
  // Predicated region
  $region10: #{bottleneck_forward.10} parent=0 // pred_check
    _
  $region11: #{bottleneck_forward.10} parent=0 // pred_check_branch
    %182 = sbr.rel (0) target = $region13
  $region12: #{bottleneck_forward.10} parent=0 // pred_region
    _
  $region13: #{bottleneck_forward.10} parent=0 // pred_fallthru
    _
  // Predicated region
  $region14: #{bottleneck_forward.10} parent=0 // pred_check
    _
  $region15: #{bottleneck_forward.10} parent=0 // pred_check_branch
    %184 = sbr.rel (0) target = $region17
  $region16: #{bottleneck_forward.10} parent=0 // pred_region
    _
  $region17: #{bottleneck_forward.10} parent=0 // pred_fallthru
    _

// kernel: bottleneck_forward.11
$region0: #{bottleneck_forward.11}
  #allocation0 [shape = 'u32[]', space=smem, size = 0x4, offset = 0x4, fixed_abs, tag = 'smem constant byte address 0x4 - core index']
  #allocation1 [shape = 'u32[144,128]{1,0:T(1,128)}', space=vmem, size = 0x12000, scoped, tag = 'internal scratch']
  #allocation2 [shape = 'f32[128,128]{1,0:T(8,128)}', space=vmem, size = 0x10000, scoped, tag = 'scratch operand']
  %s0 = inlined_call_operand.vmem [shape: bf16[128,128], index: 0, kind: input, shape index: {}]
  %s1 = inlined_call_operand.vmem [shape: bf16[128,128], index: 1, kind: input, shape index: {}]
  %s2 = inlined_call_operand.vmem [shape: bf16[128,128], index: 2, kind: output, shape index: {0}]
  %s3 = inlined_call_operand.vmem [shape: f32[1,2,128], index: 3, kind: output, shape index: {1}]
  %4 = xla_tuple %s2, %s3
  %s5 = sld [smem:[#allocation0]]
  $region34: #{bottleneck_forward.11} parent=0
    _
  %s7 = ssub.s32 1, %s5
  %s8 = scalar_select 0, %s7, %s5
  // Predicated region
  $region2: #{bottleneck_forward.11} parent=0 // pred_check
    _
  $region3: #{bottleneck_forward.11} parent=0 // pred_check_branch
    %10 = sbr.rel (0) target = $region5
  $region4: #{bottleneck_forward.11} parent=0 // pred_region
    _
  $region5: #{bottleneck_forward.11} parent=0 // pred_fallthru
    _
  // Predicated region
  $region6: #{bottleneck_forward.11} parent=0 // pred_check
    _
  $region7: #{bottleneck_forward.11} parent=0 // pred_check_branch
    %12 = sbr.rel (0) target = $region9
  $region8: #{bottleneck_forward.11} parent=0 // pred_region
    _
  $region9: #{bottleneck_forward.11} parent=0 // pred_fallthru
    _
  %p14 = scmp.eq.s32.totalorder 0, 0
  // Predicated region
  $region10: #{bottleneck_forward.11} parent=0 // pred_check
    %p15 = pneg %p14
  $region11: #{bottleneck_forward.11} parent=0 // pred_check_branch
    %17 = sbr.rel (%p15) target = $region13
  $region12: #{bottleneck_forward.11} parent=0 // pred_region
    %18 = vst [vmem:[#allocation2] sm:$0xff] 0.0
    %19 = vst [vmem:[#allocation2 + $0x8] sm:$0xff] 0.0
    %20 = vst [vmem:[#allocation2 + $0x10] sm:$0xff] 0.0
    %21 = vst [vmem:[#allocation2 + $0x18] sm:$0xff] 0.0
    %22 = vst [vmem:[#allocation2 + $0x20] sm:$0xff] 0.0
    %23 = vst [vmem:[#allocation2 + $0x28] sm:$0xff] 0.0
    %24 = vst [vmem:[#allocation2 + $0x30] sm:$0xff] 0.0
    %25 = vst [vmem:[#allocation2 + $0x38] sm:$0xff] 0.0
    %26 = vst [vmem:[#allocation2 + $0x40] sm:$0xff] 0.0
    %27 = vst [vmem:[#allocation2 + $0x48] sm:$0xff] 0.0
    %28 = vst [vmem:[#allocation2 + $0x50] sm:$0xff] 0.0
    %29 = vst [vmem:[#allocation2 + $0x58] sm:$0xff] 0.0
    %30 = vst [vmem:[#allocation2 + $0x60] sm:$0xff] 0.0
    %31 = vst [vmem:[#allocation2 + $0x68] sm:$0xff] 0.0
    %32 = vst [vmem:[#allocation2 + $0x70] sm:$0xff] 0.0
    %33 = vst [vmem:[#allocation2 + $0x78] sm:$0xff] 0.0
  $region13: #{bottleneck_forward.11} parent=0 // pred_fallthru
    _
  %v34 = vld [vmem:[#allocation2] sm:$0xff]
  %v35 = vld [vmem:[#allocation2 + $0x8] sm:$0xff]
  %v36 = vld [vmem:[#allocation2 + $0x10] sm:$0xff]
  %v37 = vld [vmem:[#allocation2 + $0x18] sm:$0xff]
  %v38 = vld [vmem:[#allocation2 + $0x20] sm:$0xff]
  %v39 = vld [vmem:[#allocation2 + $0x28] sm:$0xff]
  %v40 = vld [vmem:[#allocation2 + $0x30] sm:$0xff]
  %v41 = vld [vmem:[#allocation2 + $0x38] sm:$0xff]
  %v42 = vld [vmem:[#allocation2 + $0x40] sm:$0xff]
  %v43 = vld [vmem:[#allocation2 + $0x48] sm:$0xff]
  %v44 = vld [vmem:[#allocation2 + $0x50] sm:$0xff]
  %v45 = vld [vmem:[#allocation2 + $0x58] sm:$0xff]
  %v46 = vld [vmem:[#allocation2 + $0x60] sm:$0xff]
  %v47 = vld [vmem:[#allocation2 + $0x68] sm:$0xff]
  %v48 = vld [vmem:[#allocation2 + $0x70] sm:$0xff]
  %v49 = vld [vmem:[#allocation2 + $0x78] sm:$0xff]
  %v50 = vld [vmem:[%s0] sm:$0xf]
  %v51 = vld [vmem:[%s0 + $0x4] sm:$0xf]
  %v52 = vld [vmem:[%s0 + $0x8] sm:$0xf]
  %v53 = vld [vmem:[%s0 + $0xc] sm:$0xf]
  %v54 = vld [vmem:[%s0 + $0x10] sm:$0xf]
  %v55 = vld [vmem:[%s0 + $0x14] sm:$0xf]
  %v56 = vld [vmem:[%s0 + $0x18] sm:$0xf]
  %v57 = vld [vmem:[%s0 + $0x1c] sm:$0xf]
  %v58 = vld [vmem:[%s0 + $0x20] sm:$0xf]
  %v59 = vld [vmem:[%s0 + $0x24] sm:$0xf]
  %v60 = vld [vmem:[%s0 + $0x28] sm:$0xf]
  %v61 = vld [vmem:[%s0 + $0x2c] sm:$0xf]
  %v62 = vld [vmem:[%s0 + $0x30] sm:$0xf]
  %v63 = vld [vmem:[%s0 + $0x34] sm:$0xf]
  %v64 = vld [vmem:[%s0 + $0x38] sm:$0xf]
  %v65 = vld [vmem:[%s0 + $0x3c] sm:$0xf]
  %v66 = vld [vmem:[%s1] sm:$0xf]
  %v67 = vld [vmem:[%s1 + $0x4] sm:$0xf]
  %v68 = vld [vmem:[%s1 + $0x8] sm:$0xf]
  %v69 = vld [vmem:[%s1 + $0xc] sm:$0xf]
  %v70 = vld [vmem:[%s1 + $0x10] sm:$0xf]
  %v71 = vld [vmem:[%s1 + $0x14] sm:$0xf]
  %v72 = vld [vmem:[%s1 + $0x18] sm:$0xf]
  %v73 = vld [vmem:[%s1 + $0x1c] sm:$0xf]
  %v74 = vld [vmem:[%s1 + $0x20] sm:$0xf]
  %v75 = vld [vmem:[%s1 + $0x24] sm:$0xf]
  %v76 = vld [vmem:[%s1 + $0x28] sm:$0xf]
  %v77 = vld [vmem:[%s1 + $0x2c] sm:$0xf]
  %v78 = vld [vmem:[%s1 + $0x30] sm:$0xf]
  %v79 = vld [vmem:[%s1 + $0x34] sm:$0xf]
  %v80 = vld [vmem:[%s1 + $0x38] sm:$0xf]
  %v81 = vld [vmem:[%s1 + $0x3c] sm:$0xf]
  %v98 = vunpack.c.l.b16 %v50
  %v99 = vunpack.c.l.b16 %v51
  %v100 = vunpack.c.l.b16 %v52
  %v101 = vunpack.c.l.b16 %v53
  %v102 = vunpack.c.l.b16 %v54
  %v103 = vunpack.c.l.b16 %v55
  %v104 = vunpack.c.l.b16 %v56
  %v105 = vunpack.c.l.b16 %v57
  %v106 = vunpack.c.l.b16 %v58
  %v107 = vunpack.c.l.b16 %v59
  %v108 = vunpack.c.l.b16 %v60
  %v109 = vunpack.c.l.b16 %v61
  %v110 = vunpack.c.l.b16 %v62
  %v111 = vunpack.c.l.b16 %v63
  %v112 = vunpack.c.l.b16 %v64
  %v113 = vunpack.c.l.b16 %v65
  %v114 = vpack.c.b16 %v99, %v98
  %v115 = vpack.c.b16 %v101, %v100
  %v116 = vpack.c.b16 %v103, %v102
  %v117 = vpack.c.b16 %v105, %v104
  %v118 = vpack.c.b16 %v107, %v106
  %v119 = vpack.c.b16 %v109, %v108
  %v120 = vpack.c.b16 %v111, %v110
  %v121 = vpack.c.b16 %v113, %v112
  %v146 = vunpack.c.l.b16 %v66
  %v147 = vunpack.c.l.b16 %v67
  %v148 = vunpack.c.l.b16 %v68
  %v149 = vunpack.c.l.b16 %v69
  %v150 = vunpack.c.l.b16 %v70
  %v151 = vunpack.c.l.b16 %v71
  %v152 = vunpack.c.l.b16 %v72
  %v153 = vunpack.c.l.b16 %v73
  %v154 = vunpack.c.l.b16 %v74
  %v155 = vunpack.c.l.b16 %v75
  %v156 = vunpack.c.l.b16 %v76
  %v157 = vunpack.c.l.b16 %v77
  %v158 = vunpack.c.l.b16 %v78
  %v159 = vunpack.c.l.b16 %v79
  %v160 = vunpack.c.l.b16 %v80
  %v161 = vunpack.c.l.b16 %v81
  %v162 = vpack.c.b16 %v147, %v146
  %v163 = vpack.c.b16 %v149, %v148
  %v164 = vpack.c.b16 %v151, %v150
  %v165 = vpack.c.b16 %v153, %v152
  %v166 = vpack.c.b16 %v155, %v154
  %v167 = vpack.c.b16 %v157, %v156
  %v168 = vpack.c.b16 %v159, %v158
  %v169 = vpack.c.b16 %v161, %v160
  %178 = vmatprep.subr.bf16.mxu0 0
  %179 = vmatpush1.bf16.msra.mxu0 %v162
  %180 = vmatprep.subr.bf16.mxu0 0
  %181 = vmatpush1.bf16.msra.mxu0 %v163
  %182 = vmatprep.subr.bf16.mxu0 0
  %183 = vmatpush1.bf16.msra.mxu0 %v164
  %184 = vmatprep.subr.bf16.mxu0 0
  %185 = vmatpush1.bf16.msra.mxu0 %v165
  %186 = vmatprep.subr.bf16.mxu0 0
  %187 = vmatpush1.bf16.msra.mxu0 %v166
  %188 = vmatprep.subr.bf16.mxu0 0
  %189 = vmatpush1.bf16.msra.mxu0 %v167
  %190 = vmatprep.subr.bf16.mxu0 0
  %191 = vmatpush1.bf16.msra.mxu0 %v168
  %192 = vmatprep.subr.bf16.mxu0 0
  %193 = vmatpush1.bf16.msra.mxu0 %v169
  %194 = vmatprep.subr.bf16.mxu0 0
  %195 = vmatpush1.bf16.msra.mxu0 0
  %196 = vmatprep.subr.bf16.mxu0 0
  %197 = vmatpush1.bf16.msra.mxu0 0
  %198 = vmatprep.subr.bf16.mxu0 0
  %199 = vmatpush1.bf16.msra.mxu0 0
  %200 = vmatprep.subr.bf16.mxu0 0
  %201 = vmatpush1.bf16.msra.mxu0 0
  %202 = vmatprep.subr.bf16.mxu0 0
  %203 = vmatpush1.bf16.msra.mxu0 0
  %204 = vmatprep.subr.bf16.mxu0 0
  %205 = vmatpush1.bf16.msra.mxu0 0
  %206 = vmatprep.subr.bf16.mxu0 0
  %207 = vmatpush1.bf16.msra.mxu0 0
  %208 = vmatprep.subr.bf16.mxu0 0
  %209 = vmatpush1.bf16.msra.mxu0 0
  %210 = vmatprep.mubr.bf16.mxu0 0
  %211 = vmatmul.mubr.bf16.gmra.mrb[0].mxu0 %v114
  %v212 = vpop.f32.mrb[0].mxu0
  %v213 = vadd.f32 0.0, %v212
  %v214 = vpop.f32.mrb[0].mxu0
  %v215 = vpop.f32.mrb[0].mxu0
  %v216 = vadd.f32 0.0, %v215
  %v217 = vpop.f32.mrb[0].mxu0
  %218 = vmatprep.mubr.bf16.mxu0 0
  %219 = vmatmul.mubr.bf16.gmra.mrb[0].mxu0 %v115
  %v220 = vpop.f32.mrb[0].mxu0
  %v221 = vadd.f32 0.0, %v220
  %v222 = vpop.f32.mrb[0].mxu0
  %v223 = vpop.f32.mrb[0].mxu0
  %v224 = vadd.f32 0.0, %v223
  %v225 = vpop.f32.mrb[0].mxu0
  %226 = vmatprep.mubr.bf16.mxu0 0
  %227 = vmatmul.mubr.bf16.gmra.mrb[0].mxu0 %v116
  %v228 = vpop.f32.mrb[0].mxu0
  %v229 = vadd.f32 0.0, %v228
  %v230 = vpop.f32.mrb[0].mxu0
  %v231 = vpop.f32.mrb[0].mxu0
  %v232 = vadd.f32 0.0, %v231
  %v233 = vpop.f32.mrb[0].mxu0
  %234 = vmatprep.mubr.bf16.mxu0 0
  %235 = vmatmul.mubr.bf16.gmra.mrb[0].mxu0 %v117
  %v236 = vpop.f32.mrb[0].mxu0
  %v237 = vadd.f32 0.0, %v236
  %v238 = vpop.f32.mrb[0].mxu0
  %v239 = vpop.f32.mrb[0].mxu0
  %v240 = vadd.f32 0.0, %v239
  %v241 = vpop.f32.mrb[0].mxu0
  %242 = vmatprep.mubr.bf16.mxu0 0
  %243 = vmatmul.mubr.bf16.gmra.mrb[0].mxu0 %v118
  %v244 = vpop.f32.mrb[0].mxu0
  %v245 = vadd.f32 0.0, %v244
  %v246 = vpop.f32.mrb[0].mxu0
  %v247 = vpop.f32.mrb[0].mxu0
  %v248 = vadd.f32 0.0, %v247
  %v249 = vpop.f32.mrb[0].mxu0
  %250 = vmatprep.mubr.bf16.mxu0 0
  %251 = vmatmul.mubr.bf16.gmra.mrb[0].mxu0 %v119
  %v252 = vpop.f32.mrb[0].mxu0
  %v253 = vadd.f32 0.0, %v252
  %v254 = vpop.f32.mrb[0].mxu0
  %v255 = vpop.f32.mrb[0].mxu0
  %v256 = vadd.f32 0.0, %v255
  %v257 = vpop.f32.mrb[0].mxu0
  %258 = vmatprep.mubr.bf16.mxu0 0
  %259 = vmatmul.mubr.bf16.gmra.mrb[0].mxu0 %v120
  %v260 = vpop.f32.mrb[0].mxu0
  %v261 = vadd.f32 0.0, %v260
  %v262 = vpop.f32.mrb[0].mxu0
  %v263 = vpop.f32.mrb[0].mxu0
  %v264 = vadd.f32 0.0, %v263
  %v265 = vpop.f32.mrb[0].mxu0
  %266 = vmatprep.mubr.bf16.mxu0 0
  %267 = vmatmul.mubr.bf16.gmra.mrb[0].mxu0 %v121
  %v268 = vpop.f32.mrb[0].mxu0
  %v269 = vadd.f32 0.0, %v268
  %v270 = vpop.f32.mrb[0].mxu0
  %v271 = vpop.f32.mrb[0].mxu0
  %v272 = vadd.f32 0.0, %v271
  %v273 = vpop.f32.mrb[0].mxu0
  %274 = vdwg.mxu0
  %v275 = vadd.f32 %v34, %v213
  %v276 = vadd.f32 %v35, %v216
  %v277 = vadd.f32 %v36, %v221
  %v278 = vadd.f32 %v37, %v224
  %v279 = vadd.f32 %v38, %v229
  %v280 = vadd.f32 %v39, %v232
  %v281 = vadd.f32 %v40, %v237
  %v282 = vadd.f32 %v41, %v240
  %v283 = vadd.f32 %v42, %v245
  %v284 = vadd.f32 %v43, %v248
  %v285 = vadd.f32 %v44, %v253
  %v286 = vadd.f32 %v45, %v256
  %v287 = vadd.f32 %v46, %v261
  %v288 = vadd.f32 %v47, %v264
  %v289 = vadd.f32 %v48, %v269
  %v290 = vadd.f32 %v49, %v272
  %291 = vst [vmem:[#allocation2] sm:$0xff] %v275
  %292 = vst [vmem:[#allocation2 + $0x8] sm:$0xff] %v276
  %293 = vst [vmem:[#allocation2 + $0x10] sm:$0xff] %v277
  %294 = vst [vmem:[#allocation2 + $0x18] sm:$0xff] %v278
  %295 = vst [vmem:[#allocation2 + $0x20] sm:$0xff] %v279
  %296 = vst [vmem:[#allocation2 + $0x28] sm:$0xff] %v280
  %297 = vst [vmem:[#allocation2 + $0x30] sm:$0xff] %v281
  %298 = vst [vmem:[#allocation2 + $0x38] sm:$0xff] %v282
  %299 = vst [vmem:[#allocation2 + $0x40] sm:$0xff] %v283
  %300 = vst [vmem:[#allocation2 + $0x48] sm:$0xff] %v284
  %301 = vst [vmem:[#allocation2 + $0x50] sm:$0xff] %v285
  %302 = vst [vmem:[#allocation2 + $0x58] sm:$0xff] %v286
  %303 = vst [vmem:[#allocation2 + $0x60] sm:$0xff] %v287
  %304 = vst [vmem:[#allocation2 + $0x68] sm:$0xff] %v288
  %305 = vst [vmem:[#allocation2 + $0x70] sm:$0xff] %v289
  %306 = vst [vmem:[#allocation2 + $0x78] sm:$0xff] %v290
  // Predicated region
  $region14: #{bottleneck_forward.11} parent=0 // pred_check
    %p307 = pneg %p14
  $region15: #{bottleneck_forward.11} parent=0 // pred_check_branch
    %309 = sbr.rel (%p307) target = $region17
  $region16: #{bottleneck_forward.11} parent=0 // pred_region
    %v310 = vld [vmem:[#allocation2] sm:$0xff]
    %v311 = vld [vmem:[#allocation2 + $0x8] sm:$0xff]
    %v312 = vld [vmem:[#allocation2 + $0x10] sm:$0xff]
    %v313 = vld [vmem:[#allocation2 + $0x18] sm:$0xff]
    %v314 = vld [vmem:[#allocation2 + $0x20] sm:$0xff]
    %v315 = vld [vmem:[#allocation2 + $0x28] sm:$0xff]
    %v316 = vld [vmem:[#allocation2 + $0x30] sm:$0xff]
    %v317 = vld [vmem:[#allocation2 + $0x38] sm:$0xff]
    %v318 = vld [vmem:[#allocation2 + $0x40] sm:$0xff]
    %v319 = vld [vmem:[#allocation2 + $0x48] sm:$0xff]
    %v320 = vld [vmem:[#allocation2 + $0x50] sm:$0xff]
    %v321 = vld [vmem:[#allocation2 + $0x58] sm:$0xff]
    %v322 = vld [vmem:[#allocation2 + $0x60] sm:$0xff]
    %v323 = vld [vmem:[#allocation2 + $0x68] sm:$0xff]
    %v324 = vld [vmem:[#allocation2 + $0x70] sm:$0xff]
    %v325 = vld [vmem:[#allocation2 + $0x78] sm:$0xff]
    %v326 = vpack.c.bf16 %v311, %v310
    %v327 = vpack.c.bf16 %v313, %v312
    %v328 = vpack.c.bf16 %v315, %v314
    %v329 = vpack.c.bf16 %v317, %v316
    %v330 = vpack.c.bf16 %v319, %v318
    %v331 = vpack.c.bf16 %v321, %v320
    %v332 = vpack.c.bf16 %v323, %v322
    %v333 = vpack.c.bf16 %v325, %v324
    %v342 = vunpack.c.l.b16 %v326
    %v343 = vunpack.c.h.b16 %v326
    %v344 = vunpack.c.l.b16 %v327
    %v345 = vunpack.c.h.b16 %v327
    %v346 = vunpack.c.l.b16 %v328
    %v347 = vunpack.c.h.b16 %v328
    %v348 = vunpack.c.l.b16 %v329
    %v349 = vunpack.c.h.b16 %v329
    %v350 = vunpack.c.l.b16 %v330
    %v351 = vunpack.c.h.b16 %v330
    %v352 = vunpack.c.l.b16 %v331
    %v353 = vunpack.c.h.b16 %v331
    %v354 = vunpack.c.l.b16 %v332
    %v355 = vunpack.c.h.b16 %v332
    %v356 = vunpack.c.l.b16 %v333
    %v357 = vunpack.c.h.b16 %v333
    %v358 = vpack.c.b16 %v342, %v342
    %v359 = vpack.c.b16 %v343, %v343
    %v360 = vpack.c.b16 %v344, %v344
    %v361 = vpack.c.b16 %v345, %v345
    %v362 = vpack.c.b16 %v346, %v346
    %v363 = vpack.c.b16 %v347, %v347
    %v364 = vpack.c.b16 %v348, %v348
    %v365 = vpack.c.b16 %v349, %v349
    %v366 = vpack.c.b16 %v350, %v350
    %v367 = vpack.c.b16 %v351, %v351
    %v368 = vpack.c.b16 %v352, %v352
    %v369 = vpack.c.b16 %v353, %v353
    %v370 = vpack.c.b16 %v354, %v354
    %v371 = vpack.c.b16 %v355, %v355
    %v372 = vpack.c.b16 %v356, %v356
    %v373 = vpack.c.b16 %v357, %v357
    %390 = vst [vmem:[%s2] sm:$0xf] %v358
    %391 = vst [vmem:[%s2 + $0x4] sm:$0xf] %v359
    %392 = vst [vmem:[%s2 + $0x8] sm:$0xf] %v360
    %393 = vst [vmem:[%s2 + $0xc] sm:$0xf] %v361
    %394 = vst [vmem:[%s2 + $0x10] sm:$0xf] %v362
    %395 = vst [vmem:[%s2 + $0x14] sm:$0xf] %v363
    %396 = vst [vmem:[%s2 + $0x18] sm:$0xf] %v364
    %397 = vst [vmem:[%s2 + $0x1c] sm:$0xf] %v365
    %398 = vst [vmem:[%s2 + $0x20] sm:$0xf] %v366
    %399 = vst [vmem:[%s2 + $0x24] sm:$0xf] %v367
    %400 = vst [vmem:[%s2 + $0x28] sm:$0xf] %v368
    %401 = vst [vmem:[%s2 + $0x2c] sm:$0xf] %v369
    %402 = vst [vmem:[%s2 + $0x30] sm:$0xf] %v370
    %403 = vst [vmem:[%s2 + $0x34] sm:$0xf] %v371
    %404 = vst [vmem:[%s2 + $0x38] sm:$0xf] %v372
    %405 = vst [vmem:[%s2 + $0x3c] sm:$0xf] %v373
    %v406 = vadd.f32 %v310, %v311
    %v407 = vadd.f32 %v406, %v312
    %v408 = vadd.f32 %v407, %v313
    %v409 = vadd.f32 %v408, %v314
    %v410 = vadd.f32 %v409, %v315
    %v411 = vadd.f32 %v410, %v316
    %v412 = vadd.f32 %v411, %v317
    %v413 = vadd.f32 %v412, %v318
    %v414 = vadd.f32 %v413, %v319
    %v415 = vadd.f32 %v414, %v320
    %v416 = vadd.f32 %v415, %v321
    %v417 = vadd.f32 %v416, %v322
    %v418 = vadd.f32 %v417, %v323
    %v419 = vadd.f32 %v418, %v324
    %v420 = vadd.f32 %v419, %v325
    %v421 = vrot.slane %v420, 4
    %v422 = vadd.f32 %v420, %v421
    %v423 = vrot.slane %v422, 2
    %v424 = vadd.f32 %v422, %v423
    %v425 = vrot.slane %v424, 1
    %v426 = vadd.f32 %v424, %v425
    %427 = vst [vmem:[%s3] sm:$0x1] %v426
    %v428 = vmul.f32 %v310, %v310
    %v429 = vmul.f32 %v311, %v311
    %v430 = vmul.f32 %v312, %v312
    %v431 = vmul.f32 %v313, %v313
    %v432 = vmul.f32 %v314, %v314
    %v433 = vmul.f32 %v315, %v315
    %v434 = vmul.f32 %v316, %v316
    %v435 = vmul.f32 %v317, %v317
    %v436 = vmul.f32 %v318, %v318
    %v437 = vmul.f32 %v319, %v319
    %v438 = vmul.f32 %v320, %v320
    %v439 = vmul.f32 %v321, %v321
    %v440 = vmul.f32 %v322, %v322
    %v441 = vmul.f32 %v323, %v323
    %v442 = vmul.f32 %v324, %v324
    %v443 = vmul.f32 %v325, %v325
    %v444 = vadd.f32 %v428, %v429
    %v445 = vadd.f32 %v444, %v430
    %v446 = vadd.f32 %v445, %v431
    %v447 = vadd.f32 %v446, %v432
    %v448 = vadd.f32 %v447, %v433
    %v449 = vadd.f32 %v448, %v434
    %v450 = vadd.f32 %v449, %v435
    %v451 = vadd.f32 %v450, %v436
    %v452 = vadd.f32 %v451, %v437
    %v453 = vadd.f32 %v452, %v438
    %v454 = vadd.f32 %v453, %v439
    %v455 = vadd.f32 %v454, %v440
    %v456 = vadd.f32 %v455, %v441
    %v457 = vadd.f32 %v456, %v442
    %v458 = vadd.f32 %v457, %v443
    %v459 = vrot.slane %v458, 4
    %v460 = vadd.f32 %v458, %v459
    %v461 = vrot.slane %v460, 2
    %v462 = vadd.f32 %v460, %v461
    %v463 = vrot.slane %v462, 1
    %v464 = vadd.f32 %v462, %v463
    %465 = vst [vmem:[%s3 + $0x1] sm:$0x1] %v464
  $region17: #{bottleneck_forward.11} parent=0 // pred_fallthru
    _
  // Predicated region
  $region18: #{bottleneck_forward.11} parent=0 // pred_check
    _
  $region19: #{bottleneck_forward.11} parent=0 // pred_check_branch
    %467 = sbr.rel (0) target = $region21
  $region20: #{bottleneck_forward.11} parent=0 // pred_region
    _
  $region21: #{bottleneck_forward.11} parent=0 // pred_fallthru
    _
  // Predicated region
  $region22: #{bottleneck_forward.11} parent=0 // pred_check
    _
  $region23: #{bottleneck_forward.11} parent=0 // pred_check_branch
    %469 = sbr.rel (0) target = $region25
  $region24: #{bottleneck_forward.11} parent=0 // pred_region
    _
  $region25: #{bottleneck_forward.11} parent=0 // pred_fallthru
    _
  // Predicated region
  $region26: #{bottleneck_forward.11} parent=0 // pred_check
    _
  $region27: #{bottleneck_forward.11} parent=0 // pred_check_branch
    %471 = sbr.rel (0) target = $region29
  $region28: #{bottleneck_forward.11} parent=0 // pred_region
    _
  $region29: #{bottleneck_forward.11} parent=0 // pred_fallthru
    _
  // Predicated region
  $region30: #{bottleneck_forward.11} parent=0 // pred_check
    _
  $region31: #{bottleneck_forward.11} parent=0 // pred_check_branch
    %473 = sbr.rel (0) target = $region33
  $region32: #{bottleneck_forward.11} parent=0 // pred_region
    _
  $region33: #{bottleneck_forward.11} parent=0 // pred_fallthru
    _

// kernel: bottleneck_forward.9
$region0: #{bottleneck_forward.9}
  #allocation0 [shape = 'u32[]', space=smem, size = 0x4, offset = 0x4, fixed_abs, tag = 'smem constant byte address 0x4 - core index']
  #allocation1 [shape = 'u32[144,128]{1,0:T(1,128)}', space=vmem, size = 0x12000, scoped, tag = 'internal scratch']
  #allocation2 [shape = 'f32[64,128]{1,0:T(8,128)}', space=vmem, size = 0x8000, scoped, tag = 'scratch operand']
  %s0 = inlined_call_operand.vmem [shape: bf16[2,4,9,9,128], index: 0, kind: input, shape index: {}]
  %s1 = inlined_call_operand.vmem [shape: bf16[9,128,128], index: 1, kind: input, shape index: {}]
  %s2 = inlined_call_operand.vmem [shape: bf16[2,64,128], index: 2, kind: output, shape index: {0}]
  %s3 = inlined_call_operand.vmem [shape: f32[2,2,128], index: 3, kind: output, shape index: {1}]
  %4 = xla_tuple %s2, %s3
  %s5 = sld [smem:[#allocation0]]
  $region49: #{bottleneck_forward.9} parent=0
    _
  %s7 = ssub.s32 1, %s5
  %s8 = scalar_select 0, %s7, %s5
  loop: start=0, step=1, limit=4
  $region2: #{bottleneck_forward.9} parent=0 // loop_pre_header
    _
  $region3: #{bottleneck_forward.9} parent=0 // loop_header
    %s10 = sphi 0, %s14
    %p11 = scmp.ge.s32.totalorder %s10, 4
    %s20 = sphi 0, %s22
    %s23 = sphi 0, %s20
    %s24 = sphi 0, %s23
    %s40 = sphi 0, %s24
    %s44 = sphi 0, %s44
    %s46 = sphi 0, %s44
    %s47 = sphi 0, %s46
    %s61 = sphi 0, %s47
    %s67 = sphi 0, %s69
    %s70 = sphi 0, %s67
    %s71 = sphi 0, %s70
    %s87 = sphi 0, %s71
    %s93 = sphi 0, %s95
    %s96 = sphi 0, %s93
    %s97 = sphi 0, %s96
    %s113 = sphi 0, %s97
  $region4: #{bottleneck_forward.9} parent=0 // loop_header_branch
    %13 = sbr.rel (%p11) target = $region8
  $region5: #{bottleneck_forward.9} parent=0 // loop_body
    %s15 = ssub.s32 %s10, 1
    %s16 = ssub.s32 %s10, 2
    %s17 = sadd.s32 %s10, 1
    %s18 = ssub.s32 %s10, %s17
    %p19 = scmp.eq.s32.totalorder %s18, 0
    %s21 = sadd.s32 %s20, 1
    %s22 = scalar_select %p19, %s20, %s21
    %p25 = pneg %p19
    %p26 = scmp.eq.s32.totalorder %s10, 1
    %p27 = por %p25, %p26
    %p28 = scmp.ne.s32.totalorder %s20, %s23
    %p29 = scmp.eq.s32.totalorder %s10, 0
    %p30 = por %p28, %p29
    %p31 = scmp.ne.s32.totalorder %s20, %s23
    %p32 = scmp.eq.s32.totalorder %s15, 1
    %p33 = por %p31, %p32
    %p34 = scmp.ne.s32.totalorder %s23, %s24
    %p35 = scmp.eq.s32.totalorder %s15, 0
    %p36 = por %p34, %p35
    %p37 = scmp.ne.s32.totalorder %s23, %s24
    %p38 = scmp.eq.s32.totalorder %s16, 1
    %p39 = por %p37, %p38
    %p41 = scmp.ne.s32.totalorder %s24, %s40
    %p42 = scmp.eq.s32.totalorder %s16, 0
    %p43 = por %p41, %p42
    %s45 = sadd.s32 %s44, 1
    %p48 = scmp.eq.s32.totalorder %s10, 1
    %p49 = scmp.ne.s32.totalorder %s44, %s46
    %p50 = scmp.eq.s32.totalorder %s10, 0
    %p51 = por %p49, %p50
    %p52 = scmp.ne.s32.totalorder %s44, %s46
    %p53 = scmp.eq.s32.totalorder %s15, 1
    %p54 = por %p52, %p53
    %p55 = scmp.ne.s32.totalorder %s46, %s47
    %p56 = scmp.eq.s32.totalorder %s15, 0
    %p57 = por %p55, %p56
    %p58 = scmp.ne.s32.totalorder %s46, %s47
    %p59 = scmp.eq.s32.totalorder %s16, 1
    %p60 = por %p58, %p59
    %p62 = scmp.ne.s32.totalorder %s47, %s61
    %p63 = scmp.eq.s32.totalorder %s16, 0
    %p64 = por %p62, %p63
    %s65 = ssub.s32 %s10, %s17
    %p66 = scmp.eq.s32.totalorder %s65, 0
    %s68 = sadd.s32 %s67, 1
    %s69 = scalar_select %p66, %s67, %s68
    %p72 = pneg %p66
    %p73 = scmp.eq.s32.totalorder %s10, 1
    %p74 = por %p72, %p73
    %p75 = scmp.ne.s32.totalorder %s67, %s70
    %p76 = scmp.eq.s32.totalorder %s10, 0
    %p77 = por %p75, %p76
    %p78 = scmp.ne.s32.totalorder %s67, %s70
    %p79 = scmp.eq.s32.totalorder %s15, 1
    %p80 = por %p78, %p79
    %p81 = scmp.ne.s32.totalorder %s70, %s71
    %p82 = scmp.eq.s32.totalorder %s15, 0
    %p83 = por %p81, %p82
    %p84 = scmp.ne.s32.totalorder %s70, %s71
    %p85 = scmp.eq.s32.totalorder %s16, 1
    %p86 = por %p84, %p85
    %p88 = scmp.ne.s32.totalorder %s71, %s87
    %p89 = scmp.eq.s32.totalorder %s16, 0
    %p90 = por %p88, %p89
    %s91 = ssub.s32 %s10, %s17
    %p92 = scmp.eq.s32.totalorder %s91, 0
    %s94 = sadd.s32 %s93, 1
    %s95 = scalar_select %p92, %s93, %s94
    %p98 = pneg %p92
    %p99 = scmp.eq.s32.totalorder %s10, 1
    %p100 = por %p98, %p99
    %p101 = scmp.ne.s32.totalorder %s93, %s96
    %p102 = scmp.eq.s32.totalorder %s10, 0
    %p103 = por %p101, %p102
    %p104 = scmp.ne.s32.totalorder %s93, %s96
    %p105 = scmp.eq.s32.totalorder %s15, 1
    %p106 = por %p104, %p105
    %p107 = scmp.ne.s32.totalorder %s96, %s97
    %p108 = scmp.eq.s32.totalorder %s15, 0
    %p109 = por %p107, %p108
    %p110 = scmp.ne.s32.totalorder %s96, %s97
    %p111 = scmp.eq.s32.totalorder %s16, 1
    %p112 = por %p110, %p111
    %p114 = scmp.ne.s32.totalorder %s97, %s113
    %p115 = scmp.eq.s32.totalorder %s16, 0
    %p116 = por %p114, %p115
    %p117 = scmp.le.s32.totalorder 1, %s10
    %p118 = scmp.lt.s32.totalorder %s10, 3
    %p119 = pnand %p117, %p118
    %p120 = pneg %p119
    // Predicated region
    $region9: #{bottleneck_forward.9} parent=5 // pred_check
      _
    $region10: #{bottleneck_forward.9} parent=5 // pred_check_branch
      %122 = sbr.rel (%p119) target = $region12
    $region11: #{bottleneck_forward.9} parent=5 // pred_region
      %s123 = ssub.s32 %s10, 1
      // Predicated region
      $region13: #{bottleneck_forward.9} parent=11 // pred_check
        %p124 = pneg %p57
      $region14: #{bottleneck_forward.9} parent=11 // pred_check_branch
        %126 = sbr.rel (%p124) target = $region16
      $region15: #{bottleneck_forward.9} parent=11 // pred_region
        _
      $region16: #{bottleneck_forward.9} parent=11 // pred_fallthru
        _
    $region12: #{bottleneck_forward.9} parent=5 // pred_fallthru
      _
    %p127 = scmp.lt.s32.totalorder %s10, 2
    // Predicated region
    $region17: #{bottleneck_forward.9} parent=5 // pred_check
      %p128 = pneg %p127
    $region18: #{bottleneck_forward.9} parent=5 // pred_check_branch
      %130 = sbr.rel (%p128) target = $region20
    $region19: #{bottleneck_forward.9} parent=5 // pred_region
      // Predicated region
      $region21: #{bottleneck_forward.9} parent=19 // pred_check
        %p131 = pneg %p30
      $region22: #{bottleneck_forward.9} parent=19 // pred_check_branch
        %133 = sbr.rel (%p131) target = $region24
      $region23: #{bottleneck_forward.9} parent=19 // pred_region
        %p134 = scmp.lt.s32.totalorder %s10, 1
        %s135 = scalar_select %p134, %s10, 1
        %s136 = smul.addr %s135, 72
        %s137 = smul.addr %s136, 4
        %s138 = scalar_lea.vmem %s0, %s137
      $region24: #{bottleneck_forward.9} parent=19 // pred_fallthru
        _
    $region20: #{bottleneck_forward.9} parent=5 // pred_fallthru
      _
    %p139 = scmp.le.s32.totalorder 1, %s10
    %p140 = scmp.lt.s32.totalorder %s10, 3
    %p141 = pnand %p139, %p140
    %p142 = pneg %p141
    // Predicated region
    $region25: #{bottleneck_forward.9} parent=5 // pred_check
      _
    $region26: #{bottleneck_forward.9} parent=5 // pred_check_branch
      %144 = sbr.rel (%p141) target = $region28
    $region27: #{bottleneck_forward.9} parent=5 // pred_region
      %s145 = ssub.s32 %s10, 1
      %p146 = scmp.lt.s32.totalorder %s15, 1
      %s147 = scalar_select %p146, %s15, 1
      %s148 = smul.addr %s147, 72
      %s149 = smul.addr %s148, 4
      %s150 = scalar_lea.vmem %s0, %s149
      %p151 = pneg %p36
      %p152 = pneg %p33
      %p153 = pneg %p57
      %p154 = pneg %p54
      %p155 = pneg %p83
      %p156 = pneg %p80
      %p157 = scmp.lt.s32.totalorder %s15, 1
      %s158 = scalar_select %p157, %s15, 1
      %s159 = smul.addr %s158, 8
      %s160 = smul.addr %s159, 4
      %s161 = scalar_lea.vmem %s2, %s160
      %p162 = pneg %p109
      %p163 = pneg %p106
      %p164 = scmp.lt.s32.totalorder %s15, 1
      %s165 = scalar_select %p164, %s15, 1
      %s166 = smul.addr %s165, 2
      %s167 = scalar_lea.vmem %s3, %s166
      %p168 = scmp.lt.s32.totalorder %s15, 1
      %s169 = scalar_select %p168, %s15, 1
      %s170 = smul.addr %s169, 72
      %s171 = smul.addr %s170, 4
      %s172 = scalar_lea.vmem %s0, %s171
      %p173 = scmp.lt.s32.totalorder %s15, 1
      %s174 = scalar_select %p173, %s15, 1
      %s175 = smul.addr %s174, 8
      %s176 = smul.addr %s175, 4
      %s177 = scalar_lea.vmem %s2, %s176
      %p178 = scmp.lt.s32.totalorder %s15, 1
      %s179 = scalar_select %p178, %s15, 1
      %s180 = smul.addr %s179, 2
      %s181 = scalar_lea.vmem %s3, %s180
      %183 = vst [vmem:[#allocation2] sm:$0xff] 0.0
      %184 = vst [vmem:[#allocation2 + $0x8] sm:$0xff] 0.0
      %185 = vst [vmem:[#allocation2 + $0x10] sm:$0xff] 0.0
      %186 = vst [vmem:[#allocation2 + $0x18] sm:$0xff] 0.0
      %187 = vst [vmem:[#allocation2 + $0x20] sm:$0xff] 0.0
      %188 = vst [vmem:[#allocation2 + $0x28] sm:$0xff] 0.0
      %189 = vst [vmem:[#allocation2 + $0x30] sm:$0xff] 0.0
      %190 = vst [vmem:[#allocation2 + $0x38] sm:$0xff] 0.0
      %v191 = vld [vmem:[%s172] sm:$0xf]
      %v192 = vld [vmem:[%s172 + $0x8] sm:$0xf]
      %v193 = vld [vmem:[%s172 + $0x10] sm:$0xf]
      %v194 = vld [vmem:[%s172 + $0x18] sm:$0xf]
      %v195 = vld [vmem:[%s172 + $0x20] sm:$0xf]
      %v196 = vld [vmem:[%s172 + $0x28] sm:$0xf]
      %v197 = vld [vmem:[%s172 + $0x30] sm:$0xf]
      %v198 = vld [vmem:[%s172 + $0x38] sm:$0xf]
      %v199 = vld [vmem:[#allocation2] sm:$0xff]
      %v200 = vld [vmem:[#allocation2 + $0x8] sm:$0xff]
      %v201 = vld [vmem:[#allocation2 + $0x10] sm:$0xff]
      %v202 = vld [vmem:[#allocation2 + $0x18] sm:$0xff]
      %v203 = vld [vmem:[#allocation2 + $0x20] sm:$0xff]
      %v204 = vld [vmem:[#allocation2 + $0x28] sm:$0xff]
      %v205 = vld [vmem:[#allocation2 + $0x30] sm:$0xff]
      %v206 = vld [vmem:[#allocation2 + $0x38] sm:$0xff]
      %v207 = vld [vmem:[%s1] sm:$0xf]
      %v208 = vld [vmem:[%s1 + $0x4] sm:$0xf]
      %v209 = vld [vmem:[%s1 + $0x8] sm:$0xf]
      %v210 = vld [vmem:[%s1 + $0xc] sm:$0xf]
      %v211 = vld [vmem:[%s1 + $0x10] sm:$0xf]
      %v212 = vld [vmem:[%s1 + $0x14] sm:$0xf]
      %v213 = vld [vmem:[%s1 + $0x18] sm:$0xf]
      %v214 = vld [vmem:[%s1 + $0x1c] sm:$0xf]
      %v215 = vld [vmem:[%s1 + $0x20] sm:$0xf]
      %v216 = vld [vmem:[%s1 + $0x24] sm:$0xf]
      %v217 = vld [vmem:[%s1 + $0x28] sm:$0xf]
      %v218 = vld [vmem:[%s1 + $0x2c] sm:$0xf]
      %v219 = vld [vmem:[%s1 + $0x30] sm:$0xf]
      %v220 = vld [vmem:[%s1 + $0x34] sm:$0xf]
      %v221 = vld [vmem:[%s1 + $0x38] sm:$0xf]
      %v222 = vld [vmem:[%s1 + $0x3c] sm:$0xf]
      %v231 = vunpack.c.l.b16 %v191
      %v232 = vunpack.c.l.b16 %v192
      %v233 = vunpack.c.l.b16 %v193
      %v234 = vunpack.c.l.b16 %v194
      %v235 = vunpack.c.l.b16 %v195
      %v236 = vunpack.c.l.b16 %v196
      %v237 = vunpack.c.l.b16 %v197
      %v238 = vunpack.c.l.b16 %v198
      %v239 = vpack.c.b16 %v232, %v231
      %v240 = vpack.c.b16 %v234, %v233
      %v241 = vpack.c.b16 %v236, %v235
      %v242 = vpack.c.b16 %v238, %v237
      %v263 = vunpack.c.l.b16 %v207
      %v264 = vunpack.c.l.b16 %v208
      %v265 = vunpack.c.l.b16 %v209
      %v266 = vunpack.c.l.b16 %v210
      %v267 = vunpack.c.l.b16 %v211
      %v268 = vunpack.c.l.b16 %v212
      %v269 = vunpack.c.l.b16 %v213
      %v270 = vunpack.c.l.b16 %v214
      %v271 = vunpack.c.l.b16 %v215
      %v272 = vunpack.c.l.b16 %v216
      %v273 = vunpack.c.l.b16 %v217
      %v274 = vunpack.c.l.b16 %v218
      %v275 = vunpack.c.l.b16 %v219
      %v276 = vunpack.c.l.b16 %v220
      %v277 = vunpack.c.l.b16 %v221
      %v278 = vunpack.c.l.b16 %v222
      %v279 = vpack.c.b16 %v264, %v263
      %v280 = vpack.c.b16 %v266, %v265
      %v281 = vpack.c.b16 %v268, %v267
      %v282 = vpack.c.b16 %v270, %v269
      %v283 = vpack.c.b16 %v272, %v271
      %v284 = vpack.c.b16 %v274, %v273
      %v285 = vpack.c.b16 %v276, %v275
      %v286 = vpack.c.b16 %v278, %v277
      %295 = vmatprep.subr.bf16.mxu0 0
      %296 = vmatpush1.bf16.msra.mxu0 %v279
      %297 = vmatprep.subr.bf16.mxu0 0
      %298 = vmatpush1.bf16.msra.mxu0 %v280
      %299 = vmatprep.subr.bf16.mxu0 0
      %300 = vmatpush1.bf16.msra.mxu0 %v281
      %301 = vmatprep.subr.bf16.mxu0 0
      %302 = vmatpush1.bf16.msra.mxu0 %v282
      %303 = vmatprep.subr.bf16.mxu0 0
      %304 = vmatpush1.bf16.msra.mxu0 %v283
      %305 = vmatprep.subr.bf16.mxu0 0
      %306 = vmatpush1.bf16.msra.mxu0 %v284
      %307 = vmatprep.subr.bf16.mxu0 0
      %308 = vmatpush1.bf16.msra.mxu0 %v285
      %309 = vmatprep.subr.bf16.mxu0 0
      %310 = vmatpush1.bf16.msra.mxu0 %v286
      %311 = vmatprep.subr.bf16.mxu0 0
      %312 = vmatpush1.bf16.msra.mxu0 0
      %313 = vmatprep.subr.bf16.mxu0 0
      %314 = vmatpush1.bf16.msra.mxu0 0
      %315 = vmatprep.subr.bf16.mxu0 0
      %316 = vmatpush1.bf16.msra.mxu0 0
      %317 = vmatprep.subr.bf16.mxu0 0
      %318 = vmatpush1.bf16.msra.mxu0 0
      %319 = vmatprep.subr.bf16.mxu0 0
      %320 = vmatpush1.bf16.msra.mxu0 0
      %321 = vmatprep.subr.bf16.mxu0 0
      %322 = vmatpush1.bf16.msra.mxu0 0
      %323 = vmatprep.subr.bf16.mxu0 0
      %324 = vmatpush1.bf16.msra.mxu0 0
      %325 = vmatprep.subr.bf16.mxu0 0
      %326 = vmatpush1.bf16.msra.mxu0 0
      %327 = vmatprep.mubr.bf16.mxu0 0
      %328 = vmatmul.mubr.bf16.gmra.mrb[0].mxu0 %v239
      %v329 = vpop.f32.mrb[0].mxu0
      %v330 = vadd.f32 0.0, %v329
      %v331 = vpop.f32.mrb[0].mxu0
      %v332 = vpop.f32.mrb[0].mxu0
      %v333 = vadd.f32 0.0, %v332
      %v334 = vpop.f32.mrb[0].mxu0
      %335 = vmatprep.mubr.bf16.mxu0 0
      %336 = vmatmul.mubr.bf16.gmra.mrb[0].mxu0 %v240
      %v337 = vpop.f32.mrb[0].mxu0
      %v338 = vadd.f32 0.0, %v337
      %v339 = vpop.f32.mrb[0].mxu0
      %v340 = vpop.f32.mrb[0].mxu0
      %v341 = vadd.f32 0.0, %v340
      %v342 = vpop.f32.mrb[0].mxu0
      %343 = vmatprep.mubr.bf16.mxu0 0
      %344 = vmatmul.mubr.bf16.gmra.mrb[0].mxu0 %v241
      %v345 = vpop.f32.mrb[0].mxu0
      %v346 = vadd.f32 0.0, %v345
      %v347 = vpop.f32.mrb[0].mxu0
      %v348 = vpop.f32.mrb[0].mxu0
      %v349 = vadd.f32 0.0, %v348
      %v350 = vpop.f32.mrb[0].mxu0
      %351 = vmatprep.mubr.bf16.mxu0 0
      %352 = vmatmul.mubr.bf16.gmra.mrb[0].mxu0 %v242
      %v353 = vpop.f32.mrb[0].mxu0
      %v354 = vadd.f32 0.0, %v353
      %v355 = vpop.f32.mrb[0].mxu0
      %v356 = vpop.f32.mrb[0].mxu0
      %v357 = vadd.f32 0.0, %v356
      %v358 = vpop.f32.mrb[0].mxu0
      %359 = vdwg.mxu0
      %v360 = vadd.f32 %v199, %v330
      %v361 = vadd.f32 %v200, %v333
      %v362 = vadd.f32 %v201, %v338
      %v363 = vadd.f32 %v202, %v341
      %v364 = vadd.f32 %v203, %v346
      %v365 = vadd.f32 %v204, %v349
      %v366 = vadd.f32 %v205, %v354
      %v367 = vadd.f32 %v206, %v357
      %368 = vst [vmem:[#allocation2] sm:$0xff] %v360
      %369 = vst [vmem:[#allocation2 + $0x8] sm:$0xff] %v361
      %370 = vst [vmem:[#allocation2 + $0x10] sm:$0xff] %v362
      %371 = vst [vmem:[#allocation2 + $0x18] sm:$0xff] %v363
      %372 = vst [vmem:[#allocation2 + $0x20] sm:$0xff] %v364
      %373 = vst [vmem:[#allocation2 + $0x28] sm:$0xff] %v365
      %374 = vst [vmem:[#allocation2 + $0x30] sm:$0xff] %v366
      %375 = vst [vmem:[#allocation2 + $0x38] sm:$0xff] %v367
      %s376 = scalar_lea.vmem %s172, 72
      %v377 = vld [vmem:[%s376] sm:$0xf]
      %v378 = vld [vmem:[%s376 + $0x8] sm:$0xf]
      %v379 = vld [vmem:[%s376 + $0x10] sm:$0xf]
      %v380 = vld [vmem:[%s376 + $0x18] sm:$0xf]
      %v381 = vld [vmem:[%s376 + $0x20] sm:$0xf]
      %v382 = vld [vmem:[%s376 + $0x28] sm:$0xf]
      %v383 = vld [vmem:[%s376 + $0x30] sm:$0xf]
      %v384 = vld [vmem:[%s376 + $0x38] sm:$0xf]
      %v385 = vld [vmem:[#allocation2] sm:$0xff]
      %v386 = vld [vmem:[#allocation2 + $0x8] sm:$0xff]
      %v387 = vld [vmem:[#allocation2 + $0x10] sm:$0xff]
      %v388 = vld [vmem:[#allocation2 + $0x18] sm:$0xff]
      %v389 = vld [vmem:[#allocation2 + $0x20] sm:$0xff]
      %v390 = vld [vmem:[#allocation2 + $0x28] sm:$0xff]
      %v391 = vld [vmem:[#allocation2 + $0x30] sm:$0xff]
      %v392 = vld [vmem:[#allocation2 + $0x38] sm:$0xff]
      %s393 = scalar_lea.vmem %s1, 64
      %v394 = vld [vmem:[%s393] sm:$0xf]
      %v395 = vld [vmem:[%s393 + $0x4] sm:$0xf]
      %v396 = vld [vmem:[%s393 + $0x8] sm:$0xf]
      %v397 = vld [vmem:[%s393 + $0xc] sm:$0xf]
      %v398 = vld [vmem:[%s393 + $0x10] sm:$0xf]
      %v399 = vld [vmem:[%s393 + $0x14] sm:$0xf]
      %v400 = vld [vmem:[%s393 + $0x18] sm:$0xf]
      %v401 = vld [vmem:[%s393 + $0x1c] sm:$0xf]
      %v402 = vld [vmem:[%s393 + $0x20] sm:$0xf]
      %v403 = vld [vmem:[%s393 + $0x24] sm:$0xf]
      %v404 = vld [vmem:[%s393 + $0x28] sm:$0xf]
      %v405 = vld [vmem:[%s393 + $0x2c] sm:$0xf]
      %v406 = vld [vmem:[%s393 + $0x30] sm:$0xf]
      %v407 = vld [vmem:[%s393 + $0x34] sm:$0xf]
      %v408 = vld [vmem:[%s393 + $0x38] sm:$0xf]
      %v409 = vld [vmem:[%s393 + $0x3c] sm:$0xf]
      %v418 = vunpack.c.l.b16 %v377
      %v419 = vunpack.c.l.b16 %v378
      %v420 = vunpack.c.l.b16 %v379
      %v421 = vunpack.c.l.b16 %v380
      %v422 = vunpack.c.l.b16 %v381
      %v423 = vunpack.c.l.b16 %v382
      %v424 = vunpack.c.l.b16 %v383
      %v425 = vunpack.c.l.b16 %v384
      %v426 = vpack.c.b16 %v419, %v418
      %v427 = vpack.c.b16 %v421, %v420
      %v428 = vpack.c.b16 %v423, %v422
      %v429 = vpack.c.b16 %v425, %v424
      %v450 = vunpack.c.l.b16 %v394
      %v451 = vunpack.c.l.b16 %v395
      %v452 = vunpack.c.l.b16 %v396
      %v453 = vunpack.c.l.b16 %v397
      %v454 = vunpack.c.l.b16 %v398
      %v455 = vunpack.c.l.b16 %v399
      %v456 = vunpack.c.l.b16 %v400
      %v457 = vunpack.c.l.b16 %v401
      %v458 = vunpack.c.l.b16 %v402
      %v459 = vunpack.c.l.b16 %v403
      %v460 = vunpack.c.l.b16 %v404
      %v461 = vunpack.c.l.b16 %v405
      %v462 = vunpack.c.l.b16 %v406
      %v463 = vunpack.c.l.b16 %v407
      %v464 = vunpack.c.l.b16 %v408
      %v465 = vunpack.c.l.b16 %v409
      %v466 = vpack.c.b16 %v451, %v450
      %v467 = vpack.c.b16 %v453, %v452
      %v468 = vpack.c.b16 %v455, %v454
      %v469 = vpack.c.b16 %v457, %v456
      %v470 = vpack.c.b16 %v459, %v458
      %v471 = vpack.c.b16 %v461, %v460
      %v472 = vpack.c.b16 %v463, %v462
      %v473 = vpack.c.b16 %v465, %v464
      %482 = vmatprep.subr.bf16.mxu0 0
      %483 = vmatpush1.bf16.msra.mxu0 %v466
      %484 = vmatprep.subr.bf16.mxu0 0
      %485 = vmatpush1.bf16.msra.mxu0 %v467
      %486 = vmatprep.subr.bf16.mxu0 0
      %487 = vmatpush1.bf16.msra.mxu0 %v468
      %488 = vmatprep.subr.bf16.mxu0 0
      %489 = vmatpush1.bf16.msra.mxu0 %v469
      %490 = vmatprep.subr.bf16.mxu0 0
      %491 = vmatpush1.bf16.msra.mxu0 %v470
      %492 = vmatprep.subr.bf16.mxu0 0
      %493 = vmatpush1.bf16.msra.mxu0 %v471
      %494 = vmatprep.subr.bf16.mxu0 0
      %495 = vmatpush1.bf16.msra.mxu0 %v472
      %496 = vmatprep.subr.bf16.mxu0 0
      %497 = vmatpush1.bf16.msra.mxu0 %v473
      %498 = vmatprep.subr.bf16.mxu0 0
      %499 = vmatpush1.bf16.msra.mxu0 0
      %500 = vmatprep.subr.bf16.mxu0 0
      %501 = vmatpush1.bf16.msra.mxu0 0
      %502 = vmatprep.subr.bf16.mxu0 0
      %503 = vmatpush1.bf16.msra.mxu0 0
      %504 = vmatprep.subr.bf16.mxu0 0
      %505 = vmatpush1.bf16.msra.mxu0 0
      %506 = vmatprep.subr.bf16.mxu0 0
      %507 = vmatpush1.bf16.msra.mxu0 0
      %508 = vmatprep.subr.bf16.mxu0 0
      %509 = vmatpush1.bf16.msra.mxu0 0
      %510 = vmatprep.subr.bf16.mxu0 0
      %511 = vmatpush1.bf16.msra.mxu0 0
      %512 = vmatprep.subr.bf16.mxu0 0
      %513 = vmatpush1.bf16.msra.mxu0 0
      %514 = vmatprep.mubr.bf16.mxu0 0
      %515 = vmatmul.mubr.bf16.gmra.mrb[0].mxu0 %v426
      %v516 = vpop.f32.mrb[0].mxu0
      %v517 = vadd.f32 0.0, %v516
      %v518 = vpop.f32.mrb[0].mxu0
      %v519 = vpop.f32.mrb[0].mxu0
      %v520 = vadd.f32 0.0, %v519
      %v521 = vpop.f32.mrb[0].mxu0
      %522 = vmatprep.mubr.bf16.mxu0 0
      %523 = vmatmul.mubr.bf16.gmra.mrb[0].mxu0 %v427
      %v524 = vpop.f32.mrb[0].mxu0
      %v525 = vadd.f32 0.0, %v524
      %v526 = vpop.f32.mrb[0].mxu0
      %v527 = vpop.f32.mrb[0].mxu0
      %v528 = vadd.f32 0.0, %v527
      %v529 = vpop.f32.mrb[0].mxu0
      %530 = vmatprep.mubr.bf16.mxu0 0
      %531 = vmatmul.mubr.bf16.gmra.mrb[0].mxu0 %v428
      %v532 = vpop.f32.mrb[0].mxu0
      %v533 = vadd.f32 0.0, %v532
      %v534 = vpop.f32.mrb[0].mxu0
      %v535 = vpop.f32.mrb[0].mxu0
      %v536 = vadd.f32 0.0, %v535
      %v537 = vpop.f32.mrb[0].mxu0
      %538 = vmatprep.mubr.bf16.mxu0 0
      %539 = vmatmul.mubr.bf16.gmra.mrb[0].mxu0 %v429
      %v540 = vpop.f32.mrb[0].mxu0
      %v541 = vadd.f32 0.0, %v540
      %v542 = vpop.f32.mrb[0].mxu0
      %v543 = vpop.f32.mrb[0].mxu0
      %v544 = vadd.f32 0.0, %v543
      %v545 = vpop.f32.mrb[0].mxu0
      %546 = vdwg.mxu0
      %v547 = vadd.f32 %v385, %v517
      %v548 = vadd.f32 %v386, %v520
      %v549 = vadd.f32 %v387, %v525
      %v550 = vadd.f32 %v388, %v528
      %v551 = vadd.f32 %v389, %v533
      %v552 = vadd.f32 %v390, %v536
      %v553 = vadd.f32 %v391, %v541
      %v554 = vadd.f32 %v392, %v544
      %555 = vst [vmem:[#allocation2] sm:$0xff] %v547
      %556 = vst [vmem:[#allocation2 + $0x8] sm:$0xff] %v548
      %557 = vst [vmem:[#allocation2 + $0x10] sm:$0xff] %v549
      %558 = vst [vmem:[#allocation2 + $0x18] sm:$0xff] %v550
      %559 = vst [vmem:[#allocation2 + $0x20] sm:$0xff] %v551
      %560 = vst [vmem:[#allocation2 + $0x28] sm:$0xff] %v552
      %561 = vst [vmem:[#allocation2 + $0x30] sm:$0xff] %v553
      %562 = vst [vmem:[#allocation2 + $0x38] sm:$0xff] %v554
      %v563 = vld [vmem:[%s172] sm:$0xf]
      %v564 = vld [vmem:[%s172 + $0x4] sm:$0x1]
      %v565 = vld [vmem:[%s172 + $0x8] sm:$0xf]
      %v566 = vld [vmem:[%s172 + $0xc] sm:$0x1]
      %v567 = vld [vmem:[%s172 + $0x10] sm:$0xf]
      %v568 = vld [vmem:[%s172 + $0x14] sm:$0x1]
      %v569 = vld [vmem:[%s172 + $0x18] sm:$0xf]
      %v570 = vld [vmem:[%s172 + $0x1c] sm:$0x1]
      %v571 = vld [vmem:[%s172 + $0x20] sm:$0xf]
      %v572 = vld [vmem:[%s172 + $0x24] sm:$0x1]
      %v573 = vld [vmem:[%s172 + $0x28] sm:$0xf]
      %v574 = vld [vmem:[%s172 + $0x2c] sm:$0x1]
      %v575 = vld [vmem:[%s172 + $0x30] sm:$0xf]
      %v576 = vld [vmem:[%s172 + $0x34] sm:$0x1]
      %v577 = vld [vmem:[%s172 + $0x38] sm:$0xf]
      %v578 = vld [vmem:[%s172 + $0x3c] sm:$0x1]
      %vm579 = vsmask.f32 3328
      %vm580 = vsmask.f32 7440
      %vm581 = vmor %vm579, %vm580
      %v583 = vshrl.u32 %v563, 16
      %v585 = vrot.slane %v583, 4
      %v586 = vshll.u32 %v563, 16
      %v588 = vrot.slane %v586, 5
      %v589 = vor.u32 %v585, %v588
      %v590 = vrot.slane %v589, 4
      %v592 = vshll.u32 %v564, 16
      %v594 = vrot.slane %v592, 5
      %v595 = vsel %vm581, %v590, %v594
      %v597 = vshrl.u32 %v565, 16
      %v599 = vrot.slane %v597, 4
      %v600 = vshll.u32 %v565, 16
      %v602 = vrot.slane %v600, 5
      %v603 = vor.u32 %v599, %v602
      %v604 = vrot.slane %v603, 4
      %v606 = vshll.u32 %v566, 16
      %v608 = vrot.slane %v606, 5
      %v609 = vsel %vm581, %v604, %v608
      %v611 = vshrl.u32 %v567, 16
      %v613 = vrot.slane %v611, 4
      %v614 = vshll.u32 %v567, 16
      %v616 = vrot.slane %v614, 5
      %v617 = vor.u32 %v613, %v616
      %v618 = vrot.slane %v617, 4
      %v620 = vshll.u32 %v568, 16
      %v622 = vrot.slane %v620, 5
      %v623 = vsel %vm581, %v618, %v622
      %v625 = vshrl.u32 %v569, 16
      %v627 = vrot.slane %v625, 4
      %v628 = vshll.u32 %v569, 16
      %v630 = vrot.slane %v628, 5
      %v631 = vor.u32 %v627, %v630
      %v632 = vrot.slane %v631, 4
      %v634 = vshll.u32 %v570, 16
      %v636 = vrot.slane %v634, 5
      %v637 = vsel %vm581, %v632, %v636
      %v639 = vshrl.u32 %v571, 16
      %v641 = vrot.slane %v639, 4
      %v642 = vshll.u32 %v571, 16
      %v644 = vrot.slane %v642, 5
      %v645 = vor.u32 %v641, %v644
      %v646 = vrot.slane %v645, 4
      %v648 = vshll.u32 %v572, 16
      %v650 = vrot.slane %v648, 5
      %v651 = vsel %vm581, %v646, %v650
      %v653 = vshrl.u32 %v573, 16
      %v655 = vrot.slane %v653, 4
      %v656 = vshll.u32 %v573, 16
      %v658 = vrot.slane %v656, 5
      %v659 = vor.u32 %v655, %v658
      %v660 = vrot.slane %v659, 4
      %v662 = vshll.u32 %v574, 16
      %v664 = vrot.slane %v662, 5
      %v665 = vsel %vm581, %v660, %v664
      %v667 = vshrl.u32 %v575, 16
      %v669 = vrot.slane %v667, 4
      %v670 = vshll.u32 %v575, 16
      %v672 = vrot.slane %v670, 5
      %v673 = vor.u32 %v669, %v672
      %v674 = vrot.slane %v673, 4
      %v676 = vshll.u32 %v576, 16
      %v678 = vrot.slane %v676, 5
      %v679 = vsel %vm581, %v674, %v678
      %v681 = vshrl.u32 %v577, 16
      %v683 = vrot.slane %v681, 4
      %v684 = vshll.u32 %v577, 16
      %v686 = vrot.slane %v684, 5
      %v687 = vor.u32 %v683, %v686
      %v688 = vrot.slane %v687, 4
      %v690 = vshll.u32 %v578, 16
      %v692 = vrot.slane %v690, 5
      %v693 = vsel %vm581, %v688, %v692
      %v694 = vld [vmem:[#allocation2] sm:$0xff]
      %v695 = vld [vmem:[#allocation2 + $0x8] sm:$0xff]
      %v696 = vld [vmem:[#allocation2 + $0x10] sm:$0xff]
      %v697 = vld [vmem:[#allocation2 + $0x18] sm:$0xff]
      %v698 = vld [vmem:[#allocation2 + $0x20] sm:$0xff]
      %v699 = vld [vmem:[#allocation2 + $0x28] sm:$0xff]
      %v700 = vld [vmem:[#allocation2 + $0x30] sm:$0xff]
      %v701 = vld [vmem:[#allocation2 + $0x38] sm:$0xff]
      %s702 = scalar_lea.vmem %s1, 128
      %v703 = vld [vmem:[%s702] sm:$0xf]
      %v704 = vld [vmem:[%s702 + $0x4] sm:$0xf]
      %v705 = vld [vmem:[%s702 + $0x8] sm:$0xf]
      %v706 = vld [vmem:[%s702 + $0xc] sm:$0xf]
      %v707 = vld [vmem:[%s702 + $0x10] sm:$0xf]
      %v708 = vld [vmem:[%s702 + $0x14] sm:$0xf]
      %v709 = vld [vmem:[%s702 + $0x18] sm:$0xf]
      %v710 = vld [vmem:[%s702 + $0x1c] sm:$0xf]
      %v711 = vld [vmem:[%s702 + $0x20] sm:$0xf]
      %v712 = vld [vmem:[%s702 + $0x24] sm:$0xf]
      %v713 = vld [vmem:[%s702 + $0x28] sm:$0xf]
      %v714 = vld [vmem:[%s702 + $0x2c] sm:$0xf]
      %v715 = vld [vmem:[%s702 + $0x30] sm:$0xf]
      %v716 = vld [vmem:[%s702 + $0x34] sm:$0xf]
      %v717 = vld [vmem:[%s702 + $0x38] sm:$0xf]
      %v718 = vld [vmem:[%s702 + $0x3c] sm:$0xf]
      %v719 = vunpack.c.l.b16 %v595
      %v720 = vunpack.c.l.b16 %v609
      %v721 = vunpack.c.l.b16 %v623
      %v722 = vunpack.c.l.b16 %v637
      %v723 = vunpack.c.l.b16 %v651
      %v724 = vunpack.c.l.b16 %v665
      %v725 = vunpack.c.l.b16 %v679
      %v726 = vunpack.c.l.b16 %v693
      %v727 = vpack.c.b16 %v720, %v719
      %v728 = vpack.c.b16 %v722, %v721
      %v729 = vpack.c.b16 %v724, %v723
      %v730 = vpack.c.b16 %v726, %v725
      %v751 = vunpack.c.l.b16 %v703
      %v752 = vunpack.c.l.b16 %v704
      %v753 = vunpack.c.l.b16 %v705
      %v754 = vunpack.c.l.b16 %v706
      %v755 = vunpack.c.l.b16 %v707
      %v756 = vunpack.c.l.b16 %v708
      %v757 = vunpack.c.l.b16 %v709
      %v758 = vunpack.c.l.b16 %v710
      %v759 = vunpack.c.l.b16 %v711
      %v760 = vunpack.c.l.b16 %v712
      %v761 = vunpack.c.l.b16 %v713
      %v762 = vunpack.c.l.b16 %v714
      %v763 = vunpack.c.l.b16 %v715
      %v764 = vunpack.c.l.b16 %v716
      %v765 = vunpack.c.l.b16 %v717
      %v766 = vunpack.c.l.b16 %v718
      %v767 = vpack.c.b16 %v752, %v751
      %v768 = vpack.c.b16 %v754, %v753
      %v769 = vpack.c.b16 %v756, %v755
      %v770 = vpack.c.b16 %v758, %v757
      %v771 = vpack.c.b16 %v760, %v759
      %v772 = vpack.c.b16 %v762, %v761
      %v773 = vpack.c.b16 %v764, %v763
      %v774 = vpack.c.b16 %v766, %v765
      %783 = vmatprep.subr.bf16.mxu0 0
      %784 = vmatpush1.bf16.msra.mxu0 %v767
      %785 = vmatprep.subr.bf16.mxu0 0
      %786 = vmatpush1.bf16.msra.mxu0 %v768
      %787 = vmatprep.subr.bf16.mxu0 0
      %788 = vmatpush1.bf16.msra.mxu0 %v769
      %789 = vmatprep.subr.bf16.mxu0 0
      %790 = vmatpush1.bf16.msra.mxu0 %v770
      %791 = vmatprep.subr.bf16.mxu0 0
      %792 = vmatpush1.bf16.msra.mxu0 %v771
      %793 = vmatprep.subr.bf16.mxu0 0
      %794 = vmatpush1.bf16.msra.mxu0 %v772
      %795 = vmatprep.subr.bf16.mxu0 0
      %796 = vmatpush1.bf16.msra.mxu0 %v773
      %797 = vmatprep.subr.bf16.mxu0 0
      %798 = vmatpush1.bf16.msra.mxu0 %v774
      %799 = vmatprep.subr.bf16.mxu0 0
      %800 = vmatpush1.bf16.msra.mxu0 0
      %801 = vmatprep.subr.bf16.mxu0 0
      %802 = vmatpush1.bf16.msra.mxu0 0
      %803 = vmatprep.subr.bf16.mxu0 0
      %804 = vmatpush1.bf16.msra.mxu0 0
      %805 = vmatprep.subr.bf16.mxu0 0
      %806 = vmatpush1.bf16.msra.mxu0 0
      %807 = vmatprep.subr.bf16.mxu0 0
      %808 = vmatpush1.bf16.msra.mxu0 0
      %809 = vmatprep.subr.bf16.mxu0 0
      %810 = vmatpush1.bf16.msra.mxu0 0
      %811 = vmatprep.subr.bf16.mxu0 0
      %812 = vmatpush1.bf16.msra.mxu0 0
      %813 = vmatprep.subr.bf16.mxu0 0
      %814 = vmatpush1.bf16.msra.mxu0 0
      %815 = vmatprep.mubr.bf16.mxu0 0
      %816 = vmatmul.mubr.bf16.gmra.mrb[0].mxu0 %v727
      %v817 = vpop.f32.mrb[0].mxu0
      %v818 = vadd.f32 0.0, %v817
      %v819 = vpop.f32.mrb[0].mxu0
      %v820 = vpop.f32.mrb[0].mxu0
      %v821 = vadd.f32 0.0, %v820
      %v822 = vpop.f32.mrb[0].mxu0
      %823 = vmatprep.mubr.bf16.mxu0 0
      %824 = vmatmul.mubr.bf16.gmra.mrb[0].mxu0 %v728
      %v825 = vpop.f32.mrb[0].mxu0
      %v826 = vadd.f32 0.0, %v825
      %v827 = vpop.f32.mrb[0].mxu0
      %v828 = vpop.f32.mrb[0].mxu0
      %v829 = vadd.f32 0.0, %v828
      %v830 = vpop.f32.mrb[0].mxu0
      %831 = vmatprep.mubr.bf16.mxu0 0
      %832 = vmatmul.mubr.bf16.gmra.mrb[0].mxu0 %v729
      %v833 = vpop.f32.mrb[0].mxu0
      %v834 = vadd.f32 0.0, %v833
      %v835 = vpop.f32.mrb[0].mxu0
      %v836 = vpop.f32.mrb[0].mxu0
      %v837 = vadd.f32 0.0, %v836
      %v838 = vpop.f32.mrb[0].mxu0
      %839 = vmatprep.mubr.bf16.mxu0 0
      %840 = vmatmul.mubr.bf16.gmra.mrb[0].mxu0 %v730
      %v841 = vpop.f32.mrb[0].mxu0
      %v842 = vadd.f32 0.0, %v841
      %v843 = vpop.f32.mrb[0].mxu0
      %v844 = vpop.f32.mrb[0].mxu0
      %v845 = vadd.f32 0.0, %v844
      %v846 = vpop.f32.mrb[0].mxu0
      %847 = vdwg.mxu0
      %v848 = vadd.f32 %v694, %v818
      %v849 = vadd.f32 %v695, %v821
      %v850 = vadd.f32 %v696, %v826
      %v851 = vadd.f32 %v697, %v829
      %v852 = vadd.f32 %v698, %v834
      %v853 = vadd.f32 %v699, %v837
      %v854 = vadd.f32 %v700, %v842
      %v855 = vadd.f32 %v701, %v845
      %856 = vst [vmem:[#allocation2] sm:$0xff] %v848
      %857 = vst [vmem:[#allocation2 + $0x8] sm:$0xff] %v849
      %858 = vst [vmem:[#allocation2 + $0x10] sm:$0xff] %v850
      %859 = vst [vmem:[#allocation2 + $0x18] sm:$0xff] %v851
      %860 = vst [vmem:[#allocation2 + $0x20] sm:$0xff] %v852
      %861 = vst [vmem:[#allocation2 + $0x28] sm:$0xff] %v853
      %862 = vst [vmem:[#allocation2 + $0x30] sm:$0xff] %v854
      %863 = vst [vmem:[#allocation2 + $0x38] sm:$0xff] %v855
      %s864 = scalar_lea.vmem %s172, 144
      %v865 = vld [vmem:[%s864] sm:$0xf]
      %v866 = vld [vmem:[%s864 + $0x8] sm:$0xf]
      %v867 = vld [vmem:[%s864 + $0x10] sm:$0xf]
      %v868 = vld [vmem:[%s864 + $0x18] sm:$0xf]
      %v869 = vld [vmem:[%s864 + $0x20] sm:$0xf]
      %v870 = vld [vmem:[%s864 + $0x28] sm:$0xf]
      %v871 = vld [vmem:[%s864 + $0x30] sm:$0xf]
      %v872 = vld [vmem:[%s864 + $0x38] sm:$0xf]
      %v873 = vld [vmem:[#allocation2] sm:$0xff]
      %v874 = vld [vmem:[#allocation2 + $0x8] sm:$0xff]
      %v875 = vld [vmem:[#allocation2 + $0x10] sm:$0xff]
      %v876 = vld [vmem:[#allocation2 + $0x18] sm:$0xff]
      %v877 = vld [vmem:[#allocation2 + $0x20] sm:$0xff]
      %v878 = vld [vmem:[#allocation2 + $0x28] sm:$0xff]
      %v879 = vld [vmem:[#allocation2 + $0x30] sm:$0xff]
      %v880 = vld [vmem:[#allocation2 + $0x38] sm:$0xff]
      %s881 = scalar_lea.vmem %s1, 192
      %v882 = vld [vmem:[%s881] sm:$0xf]
      %v883 = vld [vmem:[%s881 + $0x4] sm:$0xf]
      %v884 = vld [vmem:[%s881 + $0x8] sm:$0xf]
      %v885 = vld [vmem:[%s881 + $0xc] sm:$0xf]
      %v886 = vld [vmem:[%s881 + $0x10] sm:$0xf]
      %v887 = vld [vmem:[%s881 + $0x14] sm:$0xf]
      %v888 = vld [vmem:[%s881 + $0x18] sm:$0xf]
      %v889 = vld [vmem:[%s881 + $0x1c] sm:$0xf]
      %v890 = vld [vmem:[%s881 + $0x20] sm:$0xf]
      %v891 = vld [vmem:[%s881 + $0x24] sm:$0xf]
      %v892 = vld [vmem:[%s881 + $0x28] sm:$0xf]
      %v893 = vld [vmem:[%s881 + $0x2c] sm:$0xf]
      %v894 = vld [vmem:[%s881 + $0x30] sm:$0xf]
      %v895 = vld [vmem:[%s881 + $0x34] sm:$0xf]
      %v896 = vld [vmem:[%s881 + $0x38] sm:$0xf]
      %v897 = vld [vmem:[%s881 + $0x3c] sm:$0xf]
      %v906 = vunpack.c.l.b16 %v865
      %v907 = vunpack.c.l.b16 %v866
      %v908 = vunpack.c.l.b16 %v867
      %v909 = vunpack.c.l.b16 %v868
      %v910 = vunpack.c.l.b16 %v869
      %v911 = vunpack.c.l.b16 %v870
      %v912 = vunpack.c.l.b16 %v871
      %v913 = vunpack.c.l.b16 %v872
      %v914 = vpack.c.b16 %v907, %v906
      %v915 = vpack.c.b16 %v909, %v908
      %v916 = vpack.c.b16 %v911, %v910
      %v917 = vpack.c.b16 %v913, %v912
      %v938 = vunpack.c.l.b16 %v882
      %v939 = vunpack.c.l.b16 %v883
      %v940 = vunpack.c.l.b16 %v884
      %v941 = vunpack.c.l.b16 %v885
      %v942 = vunpack.c.l.b16 %v886
      %v943 = vunpack.c.l.b16 %v887
      %v944 = vunpack.c.l.b16 %v888
      %v945 = vunpack.c.l.b16 %v889
      %v946 = vunpack.c.l.b16 %v890
      %v947 = vunpack.c.l.b16 %v891
      %v948 = vunpack.c.l.b16 %v892
      %v949 = vunpack.c.l.b16 %v893
      %v950 = vunpack.c.l.b16 %v894
      %v951 = vunpack.c.l.b16 %v895
      %v952 = vunpack.c.l.b16 %v896
      %v953 = vunpack.c.l.b16 %v897
      %v954 = vpack.c.b16 %v939, %v938
      %v955 = vpack.c.b16 %v941, %v940
      %v956 = vpack.c.b16 %v943, %v942
      %v957 = vpack.c.b16 %v945, %v944
      %v958 = vpack.c.b16 %v947, %v946
      %v959 = vpack.c.b16 %v949, %v948
      %v960 = vpack.c.b16 %v951, %v950
      %v961 = vpack.c.b16 %v953, %v952
      %970 = vmatprep.subr.bf16.mxu0 0
      %971 = vmatpush1.bf16.msra.mxu0 %v954
      %972 = vmatprep.subr.bf16.mxu0 0
      %973 = vmatpush1.bf16.msra.mxu0 %v955
      %974 = vmatprep.subr.bf16.mxu0 0
      %975 = vmatpush1.bf16.msra.mxu0 %v956
      %976 = vmatprep.subr.bf16.mxu0 0
      %977 = vmatpush1.bf16.msra.mxu0 %v957
      %978 = vmatprep.subr.bf16.mxu0 0
      %979 = vmatpush1.bf16.msra.mxu0 %v958
      %980 = vmatprep.subr.bf16.mxu0 0
      %981 = vmatpush1.bf16.msra.mxu0 %v959
      %982 = vmatprep.subr.bf16.mxu0 0
      %983 = vmatpush1.bf16.msra.mxu0 %v960
      %984 = vmatprep.subr.bf16.mxu0 0
      %985 = vmatpush1.bf16.msra.mxu0 %v961
      %986 = vmatprep.subr.bf16.mxu0 0
      %987 = vmatpush1.bf16.msra.mxu0 0
      %988 = vmatprep.subr.bf16.mxu0 0
      %989 = vmatpush1.bf16.msra.mxu0 0
      %990 = vmatprep.subr.bf16.mxu0 0
      %991 = vmatpush1.bf16.msra.mxu0 0
      %992 = vmatprep.subr.bf16.mxu0 0
      %993 = vmatpush1.bf16.msra.mxu0 0
      %994 = vmatprep.subr.bf16.mxu0 0
      %995 = vmatpush1.bf16.msra.mxu0 0
      %996 = vmatprep.subr.bf16.mxu0 0
      %997 = vmatpush1.bf16.msra.mxu0 0
      %998 = vmatprep.subr.bf16.mxu0 0
      %999 = vmatpush1.bf16.msra.mxu0 0
      %1000 = vmatprep.subr.bf16.mxu0 0
      %1001 = vmatpush1.bf16.msra.mxu0 0
      %1002 = vmatprep.mubr.bf16.mxu0 0
      %1003 = vmatmul.mubr.bf16.gmra.mrb[0].mxu0 %v914
      %v1004 = vpop.f32.mrb[0].mxu0
      %v1005 = vadd.f32 0.0, %v1004
      %v1006 = vpop.f32.mrb[0].mxu0
      %v1007 = vpop.f32.mrb[0].mxu0
      %v1008 = vadd.f32 0.0, %v1007
      %v1009 = vpop.f32.mrb[0].mxu0
      %1010 = vmatprep.mubr.bf16.mxu0 0
      %1011 = vmatmul.mubr.bf16.gmra.mrb[0].mxu0 %v915
      %v1012 = vpop.f32.mrb[0].mxu0
      %v1013 = vadd.f32 0.0, %v1012
      %v1014 = vpop.f32.mrb[0].mxu0
      %v1015 = vpop.f32.mrb[0].mxu0
      %v1016 = vadd.f32 0.0, %v1015
      %v1017 = vpop.f32.mrb[0].mxu0
      %1018 = vmatprep.mubr.bf16.mxu0 0
      %1019 = vmatmul.mubr.bf16.gmra.mrb[0].mxu0 %v916
      %v1020 = vpop.f32.mrb[0].mxu0
      %v1021 = vadd.f32 0.0, %v1020
      %v1022 = vpop.f32.mrb[0].mxu0
      %v1023 = vpop.f32.mrb[0].mxu0
      %v1024 = vadd.f32 0.0, %v1023
      %v1025 = vpop.f32.mrb[0].mxu0
      %1026 = vmatprep.mubr.bf16.mxu0 0
      %1027 = vmatmul.mubr.bf16.gmra.mrb[0].mxu0 %v917
      %v1028 = vpop.f32.mrb[0].mxu0
      %v1029 = vadd.f32 0.0, %v1028
      %v1030 = vpop.f32.mrb[0].mxu0
      %v1031 = vpop.f32.mrb[0].mxu0
      %v1032 = vadd.f32 0.0, %v1031
      %v1033 = vpop.f32.mrb[0].mxu0
      %1034 = vdwg.mxu0
      %v1035 = vadd.f32 %v873, %v1005
      %v1036 = vadd.f32 %v874, %v1008
      %v1037 = vadd.f32 %v875, %v1013
      %v1038 = vadd.f32 %v876, %v1016
      %v1039 = vadd.f32 %v877, %v1021
      %v1040 = vadd.f32 %v878, %v1024
      %v1041 = vadd.f32 %v879, %v1029
      %v1042 = vadd.f32 %v880, %v1032
      %1043 = vst [vmem:[#allocation2] sm:$0xff] %v1035
      %1044 = vst [vmem:[#allocation2 + $0x8] sm:$0xff] %v1036
      %1045 = vst [vmem:[#allocation2 + $0x10] sm:$0xff] %v1037
      %1046 = vst [vmem:[#allocation2 + $0x18] sm:$0xff] %v1038
      %1047 = vst [vmem:[#allocation2 + $0x20] sm:$0xff] %v1039
      %1048 = vst [vmem:[#allocation2 + $0x28] sm:$0xff] %v1040
      %1049 = vst [vmem:[#allocation2 + $0x30] sm:$0xff] %v1041
      %1050 = vst [vmem:[#allocation2 + $0x38] sm:$0xff] %v1042
      %s1051 = scalar_lea.vmem %s172, 216
      %v1052 = vld [vmem:[%s1051] sm:$0xf]
      %v1053 = vld [vmem:[%s1051 + $0x8] sm:$0xf]
      %v1054 = vld [vmem:[%s1051 + $0x10] sm:$0xf]
      %v1055 = vld [vmem:[%s1051 + $0x18] sm:$0xf]
      %v1056 = vld [vmem:[%s1051 + $0x20] sm:$0xf]
      %v1057 = vld [vmem:[%s1051 + $0x28] sm:$0xf]
      %v1058 = vld [vmem:[%s1051 + $0x30] sm:$0xf]
      %v1059 = vld [vmem:[%s1051 + $0x38] sm:$0xf]
      %v1060 = vld [vmem:[#allocation2] sm:$0xff]
      %v1061 = vld [vmem:[#allocation2 + $0x8] sm:$0xff]
      %v1062 = vld [vmem:[#allocation2 + $0x10] sm:$0xff]
      %v1063 = vld [vmem:[#allocation2 + $0x18] sm:$0xff]
      %v1064 = vld [vmem:[#allocation2 + $0x20] sm:$0xff]
      %v1065 = vld [vmem:[#allocation2 + $0x28] sm:$0xff]
      %v1066 = vld [vmem:[#allocation2 + $0x30] sm:$0xff]
      %v1067 = vld [vmem:[#allocation2 + $0x38] sm:$0xff]
      %s1068 = scalar_lea.vmem %s1, 256
      %v1069 = vld [vmem:[%s1068] sm:$0xf]
      %v1070 = vld [vmem:[%s1068 + $0x4] sm:$0xf]
      %v1071 = vld [vmem:[%s1068 + $0x8] sm:$0xf]
      %v1072 = vld [vmem:[%s1068 + $0xc] sm:$0xf]
      %v1073 = vld [vmem:[%s1068 + $0x10] sm:$0xf]
      %v1074 = vld [vmem:[%s1068 + $0x14] sm:$0xf]
      %v1075 = vld [vmem:[%s1068 + $0x18] sm:$0xf]
      %v1076 = vld [vmem:[%s1068 + $0x1c] sm:$0xf]
      %v1077 = vld [vmem:[%s1068 + $0x20] sm:$0xf]
      %v1078 = vld [vmem:[%s1068 + $0x24] sm:$0xf]
      %v1079 = vld [vmem:[%s1068 + $0x28] sm:$0xf]
      %v1080 = vld [vmem:[%s1068 + $0x2c] sm:$0xf]
      %v1081 = vld [vmem:[%s1068 + $0x30] sm:$0xf]
      %v1082 = vld [vmem:[%s1068 + $0x34] sm:$0xf]
      %v1083 = vld [vmem:[%s1068 + $0x38] sm:$0xf]
      %v1084 = vld [vmem:[%s1068 + $0x3c] sm:$0xf]
      %v1093 = vunpack.c.l.b16 %v1052
      %v1094 = vunpack.c.l.b16 %v1053
      %v1095 = vunpack.c.l.b16 %v1054
      %v1096 = vunpack.c.l.b16 %v1055
      %v1097 = vunpack.c.l.b16 %v1056
      %v1098 = vunpack.c.l.b16 %v1057
      %v1099 = vunpack.c.l.b16 %v1058
      %v1100 = vunpack.c.l.b16 %v1059
      %v1101 = vpack.c.b16 %v1094, %v1093
      %v1102 = vpack.c.b16 %v1096, %v1095
      %v1103 = vpack.c.b16 %v1098, %v1097
      %v1104 = vpack.c.b16 %v1100, %v1099
      %v1125 = vunpack.c.l.b16 %v1069
      %v1126 = vunpack.c.l.b16 %v1070
      %v1127 = vunpack.c.l.b16 %v1071
      %v1128 = vunpack.c.l.b16 %v1072
      %v1129 = vunpack.c.l.b16 %v1073
      %v1130 = vunpack.c.l.b16 %v1074
      %v1131 = vunpack.c.l.b16 %v1075
      %v1132 = vunpack.c.l.b16 %v1076
      %v1133 = vunpack.c.l.b16 %v1077
      %v1134 = vunpack.c.l.b16 %v1078
      %v1135 = vunpack.c.l.b16 %v1079
      %v1136 = vunpack.c.l.b16 %v1080
      %v1137 = vunpack.c.l.b16 %v1081
      %v1138 = vunpack.c.l.b16 %v1082
      %v1139 = vunpack.c.l.b16 %v1083
      %v1140 = vunpack.c.l.b16 %v1084
      %v1141 = vpack.c.b16 %v1126, %v1125
      %v1142 = vpack.c.b16 %v1128, %v1127
      %v1143 = vpack.c.b16 %v1130, %v1129
      %v1144 = vpack.c.b16 %v1132, %v1131
      %v1145 = vpack.c.b16 %v1134, %v1133
      %v1146 = vpack.c.b16 %v1136, %v1135
      %v1147 = vpack.c.b16 %v1138, %v1137
      %v1148 = vpack.c.b16 %v1140, %v1139
      %1157 = vmatprep.subr.bf16.mxu0 0
      %1158 = vmatpush1.bf16.msra.mxu0 %v1141
      %1159 = vmatprep.subr.bf16.mxu0 0
      %1160 = vmatpush1.bf16.msra.mxu0 %v1142
      %1161 = vmatprep.subr.bf16.mxu0 0
      %1162 = vmatpush1.bf16.msra.mxu0 %v1143
      %1163 = vmatprep.subr.bf16.mxu0 0
      %1164 = vmatpush1.bf16.msra.mxu0 %v1144
      %1165 = vmatprep.subr.bf16.mxu0 0
      %1166 = vmatpush1.bf16.msra.mxu0 %v1145
      %1167 = vmatprep.subr.bf16.mxu0 0
      %1168 = vmatpush1.bf16.msra.mxu0 %v1146
      %1169 = vmatprep.subr.bf16.mxu0 0
      %1170 = vmatpush1.bf16.msra.mxu0 %v1147
      %1171 = vmatprep.subr.bf16.mxu0 0
      %1172 = vmatpush1.bf16.msra.mxu0 %v1148
      %1173 = vmatprep.subr.bf16.mxu0 0
      %1174 = vmatpush1.bf16.msra.mxu0 0
      %1175 = vmatprep.subr.bf16.mxu0 0
      %1176 = vmatpush1.bf16.msra.mxu0 0
      %1177 = vmatprep.subr.bf16.mxu0 0
      %1178 = vmatpush1.bf16.msra.mxu0 0
      %1179 = vmatprep.subr.bf16.mxu0 0
      %1180 = vmatpush1.bf16.msra.mxu0 0
      %1181 = vmatprep.subr.bf16.mxu0 0
      %1182 = vmatpush1.bf16.msra.mxu0 0
      %1183 = vmatprep.subr.bf16.mxu0 0
      %1184 = vmatpush1.bf16.msra.mxu0 0
      %1185 = vmatprep.subr.bf16.mxu0 0
      %1186 = vmatpush1.bf16.msra.mxu0 0
      %1187 = vmatprep.subr.bf16.mxu0 0
      %1188 = vmatpush1.bf16.msra.mxu0 0
      %1189 = vmatprep.mubr.bf16.mxu0 0
      %1190 = vmatmul.mubr.bf16.gmra.mrb[0].mxu0 %v1101
      %v1191 = vpop.f32.mrb[0].mxu0
      %v1192 = vadd.f32 0.0, %v1191
      %v1193 = vpop.f32.mrb[0].mxu0
      %v1194 = vpop.f32.mrb[0].mxu0
      %v1195 = vadd.f32 0.0, %v1194
      %v1196 = vpop.f32.mrb[0].mxu0
      %1197 = vmatprep.mubr.bf16.mxu0 0
      %1198 = vmatmul.mubr.bf16.gmra.mrb[0].mxu0 %v1102
      %v1199 = vpop.f32.mrb[0].mxu0
      %v1200 = vadd.f32 0.0, %v1199
      %v1201 = vpop.f32.mrb[0].mxu0
      %v1202 = vpop.f32.mrb[0].mxu0
      %v1203 = vadd.f32 0.0, %v1202
      %v1204 = vpop.f32.mrb[0].mxu0
      %1205 = vmatprep.mubr.bf16.mxu0 0
      %1206 = vmatmul.mubr.bf16.gmra.mrb[0].mxu0 %v1103
      %v1207 = vpop.f32.mrb[0].mxu0
      %v1208 = vadd.f32 0.0, %v1207
      %v1209 = vpop.f32.mrb[0].mxu0
      %v1210 = vpop.f32.mrb[0].mxu0
      %v1211 = vadd.f32 0.0, %v1210
      %v1212 = vpop.f32.mrb[0].mxu0
      %1213 = vmatprep.mubr.bf16.mxu0 0
      %1214 = vmatmul.mubr.bf16.gmra.mrb[0].mxu0 %v1104
      %v1215 = vpop.f32.mrb[0].mxu0
      %v1216 = vadd.f32 0.0, %v1215
      %v1217 = vpop.f32.mrb[0].mxu0
      %v1218 = vpop.f32.mrb[0].mxu0
      %v1219 = vadd.f32 0.0, %v1218
      %v1220 = vpop.f32.mrb[0].mxu0
      %1221 = vdwg.mxu0
      %v1222 = vadd.f32 %v1060, %v1192
      %v1223 = vadd.f32 %v1061, %v1195
      %v1224 = vadd.f32 %v1062, %v1200
      %v1225 = vadd.f32 %v1063, %v1203
      %v1226 = vadd.f32 %v1064, %v1208
      %v1227 = vadd.f32 %v1065, %v1211
      %v1228 = vadd.f32 %v1066, %v1216
      %v1229 = vadd.f32 %v1067, %v1219
      %1230 = vst [vmem:[#allocation2] sm:$0xff] %v1222
      %1231 = vst [vmem:[#allocation2 + $0x8] sm:$0xff] %v1223
      %1232 = vst [vmem:[#allocation2 + $0x10] sm:$0xff] %v1224
      %1233 = vst [vmem:[#allocation2 + $0x18] sm:$0xff] %v1225
      %1234 = vst [vmem:[#allocation2 + $0x20] sm:$0xff] %v1226
      %1235 = vst [vmem:[#allocation2 + $0x28] sm:$0xff] %v1227
      %1236 = vst [vmem:[#allocation2 + $0x30] sm:$0xff] %v1228
      %1237 = vst [vmem:[#allocation2 + $0x38] sm:$0xff] %v1229
      %v1238 = vld [vmem:[%s864] sm:$0xf]
      %v1239 = vld [vmem:[%s864 + $0x4] sm:$0x1]
      %v1240 = vld [vmem:[%s864 + $0x8] sm:$0xf]
      %v1241 = vld [vmem:[%s864 + $0xc] sm:$0x1]
      %v1242 = vld [vmem:[%s864 + $0x10] sm:$0xf]
      %v1243 = vld [vmem:[%s864 + $0x14] sm:$0x1]
      %v1244 = vld [vmem:[%s864 + $0x18] sm:$0xf]
      %v1245 = vld [vmem:[%s864 + $0x1c] sm:$0x1]
      %v1246 = vld [vmem:[%s864 + $0x20] sm:$0xf]
      %v1247 = vld [vmem:[%s864 + $0x24] sm:$0x1]
      %v1248 = vld [vmem:[%s864 + $0x28] sm:$0xf]
      %v1249 = vld [vmem:[%s864 + $0x2c] sm:$0x1]
      %v1250 = vld [vmem:[%s864 + $0x30] sm:$0xf]
      %v1251 = vld [vmem:[%s864 + $0x34] sm:$0x1]
      %v1252 = vld [vmem:[%s864 + $0x38] sm:$0xf]
      %v1253 = vld [vmem:[%s864 + $0x3c] sm:$0x1]
      %v1255 = vshrl.u32 %v1238, 16
      %v1257 = vrot.slane %v1255, 4
      %v1258 = vshll.u32 %v1238, 16
      %v1260 = vrot.slane %v1258, 5
      %v1261 = vor.u32 %v1257, %v1260
      %v1262 = vrot.slane %v1261, 4
      %v1264 = vshll.u32 %v1239, 16
      %v1266 = vrot.slane %v1264, 5
      %v1267 = vsel %vm581, %v1262, %v1266
      %v1269 = vshrl.u32 %v1240, 16
      %v1271 = vrot.slane %v1269, 4
      %v1272 = vshll.u32 %v1240, 16
      %v1274 = vrot.slane %v1272, 5
      %v1275 = vor.u32 %v1271, %v1274
      %v1276 = vrot.slane %v1275, 4
      %v1278 = vshll.u32 %v1241, 16
      %v1280 = vrot.slane %v1278, 5
      %v1281 = vsel %vm581, %v1276, %v1280
      %v1283 = vshrl.u32 %v1242, 16
      %v1285 = vrot.slane %v1283, 4
      %v1286 = vshll.u32 %v1242, 16
      %v1288 = vrot.slane %v1286, 5
      %v1289 = vor.u32 %v1285, %v1288
      %v1290 = vrot.slane %v1289, 4
      %v1292 = vshll.u32 %v1243, 16
      %v1294 = vrot.slane %v1292, 5
      %v1295 = vsel %vm581, %v1290, %v1294
      %v1297 = vshrl.u32 %v1244, 16
      %v1299 = vrot.slane %v1297, 4
      %v1300 = vshll.u32 %v1244, 16
      %v1302 = vrot.slane %v1300, 5
      %v1303 = vor.u32 %v1299, %v1302
      %v1304 = vrot.slane %v1303, 4
      %v1306 = vshll.u32 %v1245, 16
      %v1308 = vrot.slane %v1306, 5
      %v1309 = vsel %vm581, %v1304, %v1308
      %v1311 = vshrl.u32 %v1246, 16
      %v1313 = vrot.slane %v1311, 4
      %v1314 = vshll.u32 %v1246, 16
      %v1316 = vrot.slane %v1314, 5
      %v1317 = vor.u32 %v1313, %v1316
      %v1318 = vrot.slane %v1317, 4
      %v1320 = vshll.u32 %v1247, 16
      %v1322 = vrot.slane %v1320, 5
      %v1323 = vsel %vm581, %v1318, %v1322
      %v1325 = vshrl.u32 %v1248, 16
      %v1327 = vrot.slane %v1325, 4
      %v1328 = vshll.u32 %v1248, 16
      %v1330 = vrot.slane %v1328, 5
      %v1331 = vor.u32 %v1327, %v1330
      %v1332 = vrot.slane %v1331, 4
      %v1334 = vshll.u32 %v1249, 16
      %v1336 = vrot.slane %v1334, 5
      %v1337 = vsel %vm581, %v1332, %v1336
      %v1339 = vshrl.u32 %v1250, 16
      %v1341 = vrot.slane %v1339, 4
      %v1342 = vshll.u32 %v1250, 16
      %v1344 = vrot.slane %v1342, 5
      %v1345 = vor.u32 %v1341, %v1344
      %v1346 = vrot.slane %v1345, 4
      %v1348 = vshll.u32 %v1251, 16
      %v1350 = vrot.slane %v1348, 5
      %v1351 = vsel %vm581, %v1346, %v1350
      %v1353 = vshrl.u32 %v1252, 16
      %v1355 = vrot.slane %v1353, 4
      %v1356 = vshll.u32 %v1252, 16
      %v1358 = vrot.slane %v1356, 5
      %v1359 = vor.u32 %v1355, %v1358
      %v1360 = vrot.slane %v1359, 4
      %v1362 = vshll.u32 %v1253, 16
      %v1364 = vrot.slane %v1362, 5
      %v1365 = vsel %vm581, %v1360, %v1364
      %v1366 = vld [vmem:[#allocation2] sm:$0xff]
      %v1367 = vld [vmem:[#allocation2 + $0x8] sm:$0xff]
      %v1368 = vld [vmem:[#allocation2 + $0x10] sm:$0xff]
      %v1369 = vld [vmem:[#allocation2 + $0x18] sm:$0xff]
      %v1370 = vld [vmem:[#allocation2 + $0x20] sm:$0xff]
      %v1371 = vld [vmem:[#allocation2 + $0x28] sm:$0xff]
      %v1372 = vld [vmem:[#allocation2 + $0x30] sm:$0xff]
      %v1373 = vld [vmem:[#allocation2 + $0x38] sm:$0xff]
      %s1374 = scalar_lea.vmem %s1, 320
      %v1375 = vld [vmem:[%s1374] sm:$0xf]
      %v1376 = vld [vmem:[%s1374 + $0x4] sm:$0xf]
      %v1377 = vld [vmem:[%s1374 + $0x8] sm:$0xf]
      %v1378 = vld [vmem:[%s1374 + $0xc] sm:$0xf]
      %v1379 = vld [vmem:[%s1374 + $0x10] sm:$0xf]
      %v1380 = vld [vmem:[%s1374 + $0x14] sm:$0xf]
      %v1381 = vld [vmem:[%s1374 + $0x18] sm:$0xf]
      %v1382 = vld [vmem:[%s1374 + $0x1c] sm:$0xf]
      %v1383 = vld [vmem:[%s1374 + $0x20] sm:$0xf]
      %v1384 = vld [vmem:[%s1374 + $0x24] sm:$0xf]
      %v1385 = vld [vmem:[%s1374 + $0x28] sm:$0xf]
      %v1386 = vld [vmem:[%s1374 + $0x2c] sm:$0xf]
      %v1387 = vld [vmem:[%s1374 + $0x30] sm:$0xf]
      %v1388 = vld [vmem:[%s1374 + $0x34] sm:$0xf]
      %v1389 = vld [vmem:[%s1374 + $0x38] sm:$0xf]
      %v1390 = vld [vmem:[%s1374 + $0x3c] sm:$0xf]
      %v1391 = vunpack.c.l.b16 %v1267
      %v1392 = vunpack.c.l.b16 %v1281
      %v1393 = vunpack.c.l.b16 %v1295
      %v1394 = vunpack.c.l.b16 %v1309
      %v1395 = vunpack.c.l.b16 %v1323
      %v1396 = vunpack.c.l.b16 %v1337
      %v1397 = vunpack.c.l.b16 %v1351
      %v1398 = vunpack.c.l.b16 %v1365
      %v1399 = vpack.c.b16 %v1392, %v1391
      %v1400 = vpack.c.b16 %v1394, %v1393
      %v1401 = vpack.c.b16 %v1396, %v1395
      %v1402 = vpack.c.b16 %v1398, %v1397
      %v1423 = vunpack.c.l.b16 %v1375
      %v1424 = vunpack.c.l.b16 %v1376
      %v1425 = vunpack.c.l.b16 %v1377
      %v1426 = vunpack.c.l.b16 %v1378
      %v1427 = vunpack.c.l.b16 %v1379
      %v1428 = vunpack.c.l.b16 %v1380
      %v1429 = vunpack.c.l.b16 %v1381
      %v1430 = vunpack.c.l.b16 %v1382
      %v1431 = vunpack.c.l.b16 %v1383
      %v1432 = vunpack.c.l.b16 %v1384
      %v1433 = vunpack.c.l.b16 %v1385
      %v1434 = vunpack.c.l.b16 %v1386
      %v1435 = vunpack.c.l.b16 %v1387
      %v1436 = vunpack.c.l.b16 %v1388
      %v1437 = vunpack.c.l.b16 %v1389
      %v1438 = vunpack.c.l.b16 %v1390
      %v1439 = vpack.c.b16 %v1424, %v1423
      %v1440 = vpack.c.b16 %v1426, %v1425
      %v1441 = vpack.c.b16 %v1428, %v1427
      %v1442 = vpack.c.b16 %v1430, %v1429
      %v1443 = vpack.c.b16 %v1432, %v1431
      %v1444 = vpack.c.b16 %v1434, %v1433
      %v1445 = vpack.c.b16 %v1436, %v1435
      %v1446 = vpack.c.b16 %v1438, %v1437
      %1455 = vmatprep.subr.bf16.mxu0 0
      %1456 = vmatpush1.bf16.msra.mxu0 %v1439
      %1457 = vmatprep.subr.bf16.mxu0 0
      %1458 = vmatpush1.bf16.msra.mxu0 %v1440
      %1459 = vmatprep.subr.bf16.mxu0 0
      %1460 = vmatpush1.bf16.msra.mxu0 %v1441
      %1461 = vmatprep.subr.bf16.mxu0 0
      %1462 = vmatpush1.bf16.msra.mxu0 %v1442
      %1463 = vmatprep.subr.bf16.mxu0 0
      %1464 = vmatpush1.bf16.msra.mxu0 %v1443
      %1465 = vmatprep.subr.bf16.mxu0 0
      %1466 = vmatpush1.bf16.msra.mxu0 %v1444
      %1467 = vmatprep.subr.bf16.mxu0 0
      %1468 = vmatpush1.bf16.msra.mxu0 %v1445
      %1469 = vmatprep.subr.bf16.mxu0 0
      %1470 = vmatpush1.bf16.msra.mxu0 %v1446
      %1471 = vmatprep.subr.bf16.mxu0 0
      %1472 = vmatpush1.bf16.msra.mxu0 0
      %1473 = vmatprep.subr.bf16.mxu0 0
      %1474 = vmatpush1.bf16.msra.mxu0 0
      %1475 = vmatprep.subr.bf16.mxu0 0
      %1476 = vmatpush1.bf16.msra.mxu0 0
      %1477 = vmatprep.subr.bf16.mxu0 0
      %1478 = vmatpush1.bf16.msra.mxu0 0
      %1479 = vmatprep.subr.bf16.mxu0 0
      %1480 = vmatpush1.bf16.msra.mxu0 0
      %1481 = vmatprep.subr.bf16.mxu0 0
      %1482 = vmatpush1.bf16.msra.mxu0 0
      %1483 = vmatprep.subr.bf16.mxu0 0
      %1484 = vmatpush1.bf16.msra.mxu0 0
      %1485 = vmatprep.subr.bf16.mxu0 0
      %1486 = vmatpush1.bf16.msra.mxu0 0
      %1487 = vmatprep.mubr.bf16.mxu0 0
      %1488 = vmatmul.mubr.bf16.gmra.mrb[0].mxu0 %v1399
      %v1489 = vpop.f32.mrb[0].mxu0
      %v1490 = vadd.f32 0.0, %v1489
      %v1491 = vpop.f32.mrb[0].mxu0
      %v1492 = vpop.f32.mrb[0].mxu0
      %v1493 = vadd.f32 0.0, %v1492
      %v1494 = vpop.f32.mrb[0].mxu0
      %1495 = vmatprep.mubr.bf16.mxu0 0
      %1496 = vmatmul.mubr.bf16.gmra.mrb[0].mxu0 %v1400
      %v1497 = vpop.f32.mrb[0].mxu0
      %v1498 = vadd.f32 0.0, %v1497
      %v1499 = vpop.f32.mrb[0].mxu0
      %v1500 = vpop.f32.mrb[0].mxu0
      %v1501 = vadd.f32 0.0, %v1500
      %v1502 = vpop.f32.mrb[0].mxu0
      %1503 = vmatprep.mubr.bf16.mxu0 0
      %1504 = vmatmul.mubr.bf16.gmra.mrb[0].mxu0 %v1401
      %v1505 = vpop.f32.mrb[0].mxu0
      %v1506 = vadd.f32 0.0, %v1505
      %v1507 = vpop.f32.mrb[0].mxu0
      %v1508 = vpop.f32.mrb[0].mxu0
      %v1509 = vadd.f32 0.0, %v1508
      %v1510 = vpop.f32.mrb[0].mxu0
      %1511 = vmatprep.mubr.bf16.mxu0 0
      %1512 = vmatmul.mubr.bf16.gmra.mrb[0].mxu0 %v1402
      %v1513 = vpop.f32.mrb[0].mxu0
      %v1514 = vadd.f32 0.0, %v1513
      %v1515 = vpop.f32.mrb[0].mxu0
      %v1516 = vpop.f32.mrb[0].mxu0
      %v1517 = vadd.f32 0.0, %v1516
      %v1518 = vpop.f32.mrb[0].mxu0
      %1519 = vdwg.mxu0
      %v1520 = vadd.f32 %v1366, %v1490
      %v1521 = vadd.f32 %v1367, %v1493
      %v1522 = vadd.f32 %v1368, %v1498
      %v1523 = vadd.f32 %v1369, %v1501
      %v1524 = vadd.f32 %v1370, %v1506
      %v1525 = vadd.f32 %v1371, %v1509
      %v1526 = vadd.f32 %v1372, %v1514
      %v1527 = vadd.f32 %v1373, %v1517
      %1528 = vst [vmem:[#allocation2] sm:$0xff] %v1520
      %1529 = vst [vmem:[#allocation2 + $0x8] sm:$0xff] %v1521
      %1530 = vst [vmem:[#allocation2 + $0x10] sm:$0xff] %v1522
      %1531 = vst [vmem:[#allocation2 + $0x18] sm:$0xff] %v1523
      %1532 = vst [vmem:[#allocation2 + $0x20] sm:$0xff] %v1524
      %1533 = vst [vmem:[#allocation2 + $0x28] sm:$0xff] %v1525
      %1534 = vst [vmem:[#allocation2 + $0x30] sm:$0xff] %v1526
      %1535 = vst [vmem:[#allocation2 + $0x38] sm:$0xff] %v1527
      %s1536 = scalar_lea.vmem %s172, 8
      %v1537 = vld [vmem:[%s1536] sm:$0xf]
      %v1538 = vld [vmem:[%s1536 + $0x8] sm:$0xf]
      %v1539 = vld [vmem:[%s1536 + $0x10] sm:$0xf]
      %v1540 = vld [vmem:[%s1536 + $0x18] sm:$0xf]
      %v1541 = vld [vmem:[%s1536 + $0x20] sm:$0xf]
      %v1542 = vld [vmem:[%s1536 + $0x28] sm:$0xf]
      %v1543 = vld [vmem:[%s1536 + $0x30] sm:$0xf]
      %v1544 = vld [vmem:[%s1536 + $0x38] sm:$0xf]
      %v1545 = vld [vmem:[#allocation2] sm:$0xff]
      %v1546 = vld [vmem:[#allocation2 + $0x8] sm:$0xff]
      %v1547 = vld [vmem:[#allocation2 + $0x10] sm:$0xff]
      %v1548 = vld [vmem:[#allocation2 + $0x18] sm:$0xff]
      %v1549 = vld [vmem:[#allocation2 + $0x20] sm:$0xff]
      %v1550 = vld [vmem:[#allocation2 + $0x28] sm:$0xff]
      %v1551 = vld [vmem:[#allocation2 + $0x30] sm:$0xff]
      %v1552 = vld [vmem:[#allocation2 + $0x38] sm:$0xff]
      %s1553 = scalar_lea.vmem %s1, 384
      %v1554 = vld [vmem:[%s1553] sm:$0xf]
      %v1555 = vld [vmem:[%s1553 + $0x4] sm:$0xf]
      %v1556 = vld [vmem:[%s1553 + $0x8] sm:$0xf]
      %v1557 = vld [vmem:[%s1553 + $0xc] sm:$0xf]
      %v1558 = vld [vmem:[%s1553 + $0x10] sm:$0xf]
      %v1559 = vld [vmem:[%s1553 + $0x14] sm:$0xf]
      %v1560 = vld [vmem:[%s1553 + $0x18] sm:$0xf]
      %v1561 = vld [vmem:[%s1553 + $0x1c] sm:$0xf]
      %v1562 = vld [vmem:[%s1553 + $0x20] sm:$0xf]
      %v1563 = vld [vmem:[%s1553 + $0x24] sm:$0xf]
      %v1564 = vld [vmem:[%s1553 + $0x28] sm:$0xf]
      %v1565 = vld [vmem:[%s1553 + $0x2c] sm:$0xf]
      %v1566 = vld [vmem:[%s1553 + $0x30] sm:$0xf]
      %v1567 = vld [vmem:[%s1553 + $0x34] sm:$0xf]
      %v1568 = vld [vmem:[%s1553 + $0x38] sm:$0xf]
      %v1569 = vld [vmem:[%s1553 + $0x3c] sm:$0xf]
      %v1578 = vunpack.c.l.b16 %v1537
      %v1579 = vunpack.c.l.b16 %v1538
      %v1580 = vunpack.c.l.b16 %v1539
      %v1581 = vunpack.c.l.b16 %v1540
      %v1582 = vunpack.c.l.b16 %v1541
      %v1583 = vunpack.c.l.b16 %v1542
      %v1584 = vunpack.c.l.b16 %v1543
      %v1585 = vunpack.c.l.b16 %v1544
      %v1586 = vpack.c.b16 %v1579, %v1578
      %v1587 = vpack.c.b16 %v1581, %v1580
      %v1588 = vpack.c.b16 %v1583, %v1582
      %v1589 = vpack.c.b16 %v1585, %v1584
      %v1610 = vunpack.c.l.b16 %v1554
      %v1611 = vunpack.c.l.b16 %v1555
      %v1612 = vunpack.c.l.b16 %v1556
      %v1613 = vunpack.c.l.b16 %v1557
      %v1614 = vunpack.c.l.b16 %v1558
      %v1615 = vunpack.c.l.b16 %v1559
      %v1616 = vunpack.c.l.b16 %v1560
      %v1617 = vunpack.c.l.b16 %v1561
      %v1618 = vunpack.c.l.b16 %v1562
      %v1619 = vunpack.c.l.b16 %v1563
      %v1620 = vunpack.c.l.b16 %v1564
      %v1621 = vunpack.c.l.b16 %v1565
      %v1622 = vunpack.c.l.b16 %v1566
      %v1623 = vunpack.c.l.b16 %v1567
      %v1624 = vunpack.c.l.b16 %v1568
      %v1625 = vunpack.c.l.b16 %v1569
      %v1626 = vpack.c.b16 %v1611, %v1610
      %v1627 = vpack.c.b16 %v1613, %v1612
      %v1628 = vpack.c.b16 %v1615, %v1614
      %v1629 = vpack.c.b16 %v1617, %v1616
      %v1630 = vpack.c.b16 %v1619, %v1618
      %v1631 = vpack.c.b16 %v1621, %v1620
      %v1632 = vpack.c.b16 %v1623, %v1622
      %v1633 = vpack.c.b16 %v1625, %v1624
      %1642 = vmatprep.subr.bf16.mxu0 0
      %1643 = vmatpush1.bf16.msra.mxu0 %v1626
      %1644 = vmatprep.subr.bf16.mxu0 0
      %1645 = vmatpush1.bf16.msra.mxu0 %v1627
      %1646 = vmatprep.subr.bf16.mxu0 0
      %1647 = vmatpush1.bf16.msra.mxu0 %v1628
      %1648 = vmatprep.subr.bf16.mxu0 0
      %1649 = vmatpush1.bf16.msra.mxu0 %v1629
      %1650 = vmatprep.subr.bf16.mxu0 0
      %1651 = vmatpush1.bf16.msra.mxu0 %v1630
      %1652 = vmatprep.subr.bf16.mxu0 0
      %1653 = vmatpush1.bf16.msra.mxu0 %v1631
      %1654 = vmatprep.subr.bf16.mxu0 0
      %1655 = vmatpush1.bf16.msra.mxu0 %v1632
      %1656 = vmatprep.subr.bf16.mxu0 0
      %1657 = vmatpush1.bf16.msra.mxu0 %v1633
      %1658 = vmatprep.subr.bf16.mxu0 0
      %1659 = vmatpush1.bf16.msra.mxu0 0
      %1660 = vmatprep.subr.bf16.mxu0 0
      %1661 = vmatpush1.bf16.msra.mxu0 0
      %1662 = vmatprep.subr.bf16.mxu0 0
      %1663 = vmatpush1.bf16.msra.mxu0 0
      %1664 = vmatprep.subr.bf16.mxu0 0
      %1665 = vmatpush1.bf16.msra.mxu0 0
      %1666 = vmatprep.subr.bf16.mxu0 0
      %1667 = vmatpush1.bf16.msra.mxu0 0
      %1668 = vmatprep.subr.bf16.mxu0 0
      %1669 = vmatpush1.bf16.msra.mxu0 0
      %1670 = vmatprep.subr.bf16.mxu0 0
      %1671 = vmatpush1.bf16.msra.mxu0 0
      %1672 = vmatprep.subr.bf16.mxu0 0
      %1673 = vmatpush1.bf16.msra.mxu0 0
      %1674 = vmatprep.mubr.bf16.mxu0 0
      %1675 = vmatmul.mubr.bf16.gmra.mrb[0].mxu0 %v1586
      %v1676 = vpop.f32.mrb[0].mxu0
      %v1677 = vadd.f32 0.0, %v1676
      %v1678 = vpop.f32.mrb[0].mxu0
      %v1679 = vpop.f32.mrb[0].mxu0
      %v1680 = vadd.f32 0.0, %v1679
      %v1681 = vpop.f32.mrb[0].mxu0
      %1682 = vmatprep.mubr.bf16.mxu0 0
      %1683 = vmatmul.mubr.bf16.gmra.mrb[0].mxu0 %v1587
      %v1684 = vpop.f32.mrb[0].mxu0
      %v1685 = vadd.f32 0.0, %v1684
      %v1686 = vpop.f32.mrb[0].mxu0
      %v1687 = vpop.f32.mrb[0].mxu0
      %v1688 = vadd.f32 0.0, %v1687
      %v1689 = vpop.f32.mrb[0].mxu0
      %1690 = vmatprep.mubr.bf16.mxu0 0
      %1691 = vmatmul.mubr.bf16.gmra.mrb[0].mxu0 %v1588
      %v1692 = vpop.f32.mrb[0].mxu0
      %v1693 = vadd.f32 0.0, %v1692
      %v1694 = vpop.f32.mrb[0].mxu0
      %v1695 = vpop.f32.mrb[0].mxu0
      %v1696 = vadd.f32 0.0, %v1695
      %v1697 = vpop.f32.mrb[0].mxu0
      %1698 = vmatprep.mubr.bf16.mxu0 0
      %1699 = vmatmul.mubr.bf16.gmra.mrb[0].mxu0 %v1589
      %v1700 = vpop.f32.mrb[0].mxu0
      %v1701 = vadd.f32 0.0, %v1700
      %v1702 = vpop.f32.mrb[0].mxu0
      %v1703 = vpop.f32.mrb[0].mxu0
      %v1704 = vadd.f32 0.0, %v1703
      %v1705 = vpop.f32.mrb[0].mxu0
      %1706 = vdwg.mxu0
      %v1707 = vadd.f32 %v1545, %v1677
      %v1708 = vadd.f32 %v1546, %v1680
      %v1709 = vadd.f32 %v1547, %v1685
      %v1710 = vadd.f32 %v1548, %v1688
      %v1711 = vadd.f32 %v1549, %v1693
      %v1712 = vadd.f32 %v1550, %v1696
      %v1713 = vadd.f32 %v1551, %v1701
      %v1714 = vadd.f32 %v1552, %v1704
      %1715 = vst [vmem:[#allocation2] sm:$0xff] %v1707
      %1716 = vst [vmem:[#allocation2 + $0x8] sm:$0xff] %v1708
      %1717 = vst [vmem:[#allocation2 + $0x10] sm:$0xff] %v1709
      %1718 = vst [vmem:[#allocation2 + $0x18] sm:$0xff] %v1710
      %1719 = vst [vmem:[#allocation2 + $0x20] sm:$0xff] %v1711
      %1720 = vst [vmem:[#allocation2 + $0x28] sm:$0xff] %v1712
      %1721 = vst [vmem:[#allocation2 + $0x30] sm:$0xff] %v1713
      %1722 = vst [vmem:[#allocation2 + $0x38] sm:$0xff] %v1714
      %s1723 = scalar_lea.vmem %s172, 80
      %v1724 = vld [vmem:[%s1723] sm:$0xf]
      %v1725 = vld [vmem:[%s1723 + $0x8] sm:$0xf]
      %v1726 = vld [vmem:[%s1723 + $0x10] sm:$0xf]
      %v1727 = vld [vmem:[%s1723 + $0x18] sm:$0xf]
      %v1728 = vld [vmem:[%s1723 + $0x20] sm:$0xf]
      %v1729 = vld [vmem:[%s1723 + $0x28] sm:$0xf]
      %v1730 = vld [vmem:[%s1723 + $0x30] sm:$0xf]
      %v1731 = vld [vmem:[%s1723 + $0x38] sm:$0xf]
      %v1732 = vld [vmem:[#allocation2] sm:$0xff]
      %v1733 = vld [vmem:[#allocation2 + $0x8] sm:$0xff]
      %v1734 = vld [vmem:[#allocation2 + $0x10] sm:$0xff]
      %v1735 = vld [vmem:[#allocation2 + $0x18] sm:$0xff]
      %v1736 = vld [vmem:[#allocation2 + $0x20] sm:$0xff]
      %v1737 = vld [vmem:[#allocation2 + $0x28] sm:$0xff]
      %v1738 = vld [vmem:[#allocation2 + $0x30] sm:$0xff]
      %v1739 = vld [vmem:[#allocation2 + $0x38] sm:$0xff]
      %s1740 = scalar_lea.vmem %s1, 448
      %v1741 = vld [vmem:[%s1740] sm:$0xf]
      %v1742 = vld [vmem:[%s1740 + $0x4] sm:$0xf]
      %v1743 = vld [vmem:[%s1740 + $0x8] sm:$0xf]
      %v1744 = vld [vmem:[%s1740 + $0xc] sm:$0xf]
      %v1745 = vld [vmem:[%s1740 + $0x10] sm:$0xf]
      %v1746 = vld [vmem:[%s1740 + $0x14] sm:$0xf]
      %v1747 = vld [vmem:[%s1740 + $0x18] sm:$0xf]
      %v1748 = vld [vmem:[%s1740 + $0x1c] sm:$0xf]
      %v1749 = vld [vmem:[%s1740 + $0x20] sm:$0xf]
      %v1750 = vld [vmem:[%s1740 + $0x24] sm:$0xf]
      %v1751 = vld [vmem:[%s1740 + $0x28] sm:$0xf]
      %v1752 = vld [vmem:[%s1740 + $0x2c] sm:$0xf]
      %v1753 = vld [vmem:[%s1740 + $0x30] sm:$0xf]
      %v1754 = vld [vmem:[%s1740 + $0x34] sm:$0xf]
      %v1755 = vld [vmem:[%s1740 + $0x38] sm:$0xf]
      %v1756 = vld [vmem:[%s1740 + $0x3c] sm:$0xf]
      %v1765 = vunpack.c.l.b16 %v1724
      %v1766 = vunpack.c.l.b16 %v1725
      %v1767 = vunpack.c.l.b16 %v1726
      %v1768 = vunpack.c.l.b16 %v1727
      %v1769 = vunpack.c.l.b16 %v1728
      %v1770 = vunpack.c.l.b16 %v1729
      %v1771 = vunpack.c.l.b16 %v1730
      %v1772 = vunpack.c.l.b16 %v1731
      %v1773 = vpack.c.b16 %v1766, %v1765
      %v1774 = vpack.c.b16 %v1768, %v1767
      %v1775 = vpack.c.b16 %v1770, %v1769
      %v1776 = vpack.c.b16 %v1772, %v1771
      %v1797 = vunpack.c.l.b16 %v1741
      %v1798 = vunpack.c.l.b16 %v1742
      %v1799 = vunpack.c.l.b16 %v1743
      %v1800 = vunpack.c.l.b16 %v1744
      %v1801 = vunpack.c.l.b16 %v1745
      %v1802 = vunpack.c.l.b16 %v1746
      %v1803 = vunpack.c.l.b16 %v1747
      %v1804 = vunpack.c.l.b16 %v1748
      %v1805 = vunpack.c.l.b16 %v1749
      %v1806 = vunpack.c.l.b16 %v1750
      %v1807 = vunpack.c.l.b16 %v1751
      %v1808 = vunpack.c.l.b16 %v1752
      %v1809 = vunpack.c.l.b16 %v1753
      %v1810 = vunpack.c.l.b16 %v1754
      %v1811 = vunpack.c.l.b16 %v1755
      %v1812 = vunpack.c.l.b16 %v1756
      %v1813 = vpack.c.b16 %v1798, %v1797
      %v1814 = vpack.c.b16 %v1800, %v1799
      %v1815 = vpack.c.b16 %v1802, %v1801
      %v1816 = vpack.c.b16 %v1804, %v1803
      %v1817 = vpack.c.b16 %v1806, %v1805
      %v1818 = vpack.c.b16 %v1808, %v1807
      %v1819 = vpack.c.b16 %v1810, %v1809
      %v1820 = vpack.c.b16 %v1812, %v1811
      %1829 = vmatprep.subr.bf16.mxu0 0
      %1830 = vmatpush1.bf16.msra.mxu0 %v1813
      %1831 = vmatprep.subr.bf16.mxu0 0
      %1832 = vmatpush1.bf16.msra.mxu0 %v1814
      %1833 = vmatprep.subr.bf16.mxu0 0
      %1834 = vmatpush1.bf16.msra.mxu0 %v1815
      %1835 = vmatprep.subr.bf16.mxu0 0
      %1836 = vmatpush1.bf16.msra.mxu0 %v1816
      %1837 = vmatprep.subr.bf16.mxu0 0
      %1838 = vmatpush1.bf16.msra.mxu0 %v1817
      %1839 = vmatprep.subr.bf16.mxu0 0
      %1840 = vmatpush1.bf16.msra.mxu0 %v1818
      %1841 = vmatprep.subr.bf16.mxu0 0
      %1842 = vmatpush1.bf16.msra.mxu0 %v1819
      %1843 = vmatprep.subr.bf16.mxu0 0
      %1844 = vmatpush1.bf16.msra.mxu0 %v1820
      %1845 = vmatprep.subr.bf16.mxu0 0
      %1846 = vmatpush1.bf16.msra.mxu0 0
      %1847 = vmatprep.subr.bf16.mxu0 0
      %1848 = vmatpush1.bf16.msra.mxu0 0
      %1849 = vmatprep.subr.bf16.mxu0 0
      %1850 = vmatpush1.bf16.msra.mxu0 0
      %1851 = vmatprep.subr.bf16.mxu0 0
      %1852 = vmatpush1.bf16.msra.mxu0 0
      %1853 = vmatprep.subr.bf16.mxu0 0
      %1854 = vmatpush1.bf16.msra.mxu0 0
      %1855 = vmatprep.subr.bf16.mxu0 0
      %1856 = vmatpush1.bf16.msra.mxu0 0
      %1857 = vmatprep.subr.bf16.mxu0 0
      %1858 = vmatpush1.bf16.msra.mxu0 0
      %1859 = vmatprep.subr.bf16.mxu0 0
      %1860 = vmatpush1.bf16.msra.mxu0 0
      %1861 = vmatprep.mubr.bf16.mxu0 0
      %1862 = vmatmul.mubr.bf16.gmra.mrb[0].mxu0 %v1773
      %v1863 = vpop.f32.mrb[0].mxu0
      %v1864 = vadd.f32 0.0, %v1863
      %v1865 = vpop.f32.mrb[0].mxu0
      %v1866 = vpop.f32.mrb[0].mxu0
      %v1867 = vadd.f32 0.0, %v1866
      %v1868 = vpop.f32.mrb[0].mxu0
      %1869 = vmatprep.mubr.bf16.mxu0 0
      %1870 = vmatmul.mubr.bf16.gmra.mrb[0].mxu0 %v1774
      %v1871 = vpop.f32.mrb[0].mxu0
      %v1872 = vadd.f32 0.0, %v1871
      %v1873 = vpop.f32.mrb[0].mxu0
      %v1874 = vpop.f32.mrb[0].mxu0
      %v1875 = vadd.f32 0.0, %v1874
      %v1876 = vpop.f32.mrb[0].mxu0
      %1877 = vmatprep.mubr.bf16.mxu0 0
      %1878 = vmatmul.mubr.bf16.gmra.mrb[0].mxu0 %v1775
      %v1879 = vpop.f32.mrb[0].mxu0
      %v1880 = vadd.f32 0.0, %v1879
      %v1881 = vpop.f32.mrb[0].mxu0
      %v1882 = vpop.f32.mrb[0].mxu0
      %v1883 = vadd.f32 0.0, %v1882
      %v1884 = vpop.f32.mrb[0].mxu0
      %1885 = vmatprep.mubr.bf16.mxu0 0
      %1886 = vmatmul.mubr.bf16.gmra.mrb[0].mxu0 %v1776
      %v1887 = vpop.f32.mrb[0].mxu0
      %v1888 = vadd.f32 0.0, %v1887
      %v1889 = vpop.f32.mrb[0].mxu0
      %v1890 = vpop.f32.mrb[0].mxu0
      %v1891 = vadd.f32 0.0, %v1890
      %v1892 = vpop.f32.mrb[0].mxu0
      %1893 = vdwg.mxu0
      %v1894 = vadd.f32 %v1732, %v1864
      %v1895 = vadd.f32 %v1733, %v1867
      %v1896 = vadd.f32 %v1734, %v1872
      %v1897 = vadd.f32 %v1735, %v1875
      %v1898 = vadd.f32 %v1736, %v1880
      %v1899 = vadd.f32 %v1737, %v1883
      %v1900 = vadd.f32 %v1738, %v1888
      %v1901 = vadd.f32 %v1739, %v1891
      %1902 = vst [vmem:[#allocation2] sm:$0xff] %v1894
      %1903 = vst [vmem:[#allocation2 + $0x8] sm:$0xff] %v1895
      %1904 = vst [vmem:[#allocation2 + $0x10] sm:$0xff] %v1896
      %1905 = vst [vmem:[#allocation2 + $0x18] sm:$0xff] %v1897
      %1906 = vst [vmem:[#allocation2 + $0x20] sm:$0xff] %v1898
      %1907 = vst [vmem:[#allocation2 + $0x28] sm:$0xff] %v1899
      %1908 = vst [vmem:[#allocation2 + $0x30] sm:$0xff] %v1900
      %1909 = vst [vmem:[#allocation2 + $0x38] sm:$0xff] %v1901
      %v1910 = vld [vmem:[%s1536] sm:$0xf]
      %v1911 = vld [vmem:[%s1536 + $0x4] sm:$0x1]
      %v1912 = vld [vmem:[%s1536 + $0x8] sm:$0xf]
      %v1913 = vld [vmem:[%s1536 + $0xc] sm:$0x1]
      %v1914 = vld [vmem:[%s1536 + $0x10] sm:$0xf]
      %v1915 = vld [vmem:[%s1536 + $0x14] sm:$0x1]
      %v1916 = vld [vmem:[%s1536 + $0x18] sm:$0xf]
      %v1917 = vld [vmem:[%s1536 + $0x1c] sm:$0x1]
      %v1918 = vld [vmem:[%s1536 + $0x20] sm:$0xf]
      %v1919 = vld [vmem:[%s1536 + $0x24] sm:$0x1]
      %v1920 = vld [vmem:[%s1536 + $0x28] sm:$0xf]
      %v1921 = vld [vmem:[%s1536 + $0x2c] sm:$0x1]
      %v1922 = vld [vmem:[%s1536 + $0x30] sm:$0xf]
      %v1923 = vld [vmem:[%s1536 + $0x34] sm:$0x1]
      %v1924 = vld [vmem:[%s1536 + $0x38] sm:$0xf]
      %v1925 = vld [vmem:[%s1536 + $0x3c] sm:$0x1]
      %v1927 = vshrl.u32 %v1910, 16
      %v1929 = vrot.slane %v1927, 4
      %v1930 = vshll.u32 %v1910, 16
      %v1932 = vrot.slane %v1930, 5
      %v1933 = vor.u32 %v1929, %v1932
      %v1934 = vrot.slane %v1933, 4
      %v1936 = vshll.u32 %v1911, 16
      %v1938 = vrot.slane %v1936, 5
      %v1939 = vsel %vm581, %v1934, %v1938
      %v1941 = vshrl.u32 %v1912, 16
      %v1943 = vrot.slane %v1941, 4
      %v1944 = vshll.u32 %v1912, 16
      %v1946 = vrot.slane %v1944, 5
      %v1947 = vor.u32 %v1943, %v1946
      %v1948 = vrot.slane %v1947, 4
      %v1950 = vshll.u32 %v1913, 16
      %v1952 = vrot.slane %v1950, 5
      %v1953 = vsel %vm581, %v1948, %v1952
      %v1955 = vshrl.u32 %v1914, 16
      %v1957 = vrot.slane %v1955, 4
      %v1958 = vshll.u32 %v1914, 16
      %v1960 = vrot.slane %v1958, 5
      %v1961 = vor.u32 %v1957, %v1960
      %v1962 = vrot.slane %v1961, 4
      %v1964 = vshll.u32 %v1915, 16
      %v1966 = vrot.slane %v1964, 5
      %v1967 = vsel %vm581, %v1962, %v1966
      %v1969 = vshrl.u32 %v1916, 16
      %v1971 = vrot.slane %v1969, 4
      %v1972 = vshll.u32 %v1916, 16
      %v1974 = vrot.slane %v1972, 5
      %v1975 = vor.u32 %v1971, %v1974
      %v1976 = vrot.slane %v1975, 4
      %v1978 = vshll.u32 %v1917, 16
      %v1980 = vrot.slane %v1978, 5
      %v1981 = vsel %vm581, %v1976, %v1980
      %v1983 = vshrl.u32 %v1918, 16
      %v1985 = vrot.slane %v1983, 4
      %v1986 = vshll.u32 %v1918, 16
      %v1988 = vrot.slane %v1986, 5
      %v1989 = vor.u32 %v1985, %v1988
      %v1990 = vrot.slane %v1989, 4
      %v1992 = vshll.u32 %v1919, 16
      %v1994 = vrot.slane %v1992, 5
      %v1995 = vsel %vm581, %v1990, %v1994
      %v1997 = vshrl.u32 %v1920, 16
      %v1999 = vrot.slane %v1997, 4
      %v2000 = vshll.u32 %v1920, 16
      %v2002 = vrot.slane %v2000, 5
      %v2003 = vor.u32 %v1999, %v2002
      %v2004 = vrot.slane %v2003, 4
      %v2006 = vshll.u32 %v1921, 16
      %v2008 = vrot.slane %v2006, 5
      %v2009 = vsel %vm581, %v2004, %v2008
      %v2011 = vshrl.u32 %v1922, 16
      %v2013 = vrot.slane %v2011, 4
      %v2014 = vshll.u32 %v1922, 16
      %v2016 = vrot.slane %v2014, 5
      %v2017 = vor.u32 %v2013, %v2016
      %v2018 = vrot.slane %v2017, 4
      %v2020 = vshll.u32 %v1923, 16
      %v2022 = vrot.slane %v2020, 5
      %v2023 = vsel %vm581, %v2018, %v2022
      %v2025 = vshrl.u32 %v1924, 16
      %v2027 = vrot.slane %v2025, 4
      %v2028 = vshll.u32 %v1924, 16
      %v2030 = vrot.slane %v2028, 5
      %v2031 = vor.u32 %v2027, %v2030
      %v2032 = vrot.slane %v2031, 4
      %v2034 = vshll.u32 %v1925, 16
      %v2036 = vrot.slane %v2034, 5
      %v2037 = vsel %vm581, %v2032, %v2036
      %v2038 = vld [vmem:[#allocation2] sm:$0xff]
      %v2039 = vld [vmem:[#allocation2 + $0x8] sm:$0xff]
      %v2040 = vld [vmem:[#allocation2 + $0x10] sm:$0xff]
      %v2041 = vld [vmem:[#allocation2 + $0x18] sm:$0xff]
      %v2042 = vld [vmem:[#allocation2 + $0x20] sm:$0xff]
      %v2043 = vld [vmem:[#allocation2 + $0x28] sm:$0xff]
      %v2044 = vld [vmem:[#allocation2 + $0x30] sm:$0xff]
      %v2045 = vld [vmem:[#allocation2 + $0x38] sm:$0xff]
      %s2046 = scalar_lea.vmem %s1, 512
      %v2047 = vld [vmem:[%s2046] sm:$0xf]
      %v2048 = vld [vmem:[%s2046 + $0x4] sm:$0xf]
      %v2049 = vld [vmem:[%s2046 + $0x8] sm:$0xf]
      %v2050 = vld [vmem:[%s2046 + $0xc] sm:$0xf]
      %v2051 = vld [vmem:[%s2046 + $0x10] sm:$0xf]
      %v2052 = vld [vmem:[%s2046 + $0x14] sm:$0xf]
      %v2053 = vld [vmem:[%s2046 + $0x18] sm:$0xf]
      %v2054 = vld [vmem:[%s2046 + $0x1c] sm:$0xf]
      %v2055 = vld [vmem:[%s2046 + $0x20] sm:$0xf]
      %v2056 = vld [vmem:[%s2046 + $0x24] sm:$0xf]
      %v2057 = vld [vmem:[%s2046 + $0x28] sm:$0xf]
      %v2058 = vld [vmem:[%s2046 + $0x2c] sm:$0xf]
      %v2059 = vld [vmem:[%s2046 + $0x30] sm:$0xf]
      %v2060 = vld [vmem:[%s2046 + $0x34] sm:$0xf]
      %v2061 = vld [vmem:[%s2046 + $0x38] sm:$0xf]
      %v2062 = vld [vmem:[%s2046 + $0x3c] sm:$0xf]
      %v2063 = vunpack.c.l.b16 %v1939
      %v2064 = vunpack.c.l.b16 %v1953
      %v2065 = vunpack.c.l.b16 %v1967
      %v2066 = vunpack.c.l.b16 %v1981
      %v2067 = vunpack.c.l.b16 %v1995
      %v2068 = vunpack.c.l.b16 %v2009
      %v2069 = vunpack.c.l.b16 %v2023
      %v2070 = vunpack.c.l.b16 %v2037
      %v2071 = vpack.c.b16 %v2064, %v2063
      %v2072 = vpack.c.b16 %v2066, %v2065
      %v2073 = vpack.c.b16 %v2068, %v2067
      %v2074 = vpack.c.b16 %v2070, %v2069
      %v2095 = vunpack.c.l.b16 %v2047
      %v2096 = vunpack.c.l.b16 %v2048
      %v2097 = vunpack.c.l.b16 %v2049
      %v2098 = vunpack.c.l.b16 %v2050
      %v2099 = vunpack.c.l.b16 %v2051
      %v2100 = vunpack.c.l.b16 %v2052
      %v2101 = vunpack.c.l.b16 %v2053
      %v2102 = vunpack.c.l.b16 %v2054
      %v2103 = vunpack.c.l.b16 %v2055
      %v2104 = vunpack.c.l.b16 %v2056
      %v2105 = vunpack.c.l.b16 %v2057
      %v2106 = vunpack.c.l.b16 %v2058
      %v2107 = vunpack.c.l.b16 %v2059
      %v2108 = vunpack.c.l.b16 %v2060
      %v2109 = vunpack.c.l.b16 %v2061
      %v2110 = vunpack.c.l.b16 %v2062
      %v2111 = vpack.c.b16 %v2096, %v2095
      %v2112 = vpack.c.b16 %v2098, %v2097
      %v2113 = vpack.c.b16 %v2100, %v2099
      %v2114 = vpack.c.b16 %v2102, %v2101
      %v2115 = vpack.c.b16 %v2104, %v2103
      %v2116 = vpack.c.b16 %v2106, %v2105
      %v2117 = vpack.c.b16 %v2108, %v2107
      %v2118 = vpack.c.b16 %v2110, %v2109
      %2127 = vmatprep.subr.bf16.mxu0 0
      %2128 = vmatpush1.bf16.msra.mxu0 %v2111
      %2129 = vmatprep.subr.bf16.mxu0 0
      %2130 = vmatpush1.bf16.msra.mxu0 %v2112
      %2131 = vmatprep.subr.bf16.mxu0 0
      %2132 = vmatpush1.bf16.msra.mxu0 %v2113
      %2133 = vmatprep.subr.bf16.mxu0 0
      %2134 = vmatpush1.bf16.msra.mxu0 %v2114
      %2135 = vmatprep.subr.bf16.mxu0 0
      %2136 = vmatpush1.bf16.msra.mxu0 %v2115
      %2137 = vmatprep.subr.bf16.mxu0 0
      %2138 = vmatpush1.bf16.msra.mxu0 %v2116
      %2139 = vmatprep.subr.bf16.mxu0 0
      %2140 = vmatpush1.bf16.msra.mxu0 %v2117
      %2141 = vmatprep.subr.bf16.mxu0 0
      %2142 = vmatpush1.bf16.msra.mxu0 %v2118
      %2143 = vmatprep.subr.bf16.mxu0 0
      %2144 = vmatpush1.bf16.msra.mxu0 0
      %2145 = vmatprep.subr.bf16.mxu0 0
      %2146 = vmatpush1.bf16.msra.mxu0 0
      %2147 = vmatprep.subr.bf16.mxu0 0
      %2148 = vmatpush1.bf16.msra.mxu0 0
      %2149 = vmatprep.subr.bf16.mxu0 0
      %2150 = vmatpush1.bf16.msra.mxu0 0
      %2151 = vmatprep.subr.bf16.mxu0 0
      %2152 = vmatpush1.bf16.msra.mxu0 0
      %2153 = vmatprep.subr.bf16.mxu0 0
      %2154 = vmatpush1.bf16.msra.mxu0 0
      %2155 = vmatprep.subr.bf16.mxu0 0
      %2156 = vmatpush1.bf16.msra.mxu0 0
      %2157 = vmatprep.subr.bf16.mxu0 0
      %2158 = vmatpush1.bf16.msra.mxu0 0
      %2159 = vmatprep.mubr.bf16.mxu0 0
      %2160 = vmatmul.mubr.bf16.gmra.mrb[0].mxu0 %v2071
      %v2161 = vpop.f32.mrb[0].mxu0
      %v2162 = vadd.f32 0.0, %v2161
      %v2163 = vpop.f32.mrb[0].mxu0
      %v2164 = vpop.f32.mrb[0].mxu0
      %v2165 = vadd.f32 0.0, %v2164
      %v2166 = vpop.f32.mrb[0].mxu0
      %2167 = vmatprep.mubr.bf16.mxu0 0
      %2168 = vmatmul.mubr.bf16.gmra.mrb[0].mxu0 %v2072
      %v2169 = vpop.f32.mrb[0].mxu0
      %v2170 = vadd.f32 0.0, %v2169
      %v2171 = vpop.f32.mrb[0].mxu0
      %v2172 = vpop.f32.mrb[0].mxu0
      %v2173 = vadd.f32 0.0, %v2172
      %v2174 = vpop.f32.mrb[0].mxu0
      %2175 = vmatprep.mubr.bf16.mxu0 0
      %2176 = vmatmul.mubr.bf16.gmra.mrb[0].mxu0 %v2073
      %v2177 = vpop.f32.mrb[0].mxu0
      %v2178 = vadd.f32 0.0, %v2177
      %v2179 = vpop.f32.mrb[0].mxu0
      %v2180 = vpop.f32.mrb[0].mxu0
      %v2181 = vadd.f32 0.0, %v2180
      %v2182 = vpop.f32.mrb[0].mxu0
      %2183 = vmatprep.mubr.bf16.mxu0 0
      %2184 = vmatmul.mubr.bf16.gmra.mrb[0].mxu0 %v2074
      %v2185 = vpop.f32.mrb[0].mxu0
      %v2186 = vadd.f32 0.0, %v2185
      %v2187 = vpop.f32.mrb[0].mxu0
      %v2188 = vpop.f32.mrb[0].mxu0
      %v2189 = vadd.f32 0.0, %v2188
      %v2190 = vpop.f32.mrb[0].mxu0
      %2191 = vdwg.mxu0
      %v2192 = vadd.f32 %v2038, %v2162
      %v2193 = vadd.f32 %v2039, %v2165
      %v2194 = vadd.f32 %v2040, %v2170
      %v2195 = vadd.f32 %v2041, %v2173
      %v2196 = vadd.f32 %v2042, %v2178
      %v2197 = vadd.f32 %v2043, %v2181
      %v2198 = vadd.f32 %v2044, %v2186
      %v2199 = vadd.f32 %v2045, %v2189
      %2200 = vst [vmem:[#allocation2] sm:$0xff] %v2192
      %2201 = vst [vmem:[#allocation2 + $0x8] sm:$0xff] %v2193
      %2202 = vst [vmem:[#allocation2 + $0x10] sm:$0xff] %v2194
      %2203 = vst [vmem:[#allocation2 + $0x18] sm:$0xff] %v2195
      %2204 = vst [vmem:[#allocation2 + $0x20] sm:$0xff] %v2196
      %2205 = vst [vmem:[#allocation2 + $0x28] sm:$0xff] %v2197
      %2206 = vst [vmem:[#allocation2 + $0x30] sm:$0xff] %v2198
      %2207 = vst [vmem:[#allocation2 + $0x38] sm:$0xff] %v2199
      %v2208 = vld [vmem:[#allocation2] sm:$0xff]
      %v2209 = vld [vmem:[#allocation2 + $0x8] sm:$0xff]
      %v2210 = vld [vmem:[#allocation2 + $0x10] sm:$0xff]
      %v2211 = vld [vmem:[#allocation2 + $0x18] sm:$0xff]
      %v2212 = vld [vmem:[#allocation2 + $0x20] sm:$0xff]
      %v2213 = vld [vmem:[#allocation2 + $0x28] sm:$0xff]
      %v2214 = vld [vmem:[#allocation2 + $0x30] sm:$0xff]
      %v2215 = vld [vmem:[#allocation2 + $0x38] sm:$0xff]
      %v2216 = vpack.c.bf16 %v2209, %v2208
      %v2217 = vpack.c.bf16 %v2211, %v2210
      %v2218 = vpack.c.bf16 %v2213, %v2212
      %v2219 = vpack.c.bf16 %v2215, %v2214
      %v2224 = vunpack.c.l.b16 %v2216
      %v2225 = vunpack.c.h.b16 %v2216
      %v2226 = vunpack.c.l.b16 %v2217
      %v2227 = vunpack.c.h.b16 %v2217
      %v2228 = vunpack.c.l.b16 %v2218
      %v2229 = vunpack.c.h.b16 %v2218
      %v2230 = vunpack.c.l.b16 %v2219
      %v2231 = vunpack.c.h.b16 %v2219
      %v2232 = vpack.c.b16 %v2224, %v2224
      %v2233 = vpack.c.b16 %v2225, %v2225
      %v2234 = vpack.c.b16 %v2226, %v2226
      %v2235 = vpack.c.b16 %v2227, %v2227
      %v2236 = vpack.c.b16 %v2228, %v2228
      %v2237 = vpack.c.b16 %v2229, %v2229
      %v2238 = vpack.c.b16 %v2230, %v2230
      %v2239 = vpack.c.b16 %v2231, %v2231
      %2248 = vst [vmem:[%s177] sm:$0xf] %v2232
      %2249 = vst [vmem:[%s177 + $0x4] sm:$0xf] %v2233
      %2250 = vst [vmem:[%s177 + $0x8] sm:$0xf] %v2234
      %2251 = vst [vmem:[%s177 + $0xc] sm:$0xf] %v2235
      %2252 = vst [vmem:[%s177 + $0x10] sm:$0xf] %v2236
      %2253 = vst [vmem:[%s177 + $0x14] sm:$0xf] %v2237
      %2254 = vst [vmem:[%s177 + $0x18] sm:$0xf] %v2238
      %2255 = vst [vmem:[%s177 + $0x1c] sm:$0xf] %v2239
      %v2256 = vadd.f32 %v2208, %v2209
      %v2257 = vadd.f32 %v2256, %v2210
      %v2258 = vadd.f32 %v2257, %v2211
      %v2259 = vadd.f32 %v2258, %v2212
      %v2260 = vadd.f32 %v2259, %v2213
      %v2261 = vadd.f32 %v2260, %v2214
      %v2262 = vadd.f32 %v2261, %v2215
      %v2263 = vrot.slane %v2262, 4
      %v2264 = vadd.f32 %v2262, %v2263
      %v2265 = vrot.slane %v2264, 2
      %v2266 = vadd.f32 %v2264, %v2265
      %v2267 = vrot.slane %v2266, 1
      %v2268 = vadd.f32 %v2266, %v2267
      %2269 = vst [vmem:[%s181] sm:$0x1] %v2268
      %v2270 = vmul.f32 %v2208, %v2208
      %v2271 = vmul.f32 %v2209, %v2209
      %v2272 = vmul.f32 %v2210, %v2210
      %v2273 = vmul.f32 %v2211, %v2211
      %v2274 = vmul.f32 %v2212, %v2212
      %v2275 = vmul.f32 %v2213, %v2213
      %v2276 = vmul.f32 %v2214, %v2214
      %v2277 = vmul.f32 %v2215, %v2215
      %v2278 = vadd.f32 %v2270, %v2271
      %v2279 = vadd.f32 %v2278, %v2272
      %v2280 = vadd.f32 %v2279, %v2273
      %v2281 = vadd.f32 %v2280, %v2274
      %v2282 = vadd.f32 %v2281, %v2275
      %v2283 = vadd.f32 %v2282, %v2276
      %v2284 = vadd.f32 %v2283, %v2277
      %v2285 = vrot.slane %v2284, 4
      %v2286 = vadd.f32 %v2284, %v2285
      %v2287 = vrot.slane %v2286, 2
      %v2288 = vadd.f32 %v2286, %v2287
      %v2289 = vrot.slane %v2288, 1
      %v2290 = vadd.f32 %v2288, %v2289
      %2291 = vst [vmem:[%s181 + $0x1] sm:$0x1] %v2290
      %p2292 = scmp.lt.s32.totalorder %s15, 1
      %s2293 = scalar_select %p2292, %s15, 1
      %s2294 = smul.addr %s2293, 8
      %s2295 = smul.addr %s2294, 4
      %s2296 = scalar_lea.vmem %s2, %s2295
      %p2297 = scmp.lt.s32.totalorder %s15, 1
      %s2298 = scalar_select %p2297, %s15, 1
      %s2299 = smul.addr %s2298, 2
      %s2300 = scalar_lea.vmem %s3, %s2299
      // Predicated region
      $region29: #{bottleneck_forward.9} parent=27 // pred_check
        %p2301 = pneg %p80
      $region30: #{bottleneck_forward.9} parent=27 // pred_check_branch
        %2303 = sbr.rel (%p2301) target = $region32
      $region31: #{bottleneck_forward.9} parent=27 // pred_region
        _
      $region32: #{bottleneck_forward.9} parent=27 // pred_fallthru
        _
      // Predicated region
      $region33: #{bottleneck_forward.9} parent=27 // pred_check
        %p2304 = pneg %p106
      $region34: #{bottleneck_forward.9} parent=27 // pred_check_branch
        %2306 = sbr.rel (%p2304) target = $region36
      $region35: #{bottleneck_forward.9} parent=27 // pred_region
        _
      $region36: #{bottleneck_forward.9} parent=27 // pred_fallthru
        _
    $region28: #{bottleneck_forward.9} parent=5 // pred_fallthru
      _
    %p2307 = scmp.le.s32.totalorder 2, %s10
    // Predicated region
    $region37: #{bottleneck_forward.9} parent=5 // pred_check
      %p2308 = pneg %p2307
    $region38: #{bottleneck_forward.9} parent=5 // pred_check_branch
      %2310 = sbr.rel (%p2308) target = $region40
    $region39: #{bottleneck_forward.9} parent=5 // pred_region
      %s2311 = ssub.s32 %s10, 2
      // Predicated region
      $region41: #{bottleneck_forward.9} parent=39 // pred_check
        %p2312 = pneg %p86
      $region42: #{bottleneck_forward.9} parent=39 // pred_check_branch
        %2314 = sbr.rel (%p2312) target = $region44
      $region43: #{bottleneck_forward.9} parent=39 // pred_region
        %p2315 = scmp.lt.s32.totalorder %s16, 1
        %s2316 = scalar_select %p2315, %s16, 1
        %s2317 = smul.addr %s2316, 8
        %s2318 = smul.addr %s2317, 4
        %s2319 = scalar_lea.vmem %s2, %s2318
      $region44: #{bottleneck_forward.9} parent=39 // pred_fallthru
        _
      // Predicated region
      $region45: #{bottleneck_forward.9} parent=39 // pred_check
        %p2320 = pneg %p112
      $region46: #{bottleneck_forward.9} parent=39 // pred_check_branch
        %2322 = sbr.rel (%p2320) target = $region48
      $region47: #{bottleneck_forward.9} parent=39 // pred_region
        %p2323 = scmp.lt.s32.totalorder %s16, 1
        %s2324 = scalar_select %p2323, %s16, 1
        %s2325 = smul.addr %s2324, 2
        %s2326 = scalar_lea.vmem %s3, %s2325
      $region48: #{bottleneck_forward.9} parent=39 // pred_fallthru
        _
    $region40: #{bottleneck_forward.9} parent=5 // pred_fallthru
      _
  $region6: #{bottleneck_forward.9} parent=0 // loop_footer
    %s14 = sadd.s32 1, %s10
  $region7: #{bottleneck_forward.9} parent=0 // loop_footer_branch
    %9 = sbr.rel target = $region3
  $region8: #{bottleneck_forward.9} parent=0 // loop_exit
    _

// kernel: bottleneck_forward.13
$region0: #{bottleneck_forward.13}
  #allocation0 [shape = 'u32[]', space=smem, size = 0x4, offset = 0x4, fixed_abs, tag = 'smem constant byte address 0x4 - core index']
  #allocation1 [shape = 'u32[144,128]{1,0:T(1,128)}', space=vmem, size = 0x12000, scoped, tag = 'internal scratch']
  %s0 = inlined_call_operand.vmem [shape: bf16[128,128], index: 0, kind: input, shape index: {}]
  %s1 = inlined_call_operand.vmem [shape: bf16[128,128], index: 1, kind: input, shape index: {}]
  %s2 = inlined_call_operand.vmem [shape: f32[2,128], index: 2, kind: input, shape index: {}]
  %s3 = inlined_call_operand.vmem [shape: f32[2,128], index: 3, kind: input, shape index: {}]
  %s4 = inlined_call_operand.vmem [shape: f32[128,128], index: 4, kind: output, shape index: {}]
  %s5 = sld [smem:[#allocation0]]
  $region26: #{bottleneck_forward.13} parent=0
    _
  %s7 = ssub.s32 1, %s5
  %s8 = scalar_select 0, %s7, %s5
  // Predicated region
  $region2: #{bottleneck_forward.13} parent=0 // pred_check
    _
  $region3: #{bottleneck_forward.13} parent=0 // pred_check_branch
    %10 = sbr.rel (0) target = $region5
  $region4: #{bottleneck_forward.13} parent=0 // pred_region
    _
  $region5: #{bottleneck_forward.13} parent=0 // pred_fallthru
    _
  // Predicated region
  $region6: #{bottleneck_forward.13} parent=0 // pred_check
    _
  $region7: #{bottleneck_forward.13} parent=0 // pred_check_branch
    %12 = sbr.rel (0) target = $region9
  $region8: #{bottleneck_forward.13} parent=0 // pred_region
    _
  $region9: #{bottleneck_forward.13} parent=0 // pred_fallthru
    _
  // Predicated region
  $region10: #{bottleneck_forward.13} parent=0 // pred_check
    _
  $region11: #{bottleneck_forward.13} parent=0 // pred_check_branch
    %14 = sbr.rel (0) target = $region13
  $region12: #{bottleneck_forward.13} parent=0 // pred_region
    _
  $region13: #{bottleneck_forward.13} parent=0 // pred_fallthru
    _
  // Predicated region
  $region14: #{bottleneck_forward.13} parent=0 // pred_check
    _
  $region15: #{bottleneck_forward.13} parent=0 // pred_check_branch
    %16 = sbr.rel (0) target = $region17
  $region16: #{bottleneck_forward.13} parent=0 // pred_region
    _
  $region17: #{bottleneck_forward.13} parent=0 // pred_fallthru
    _
  %v17 = vld [vmem:[%s0] sm:$0xf]
  %v18 = vld [vmem:[%s0 + $0x4] sm:$0xf]
  %v19 = vld [vmem:[%s0 + $0x8] sm:$0xf]
  %v20 = vld [vmem:[%s0 + $0xc] sm:$0xf]
  %v21 = vld [vmem:[%s0 + $0x10] sm:$0xf]
  %v22 = vld [vmem:[%s0 + $0x14] sm:$0xf]
  %v23 = vld [vmem:[%s0 + $0x18] sm:$0xf]
  %v24 = vld [vmem:[%s0 + $0x1c] sm:$0xf]
  %v25 = vld [vmem:[%s0 + $0x20] sm:$0xf]
  %v26 = vld [vmem:[%s0 + $0x24] sm:$0xf]
  %v27 = vld [vmem:[%s0 + $0x28] sm:$0xf]
  %v28 = vld [vmem:[%s0 + $0x2c] sm:$0xf]
  %v29 = vld [vmem:[%s0 + $0x30] sm:$0xf]
  %v30 = vld [vmem:[%s0 + $0x34] sm:$0xf]
  %v31 = vld [vmem:[%s0 + $0x38] sm:$0xf]
  %v32 = vld [vmem:[%s0 + $0x3c] sm:$0xf]
  %v33 = vld [vmem:[%s2] sm:$0x1]
  %v34 = vunpack.c.l.bf16 %v17
  %v35 = vunpack.c.l.bf16 %v18
  %v36 = vunpack.c.l.bf16 %v19
  %v37 = vunpack.c.l.bf16 %v20
  %v38 = vunpack.c.l.bf16 %v21
  %v39 = vunpack.c.l.bf16 %v22
  %v40 = vunpack.c.l.bf16 %v23
  %v41 = vunpack.c.l.bf16 %v24
  %v42 = vunpack.c.l.bf16 %v25
  %v43 = vunpack.c.l.bf16 %v26
  %v44 = vunpack.c.l.bf16 %v27
  %v45 = vunpack.c.l.bf16 %v28
  %v46 = vunpack.c.l.bf16 %v29
  %v47 = vunpack.c.l.bf16 %v30
  %v48 = vunpack.c.l.bf16 %v31
  %v49 = vunpack.c.l.bf16 %v32
  %v50 = vlaneseq
  %v51 = vshrl.u32 %v50, 7
  %v52 = vsub.s32 0, %v51
  %v53 = vrot.slane %v33, %v52
  %v54 = vmul.f32 %v34, %v53
  %v55 = vmul.f32 %v35, %v53
  %v56 = vmul.f32 %v36, %v53
  %v57 = vmul.f32 %v37, %v53
  %v58 = vmul.f32 %v38, %v53
  %v59 = vmul.f32 %v39, %v53
  %v60 = vmul.f32 %v40, %v53
  %v61 = vmul.f32 %v41, %v53
  %v62 = vmul.f32 %v42, %v53
  %v63 = vmul.f32 %v43, %v53
  %v64 = vmul.f32 %v44, %v53
  %v65 = vmul.f32 %v45, %v53
  %v66 = vmul.f32 %v46, %v53
  %v67 = vmul.f32 %v47, %v53
  %v68 = vmul.f32 %v48, %v53
  %v69 = vmul.f32 %v49, %v53
  %v70 = vld [vmem:[%s2 + $0x1] sm:$0x1]
  %v71 = vlaneseq
  %v72 = vshrl.u32 %v71, 7
  %v73 = vsub.s32 0, %v72
  %v74 = vrot.slane %v70, %v73
  %v75 = vadd.f32 %v54, %v74
  %v76 = vadd.f32 %v55, %v74
  %v77 = vadd.f32 %v56, %v74
  %v78 = vadd.f32 %v57, %v74
  %v79 = vadd.f32 %v58, %v74
  %v80 = vadd.f32 %v59, %v74
  %v81 = vadd.f32 %v60, %v74
  %v82 = vadd.f32 %v61, %v74
  %v83 = vadd.f32 %v62, %v74
  %v84 = vadd.f32 %v63, %v74
  %v85 = vadd.f32 %v64, %v74
  %v86 = vadd.f32 %v65, %v74
  %v87 = vadd.f32 %v66, %v74
  %v88 = vadd.f32 %v67, %v74
  %v89 = vadd.f32 %v68, %v74
  %v90 = vadd.f32 %v69, %v74
  %v91 = vld [vmem:[%s1] sm:$0xf]
  %v92 = vld [vmem:[%s1 + $0x4] sm:$0xf]
  %v93 = vld [vmem:[%s1 + $0x8] sm:$0xf]
  %v94 = vld [vmem:[%s1 + $0xc] sm:$0xf]
  %v95 = vld [vmem:[%s1 + $0x10] sm:$0xf]
  %v96 = vld [vmem:[%s1 + $0x14] sm:$0xf]
  %v97 = vld [vmem:[%s1 + $0x18] sm:$0xf]
  %v98 = vld [vmem:[%s1 + $0x1c] sm:$0xf]
  %v99 = vld [vmem:[%s1 + $0x20] sm:$0xf]
  %v100 = vld [vmem:[%s1 + $0x24] sm:$0xf]
  %v101 = vld [vmem:[%s1 + $0x28] sm:$0xf]
  %v102 = vld [vmem:[%s1 + $0x2c] sm:$0xf]
  %v103 = vld [vmem:[%s1 + $0x30] sm:$0xf]
  %v104 = vld [vmem:[%s1 + $0x34] sm:$0xf]
  %v105 = vld [vmem:[%s1 + $0x38] sm:$0xf]
  %v106 = vld [vmem:[%s1 + $0x3c] sm:$0xf]
  %v107 = vld [vmem:[%s3] sm:$0x1]
  %v108 = vunpack.c.l.bf16 %v91
  %v109 = vunpack.c.l.bf16 %v92
  %v110 = vunpack.c.l.bf16 %v93
  %v111 = vunpack.c.l.bf16 %v94
  %v112 = vunpack.c.l.bf16 %v95
  %v113 = vunpack.c.l.bf16 %v96
  %v114 = vunpack.c.l.bf16 %v97
  %v115 = vunpack.c.l.bf16 %v98
  %v116 = vunpack.c.l.bf16 %v99
  %v117 = vunpack.c.l.bf16 %v100
  %v118 = vunpack.c.l.bf16 %v101
  %v119 = vunpack.c.l.bf16 %v102
  %v120 = vunpack.c.l.bf16 %v103
  %v121 = vunpack.c.l.bf16 %v104
  %v122 = vunpack.c.l.bf16 %v105
  %v123 = vunpack.c.l.bf16 %v106
  %v124 = vlaneseq
  %v125 = vshrl.u32 %v124, 7
  %v126 = vsub.s32 0, %v125
  %v127 = vrot.slane %v107, %v126
  %v128 = vmul.f32 %v108, %v127
  %v129 = vmul.f32 %v109, %v127
  %v130 = vmul.f32 %v110, %v127
  %v131 = vmul.f32 %v111, %v127
  %v132 = vmul.f32 %v112, %v127
  %v133 = vmul.f32 %v113, %v127
  %v134 = vmul.f32 %v114, %v127
  %v135 = vmul.f32 %v115, %v127
  %v136 = vmul.f32 %v116, %v127
  %v137 = vmul.f32 %v117, %v127
  %v138 = vmul.f32 %v118, %v127
  %v139 = vmul.f32 %v119, %v127
  %v140 = vmul.f32 %v120, %v127
  %v141 = vmul.f32 %v121, %v127
  %v142 = vmul.f32 %v122, %v127
  %v143 = vmul.f32 %v123, %v127
  %v144 = vld [vmem:[%s3 + $0x1] sm:$0x1]
  %v145 = vlaneseq
  %v146 = vshrl.u32 %v145, 7
  %v147 = vsub.s32 0, %v146
  %v148 = vrot.slane %v144, %v147
  %v149 = vadd.f32 %v128, %v148
  %v150 = vadd.f32 %v129, %v148
  %v151 = vadd.f32 %v130, %v148
  %v152 = vadd.f32 %v131, %v148
  %v153 = vadd.f32 %v132, %v148
  %v154 = vadd.f32 %v133, %v148
  %v155 = vadd.f32 %v134, %v148
  %v156 = vadd.f32 %v135, %v148
  %v157 = vadd.f32 %v136, %v148
  %v158 = vadd.f32 %v137, %v148
  %v159 = vadd.f32 %v138, %v148
  %v160 = vadd.f32 %v139, %v148
  %v161 = vadd.f32 %v140, %v148
  %v162 = vadd.f32 %v141, %v148
  %v163 = vadd.f32 %v142, %v148
  %v164 = vadd.f32 %v143, %v148
  %v165 = vadd.f32 %v75, %v149
  %v166 = vadd.f32 %v76, %v150
  %v167 = vadd.f32 %v77, %v151
  %v168 = vadd.f32 %v78, %v152
  %v169 = vadd.f32 %v79, %v153
  %v170 = vadd.f32 %v80, %v154
  %v171 = vadd.f32 %v81, %v155
  %v172 = vadd.f32 %v82, %v156
  %v173 = vadd.f32 %v83, %v157
  %v174 = vadd.f32 %v84, %v158
  %v175 = vadd.f32 %v85, %v159
  %v176 = vadd.f32 %v86, %v160
  %v177 = vadd.f32 %v87, %v161
  %v178 = vadd.f32 %v88, %v162
  %v179 = vadd.f32 %v89, %v163
  %v180 = vadd.f32 %v90, %v164
  %v181 = vmax.f32 %v165, 0.0
  %v182 = vmax.f32 %v166, 0.0
  %v183 = vmax.f32 %v167, 0.0
  %v184 = vmax.f32 %v168, 0.0
  %v185 = vmax.f32 %v169, 0.0
  %v186 = vmax.f32 %v170, 0.0
  %v187 = vmax.f32 %v171, 0.0
  %v188 = vmax.f32 %v172, 0.0
  %v189 = vmax.f32 %v173, 0.0
  %v190 = vmax.f32 %v174, 0.0
  %v191 = vmax.f32 %v175, 0.0
  %v192 = vmax.f32 %v176, 0.0
  %v193 = vmax.f32 %v177, 0.0
  %v194 = vmax.f32 %v178, 0.0
  %v195 = vmax.f32 %v179, 0.0
  %v196 = vmax.f32 %v180, 0.0
  %197 = vst [vmem:[%s4] sm:$0xff] %v181
  %198 = vst [vmem:[%s4 + $0x8] sm:$0xff] %v182
  %199 = vst [vmem:[%s4 + $0x10] sm:$0xff] %v183
  %200 = vst [vmem:[%s4 + $0x18] sm:$0xff] %v184
  %201 = vst [vmem:[%s4 + $0x20] sm:$0xff] %v185
  %202 = vst [vmem:[%s4 + $0x28] sm:$0xff] %v186
  %203 = vst [vmem:[%s4 + $0x30] sm:$0xff] %v187
  %204 = vst [vmem:[%s4 + $0x38] sm:$0xff] %v188
  %205 = vst [vmem:[%s4 + $0x40] sm:$0xff] %v189
  %206 = vst [vmem:[%s4 + $0x48] sm:$0xff] %v190
  %207 = vst [vmem:[%s4 + $0x50] sm:$0xff] %v191
  %208 = vst [vmem:[%s4 + $0x58] sm:$0xff] %v192
  %209 = vst [vmem:[%s4 + $0x60] sm:$0xff] %v193
  %210 = vst [vmem:[%s4 + $0x68] sm:$0xff] %v194
  %211 = vst [vmem:[%s4 + $0x70] sm:$0xff] %v195
  %212 = vst [vmem:[%s4 + $0x78] sm:$0xff] %v196
  // Predicated region
  $region18: #{bottleneck_forward.13} parent=0 // pred_check
    _
  $region19: #{bottleneck_forward.13} parent=0 // pred_check_branch
    %214 = sbr.rel (0) target = $region21
  $region20: #{bottleneck_forward.13} parent=0 // pred_region
    _
  $region21: #{bottleneck_forward.13} parent=0 // pred_fallthru
    _
  // Predicated region
  $region22: #{bottleneck_forward.13} parent=0 // pred_check
    _
  $region23: #{bottleneck_forward.13} parent=0 // pred_check_branch
    %216 = sbr.rel (0) target = $region25
  $region24: #{bottleneck_forward.13} parent=0 // pred_region
    _
  $region25: #{bottleneck_forward.13} parent=0 // pred_fallthru
    _

</llo_original>
